<compile_context>
chip_gen: v7x
topology: tpu7x:2x2x1
jax: 0.10.0
libtpu: 0.0.40
codegen_flags: <defaults>
</compile_context>

<pallas_src>
import math
from functools import partial

import jax
import jax.numpy as jnp
from jax import lax
from jax.experimental import pallas as pl
from jax.experimental.pallas import tpu as pltpu

HIGHEST = jax.lax.Precision.HIGHEST   # used only by the pure-JAX reference
VMEM_LIMIT = 48 * 1024 * 1024         # headroom under v7x's 64 MiB physical VMEM


# -------------------- Buffered(1) capability probe --------------------

_BUF1_OK = None


def _buffered_one_supported():
    """True iff this JAX supports BlockSpec(pipeline_mode=pl.Buffered(1))."""
    global _BUF1_OK
    if _BUF1_OK is None:
        try:
            def kern(w_ref, x_ref, o_ref):
                o_ref[...] = x_ref[...] + w_ref[...]
            w = jnp.zeros((8, 128), jnp.float32)
            x = jnp.zeros((2, 8, 128), jnp.float32)
            out = pl.pallas_call(
                kern,
                out_shape=jax.ShapeDtypeStruct((2, 8, 128), jnp.float32),
                grid=(2,),
                in_specs=[pl.BlockSpec((8, 128), lambda i: (0, 0),
                                       pipeline_mode=pl.Buffered(1)),
                          pl.BlockSpec((1, 8, 128), lambda i: (i, 0, 0))],
                out_specs=pl.BlockSpec((1, 8, 128), lambda i: (i, 0, 0)),
            )(w, x)
            jax.block_until_ready(out)
            _BUF1_OK = True
        except Exception:
            _BUF1_OK = False
    return _BUF1_OK


def _const_spec(shape, index_map):
    """BlockSpec for a block whose index_map is constant across the grid:
    single-buffer it (halves resident weight VMEM) when supported."""
    if _buffered_one_supported():
        return pl.BlockSpec(shape, index_map, pipeline_mode=pl.Buffered(1))
    return pl.BlockSpec(shape, index_map)


def _row_tile(m, cap=512):
    if m <= cap:
        return m
    for t in range(cap, 7, -8):
        if m % t == 0:
            return t
    return m


def _col_chunk(n, cap):
    if n <= cap:
        return n
    for t in range(cap - cap % 128, 127, -128):
        if n % t == 0:
            return t
    for t in range(cap, 0, -1):
        if n % t == 0:
            return t
    return n


# ----------------------------- Pallas kernels -----------------------------

def _attn_block_kernel(x_ref, wqkv_ref, wo_ref, nw_ref, cos_ref, sin_ref,
                       o_ref, attn_ref, *, n_heads, eps, scale):
    """o = x + RMSNorm( wo( softmax(rope(q) rope(k)^T * scale) @ v ) )
    One grid step = one batch element, all heads handled in-kernel.
    q/k weight columns are pre-permuted per head to [reals.., imags..] so RoPE
    needs only contiguous half-slices; per-head scores are unchanged by the
    shared permutation, v / wo stay in the original layout."""
    xb = x_ref[0]                                             # (S, D) bf16
    S, D = xb.shape
    Dh = D // n_heads
    Dh2 = Dh // 2

    # fused QKV projection (single bf16 MXU pass, f32 accumulation)
    qkv = jnp.dot(xb, wqkv_ref[...], preferred_element_type=jnp.float32)   # (S, 3D)
    cos = cos_ref[...]                                        # (S, Dh2) f32
    sin = sin_ref[...]

    row = lax.broadcasted_iota(jnp.int32, (S, S), 0)
    col = lax.broadcasted_iota(jnp.int32, (S, S), 1)
    causal = col <= row

    for h in range(n_heads):                                  # static, small H
        b = h * Dh
        q_r = qkv[:, b:b + Dh2]
        q_i = qkv[:, b + Dh2:b + Dh]
        k_r = qkv[:, D + b:D + b + Dh2]
        k_i = qkv[:, D + b + Dh2:D + b + Dh]
        v_h = qkv[:, 2 * D + b:2 * D + b + Dh].astype(jnp.bfloat16)
        qh = jnp.concatenate([q_r * cos - q_i * sin,
                              q_i * cos + q_r * sin], axis=-1).astype(jnp.bfloat16)
        kh = jnp.concatenate([k_r * cos - k_i * sin,
                              k_i * cos + k_r * sin], axis=-1).astype(jnp.bfloat16)
        sc = lax.dot_general(qh, kh, (((1,), (1,)), ((), ())),
                             preferred_element_type=jnp.float32) * scale   # (S, S)
        sc = jnp.where(causal, sc, -1e30)                     # finite mask (NaN-safe)
        m = jnp.max(sc, axis=-1, keepdims=True)
        e = jnp.exp(sc - m)
        p = e * pl.reciprocal(jnp.sum(e, axis=-1, keepdims=True), approx=True)
        attn_ref[:, b:b + Dh] = jnp.dot(p.astype(jnp.bfloat16), v_h,
                                        preferred_element_type=jnp.float32)

    proj = jnp.dot(attn_ref[...].astype(jnp.bfloat16), wo_ref[...],
                   preferred_element_type=jnp.float32)                       # (S, D)
    ms = jnp.mean(proj * proj, axis=-1, keepdims=True)
    res = xb.astype(jnp.float32) + (proj * lax.rsqrt(ms + eps)) * nw_ref[...]
    o_ref[0] = res.astype(o_ref.dtype)


def pallas_attention_block(x, wqkv_b, wo_b, nw, cos, sin, n_heads, eps):
    B, S, D = x.shape
    Dh = D // n_heads
    kernel = partial(_attn_block_kernel, n_heads=n_heads, eps=eps,
                     scale=1.0 / math.sqrt(Dh))
    x_spec = pl.BlockSpec((1, S, D), lambda b: (b, 0, 0))
    return pl.pallas_call(
        kernel,
        out_shape=jax.ShapeDtypeStruct((B, S, D), jnp.bfloat16),
        grid=(B,),
        in_specs=[x_spec,
                  _const_spec((D, 3 * D), lambda b: (0, 0)),
                  _const_spec((D, D), lambda b: (0, 0)),
                  _const_spec((1, D), lambda b: (0, 0)),
                  _const_spec((S, Dh // 2), lambda b: (0, 0)),
                  _const_spec((S, Dh // 2), lambda b: (0, 0))],
        out_specs=x_spec,
        scratch_shapes=[pltpu.VMEM((S, D), jnp.float32)],
        compiler_params=pltpu.CompilerParams(
            dimension_semantics=("parallel",),
            vmem_limit_bytes=VMEM_LIMIT),
    )(x, wqkv_b, wo_b, nw.reshape(1, D), cos, sin)


def _ffn_block_kernel(x_ref, h_ref, w1_ref, w3_ref, w2_ref, nw_ref,
                      o_ref, acc_ref, *, eps):
    """out = h + RMSNorm( w2( SiLU(x @ w1) * (x @ w3) ) )   (x = RAW block input),
    K-tiled over the hidden dimension with an f32 accumulator scratch."""
    k = pl.program_id(1)

    @pl.when(k == 0)
    def _():
        acc_ref[...] = jnp.zeros_like(acc_ref)

    xb = x_ref[...]                                           # (tm, D) bf16
    h1 = jnp.dot(xb, w1_ref[...], preferred_element_type=jnp.float32)   # (tm, th)
    h3 = jnp.dot(xb, w3_ref[...], preferred_element_type=jnp.float32)
    g = (h1 * jax.nn.sigmoid(h1)) * h3
    acc_ref[...] += jnp.dot(g.astype(jnp.bfloat16), w2_ref[...],
                            preferred_element_type=jnp.float32)          # (tm, D)

    @pl.when(k == pl.num_programs(1) - 1)
    def _():
        ffn = acc_ref[...]
        ms = jnp.mean(ffn * ffn, axis=-1, keepdims=True)
        o_ref[...] = (h_ref[...].astype(jnp.float32)
                      + (ffn * lax.rsqrt(ms + eps)) * nw_ref[...]).astype(o_ref.dtype)


def pallas_ffn_block(x2, h2, w1_b, w3_b, w2_b, nw, eps):
    M, D = x2.shape
    Hd = w2_b.shape[0]
    tm = _row_tile(M)
    th = _col_chunk(Hd, 1024)
    row_spec = pl.BlockSpec((tm, D), lambda i, k: (i, 0))
    return pl.pallas_call(
        partial(_ffn_block_kernel, eps=eps),
        out_shape=jax.ShapeDtypeStruct((M, D), jnp.bfloat16),
        grid=(M // tm, Hd // th),
        in_specs=[row_spec, row_spec,
                  pl.BlockSpec((D, th), lambda i, k: (0, k)),
                  pl.BlockSpec((D, th), lambda i, k: (0, k)),
                  pl.BlockSpec((th, D), lambda i, k: (k, 0)),
                  _const_spec((1, D), lambda i, k: (0, 0))],
        out_specs=pl.BlockSpec((tm, D), lambda i, k: (i, 0)),
        scratch_shapes=[pltpu.VMEM((tm, D), jnp.float32)],
        compiler_params=pltpu.CompilerParams(
            dimension_semantics=("parallel", "arbitrary"),
            vmem_limit_bytes=VMEM_LIMIT),
    )(x2, h2, w1_b, w3_b, w2_b, nw.reshape(1, D))


def _norm_logits_kernel(h_ref, nw_ref, emb_ref, o_ref, *, eps):
    h = h_ref[...].astype(jnp.float32)                        # (B, D) last-pos rows
    ms = jnp.mean(h * h, axis=-1, keepdims=True)
    hn = ((h * lax.rsqrt(ms + eps)) * nw_ref[...]).astype(jnp.bfloat16)
    # tied output head: contract on D against this (tv, D) embedding tile
    o_ref[...] = lax.dot_general(hn, emb_ref[...], (((1,), (1,)), ((), ())),
                                 preferred_element_type=jnp.float32)       # (B, tv)


def pallas_norm_logits(last, norm_w, emb_b, eps):
    B, D = last.shape
    V = emb_b.shape[0]
    tv = _col_chunk(V, 2048)
    return pl.pallas_call(
        partial(_norm_logits_kernel, eps=eps),
        out_shape=jax.ShapeDtypeStruct((B, V), jnp.float32),
        grid=(V // tv,),
        in_specs=[_const_spec((B, D), lambda i: (0, 0)),
                  _const_spec((1, D), lambda i: (0, 0)),
                  pl.BlockSpec((tv, D), lambda i: (i, 0))],
        out_specs=pl.BlockSpec((B, tv), lambda i: (0, i)),
        compiler_params=pltpu.CompilerParams(
            dimension_semantics=("parallel",),
            vmem_limit_bytes=VMEM_LIMIT),
    )(last, norm_w.reshape(1, D), emb_b)


# ----------------------------- model glue (JAX) -----------------------------

def precompute_freqs_cis(dim, end, theta=10000.0):
    freqs = 1.0 / theta ** (jnp.arange(0, dim, 2)[: dim // 2].astype(jnp.float32) / dim)
    t = jnp.arange(end, dtype=jnp.float32)
    f = jnp.outer(t, freqs)
    return jnp.cos(f), jnp.sin(f)


def _deinterleave_head_cols(w_t, n_heads):
    """Permute output columns within each head from [r0,i0,r1,i1,..]
    to [r0..r_{Dh/2-1}, i0..i_{Dh/2-1}] (applied to Wq/Wk only)."""
    din, dout = w_t.shape
    dh = dout // n_heads
    return (w_t.reshape(din, n_heads, dh // 2, 2)
            .transpose(0, 1, 3, 2)
            .reshape(din, dout))


def init_params(key, cfg):
    D, H = cfg["dim"], cfg["n_heads"]
    V, Hd, L = cfg["vocab_size"], cfg["hidden_dim"], cfg["n_layers"]
    std, std_small = 0.02, 0.02 / math.sqrt(2 * L)
    keys = iter(jax.random.split(key, 1 + 7 * L))
    tok_emb = std * jax.random.normal(next(keys), (V, D), jnp.float32)
    layers = []
    for _ in range(L):
        wq = std * jax.random.normal(next(keys), (D, D), jnp.float32)
        wk = std * jax.random.normal(next(keys), (D, D), jnp.float32)
        wv = std * jax.random.normal(next(keys), (D, D), jnp.float32)
        wo = std_small * jax.random.normal(next(keys), (D, D), jnp.float32)
        w1 = std * jax.random.normal(next(keys), (Hd, D), jnp.float32)
        w2 = std * jax.random.normal(next(keys), (D, Hd), jnp.float32)
        w3 = std_small * jax.random.normal(next(keys), (Hd, D), jnp.float32)
        layers.append(dict(
            # f32 transposed weights: used only by the pure-JAX reference
            wq_t=wq.T, wk_t=wk.T, wv_t=wv.T, wo_t=wo.T,
            w1_t=w1.T, w2_t=w2.T, w3_t=w3.T,
            attn_norm_w=jnp.ones((D,), jnp.float32),
            ffn_norm_w=jnp.ones((D,), jnp.float32),
            # kernel-side bf16 weights: fused QKV with per-head de-interleaved
            # q/k columns (single MXU pass, RoPE via contiguous half slices)
            wqkv_b=jnp.concatenate([_deinterleave_head_cols(wq.T, H),
                                    _deinterleave_head_cols(wk.T, H),
                                    wv.T], axis=1).astype(jnp.bfloat16),
            wo_b=wo.T.astype(jnp.bfloat16),
            w1_b=w1.T.astype(jnp.bfloat16),
            w3_b=w3.T.astype(jnp.bfloat16),
            w2_b=w2.T.astype(jnp.bfloat16),
        ))
    cos, sin = precompute_freqs_cis(D // H, cfg["max_seq_len"])
    return dict(tok_emb=tok_emb,                              # weight tying
                emb_b=tok_emb.astype(jnp.bfloat16),
                norm_w=jnp.ones((D,), jnp.float32),
                freqs_cos=cos, freqs_sin=sin, layers=layers)


def block_forward(x, lp, cos, sin, n_heads, eps):
    B, S, D = x.shape
    # h = x + RMSNorm(Attention(x))        (norm applied to the attention OUTPUT)
    h = pallas_attention_block(x, lp["wqkv_b"], lp["wo_b"], lp["attn_norm_w"],
                               cos, sin, n_heads, eps)
    # out = h + RMSNorm(FeedForward(x))    (FFN takes the RAW block input — quirk)
    out = pallas_ffn_block(x.reshape(B * S, D), h.reshape(B * S, D),
                           lp["w1_b"], lp["w3_b"], lp["w2_b"],
                           lp["ffn_norm_w"], eps)
    return out.reshape(B, S, D)


def transformer_forward(params, tokens, cfg):
    B, S = tokens.shape
    D, H = cfg["dim"], cfg["n_heads"]
    eps = cfg["norm_eps"]
    # TODO(synk): token-embedding gather stays in JAX glue (no tiled Pallas gather here).
    h = params["tok_emb"][tokens].astype(jnp.bfloat16)        # bf16 residual stream
    cos = params["freqs_cos"][:S]                             # (S, Dh//2)
    sin = params["freqs_sin"][:S]
    for lp in params["layers"]:
        h = block_forward(h, lp, cos, sin, H, eps)
    # final RMSNorm is per-row, so norm(h)[:, -1] == norm(h[:, -1]): fuse with logits
    last = h[:, -1, :]                                        # (B, D) bf16
    logits = pallas_norm_logits(last, params["norm_w"], params["emb_b"], eps)
    return logits[:, None, :]                                 # (B, 1, V)


# ----------------------------- pure-JAX reference -----------------------------

def ref_forward(params, tokens, cfg):
    B, S = tokens.shape
    D, H = cfg["dim"], cfg["n_heads"]
    Dh = D // H
    eps = cfg["norm_eps"]

    def mm(a, b):
        return jnp.matmul(a, b, precision=HIGHEST)

    def rms(x, w):
        return x * lax.rsqrt(jnp.mean(x * x, -1, keepdims=True) + eps) * w

    cos = params["freqs_cos"][:S]
    sin = params["freqs_sin"][:S]
    h = params["tok_emb"][tokens]
    for lp in params["layers"]:
        x = h
        q = mm(x, lp["wq_t"]).reshape(B, S, H, Dh)
        k = mm(x, lp["wk_t"]).reshape(B, S, H, Dh)
        v = mm(x, lp["wv_t"]).reshape(B, S, H, Dh)

        def rope(t):
            tr = t.reshape(B, S, H, Dh // 2, 2)
            t_r, t_i = tr[..., 0], tr[..., 1]
            c = cos[None, :, None, :]
            s = sin[None, :, None, :]
            return jnp.stack([t_r * c - t_i * s, t_r * s + t_i * c],
                             axis=-1).reshape(B, S, H, Dh)

        q, k = rope(q), rope(k)
        q, k, v = (t.transpose(0, 2, 1, 3) for t in (q, k, v))
        scores = mm(q, k.swapaxes(-1, -2)) / math.sqrt(Dh)
        mask = jnp.triu(jnp.full((S, S), -jnp.inf, jnp.float32), 1)
        scores = scores + mask[None, None]
        p = jax.nn.softmax(scores, axis=-1)
        o = mm(p, v).transpose(0, 2, 1, 3).reshape(B, S, D)
        attn = mm(o, lp["wo_t"])
        hres = x + rms(attn, lp["attn_norm_w"])
        ffn = mm(jax.nn.silu(mm(x, lp["w1_t"])) * mm(x, lp["w3_t"]), lp["w2_t"])
        h = hres + rms(ffn, lp["ffn_norm_w"])
    h = rms(h, params["norm_w"])
    return mm(h[:, -1:, :], params["tok_emb"].T)


# ----------------------------- main -----------------------------

if __name__ == "__main__":
    cfg = dict(dim=128, n_layers=2, n_heads=4, vocab_size=256,
               hidden_dim=256, max_seq_len=16, norm_eps=1e-5)
    B, S = 2, 16
    key = jax.random.PRNGKey(0)
    pkey, tkey = jax.random.split(key)
    params = init_params(pkey, cfg)
    tokens = jax.random.randint(tkey, (B, S), 0, cfg["vocab_size"], dtype=jnp.int32)

    _buffered_one_supported()       # warm the Buffered(1) capability probe

    fwd = jax.jit(partial(transformer_forward, cfg=cfg))
    logits = jax.block_until_ready(fwd(params, tokens))

    ref = jax.block_until_ready(ref_forward(params, tokens, cfg))
    assert logits.shape == (B, 1, cfg["vocab_size"]), logits.shape
    max_err = float(jnp.max(jnp.abs(logits - ref)))
    # bf16 weights/activations with f32 accumulation vs the f32 HIGHEST reference
    assert max_err < 3e-2, f"mismatch vs reference: max abs err {max_err}"

    print("KERNEL_OK")
</pallas_src>

<mosaic_0001>
module attributes {stable_mosaic.version = 11 : i64} {
  func.func @kern(%arg0: i32, %arg1: memref<8x128xf32, #tpu.memory_space<vmem>>, %arg2: memref<1x8x128xf32, #tpu.memory_space<vmem>>, %arg3: memref<1x8x128xf32, #tpu.memory_space<vmem>>) attributes {dimension_semantics = [#tpu.dimension_semantics<arbitrary>], iteration_bounds = array<i64: 2>, scalar_prefetch = 0 : i64, scratch_operands = 0 : i64, tpu.core_type = #tpu.core_type<tc>, window_params = [{pipeline_mode = #tpu.pipeline_mode<synchronous>, transform_indices = @transform_0, window_bounds = array<i64: 8, 128>}, {transform_indices = @transform_1, window_bounds = array<i64: 1, 8, 128>}, {transform_indices = @transform_2, window_bounds = array<i64: 1, 8, 128>}]} {
    %c0 = arith.constant 0 : index
    %c0_0 = arith.constant 0 : index
    %c0_1 = arith.constant 0 : index
    %0 = vector.load %arg2[%c0, %c0_0, %c0_1] : memref<1x8x128xf32, #tpu.memory_space<vmem>>, vector<1x8x128xf32>
    %c0_2 = arith.constant 0 : index
    %c0_3 = arith.constant 0 : index
    %1 = vector.load %arg1[%c0_2, %c0_3] : memref<8x128xf32, #tpu.memory_space<vmem>>, vector<8x128xf32>
    %2 = vector.shape_cast %1 : vector<8x128xf32> to vector<1x8x128xf32>
    %3 = arith.addf %0, %2 : vector<1x8x128xf32>
    %c0_4 = arith.constant 0 : index
    %c0_5 = arith.constant 0 : index
    %c0_6 = arith.constant 0 : index
    %4 = vector.load %arg3[%c0_4, %c0_5, %c0_6] : memref<1x8x128xf32, #tpu.memory_space<vmem>>, vector<1x8x128xf32>
    tpu.vector_store %arg3[%c0_4, %c0_5, %c0_6], %3 {strides = array<i32>} : memref<1x8x128xf32, #tpu.memory_space<vmem>>, vector<1x8x128xf32>,
    return
  }
  func.func @transform_0(%arg0: i32) -> (i32, i32) {
    %c0_i32 = arith.constant 0 : i32
    %c0_i32_0 = arith.constant 0 : i32
    %c0_i32_1 = arith.constant 0 : i32
    return %c0_i32, %c0_i32_0 : i32, i32
  }
  func.func @transform_1(%arg0: i32) -> (i32, i32, i32) {
    %c0_i32 = arith.constant 0 : i32
    %c0_i32_0 = arith.constant 0 : i32
    %c0_i32_1 = arith.constant 0 : i32
    return %arg0, %c0_i32, %c0_i32_0 : i32, i32, i32
  }
  func.func @transform_2(%arg0: i32) -> (i32, i32, i32) {
    %c0_i32 = arith.constant 0 : i32
    %c0_i32_0 = arith.constant 0 : i32
    %c0_i32_1 = arith.constant 0 : i32
    return %arg0, %c0_i32, %c0_i32_0 : i32, i32, i32
  }
}

module attributes {stable_mosaic.version = 11 : i64} {
  func.func @_ffn_block_kernel(%arg0: i32, %arg1: i32, %arg2: memref<32x128xbf16, #tpu.memory_space<vmem>>, %arg3: memref<32x128xbf16, #tpu.memory_space<vmem>>, %arg4: memref<128x256xbf16, #tpu.memory_space<vmem>>, %arg5: memref<128x256xbf16, #tpu.memory_space<vmem>>, %arg6: memref<256x128xbf16, #tpu.memory_space<vmem>>, %arg7: memref<1x128xf32, #tpu.memory_space<vmem>>, %arg8: memref<32x128xbf16, #tpu.memory_space<vmem>>, %arg9: memref<32x128xf32, #tpu.memory_space<vmem>>) attributes {dimension_semantics = [#tpu.dimension_semantics<parallel>, #tpu.dimension_semantics<arbitrary>], iteration_bounds = array<i64: 1, 1>, scalar_prefetch = 0 : i64, scratch_operands = 1 : i64, tpu.core_type = #tpu.core_type<tc>, window_params = [{transform_indices = @transform_0, window_bounds = array<i64: 32, 128>}, {transform_indices = @transform_1, window_bounds = array<i64: 32, 128>}, {transform_indices = @transform_2, window_bounds = array<i64: 128, 256>}, {transform_indices = @transform_3, window_bounds = array<i64: 128, 256>}, {transform_indices = @transform_4, window_bounds = array<i64: 256, 128>}, {pipeline_mode = #tpu.pipeline_mode<synchronous>, transform_indices = @transform_5, window_bounds = array<i64: 1, 128>}, {transform_indices = @transform_6, window_bounds = array<i64: 32, 128>}]} {
    %c0_i32 = arith.constant 0 : i32
    %0 = arith.cmpi eq, %arg1, %c0_i32 : i32
    %1 = arith.extui %0 : i1 to i32
    %c0_i32_0 = arith.constant 0 : i32
    %2 = arith.cmpi ne, %1, %c0_i32_0 : i32
    scf.if %2 {
      %cst_17 = arith.constant 0.000000e+00 : f32
      %24 = vector.broadcast %cst_17 : f32 to vector<32x128xf32>
      %c0_18 = arith.constant 0 : index
      %c0_19 = arith.constant 0 : index
      %25 = vector.load %arg9[%c0_18, %c0_19] : memref<32x128xf32, #tpu.memory_space<vmem>>, vector<32x128xf32>
      tpu.vector_store %arg9[%c0_18, %c0_19], %24 {strides = array<i32>} : memref<32x128xf32, #tpu.memory_space<vmem>>, vector<32x128xf32>,
    } else {
    }
    %c0 = arith.constant 0 : index
    %c0_1 = arith.constant 0 : index
    %3 = vector.load %arg2[%c0, %c0_1] : memref<32x128xbf16, #tpu.memory_space<vmem>>, vector<32x128xbf16>
    %c0_2 = arith.constant 0 : index
    %c0_3 = arith.constant 0 : index
    %4 = vector.load %arg4[%c0_2, %c0_3] : memref<128x256xbf16, #tpu.memory_space<vmem>>, vector<128x256xbf16>
    %cst = arith.constant dense<0.000000e+00> : vector<32x256xf32>
    %5 = tpu.matmul %3, %4, %cst {dimension_numbers = #tpu.dot_dimension_numbers<[1], [0], [0], [1], [0, 0, 1, 1], [], []>} : vector<32x128xbf16>, vector<128x256xbf16>, vector<32x256xf32> -> vector<32x256xf32>
    %c0_4 = arith.constant 0 : index
    %c0_5 = arith.constant 0 : index
    %6 = vector.load %arg5[%c0_4, %c0_5] : memref<128x256xbf16, #tpu.memory_space<vmem>>, vector<128x256xbf16>
    %cst_6 = arith.constant dense<0.000000e+00> : vector<32x256xf32>
    %7 = tpu.matmul %3, %6, %cst_6 {dimension_numbers = #tpu.dot_dimension_numbers<[1], [0], [0], [1], [0, 0, 1, 1], [], []>} : vector<32x128xbf16>, vector<128x256xbf16>, vector<32x256xf32> -> vector<32x256xf32>
    %8 = arith.negf %5 : vector<32x256xf32>
    %9 = math.exp %8 : vector<32x256xf32>
    %cst_7 = arith.constant 1.000000e+00 : f32
    %10 = vector.broadcast %cst_7 : f32 to vector<32x256xf32>
    %11 = arith.addf %10, %9 : vector<32x256xf32>
    %12 = arith.divf %10, %11 : vector<32x256xf32>
    %13 = arith.mulf %5, %12 : vector<32x256xf32>
    %14 = arith.mulf %13, %7 : vector<32x256xf32>
    %c0_8 = arith.constant 0 : index
    %c0_9 = arith.constant 0 : index
    %15 = vector.load %arg9[%c0_8, %c0_9] : memref<32x128xf32, #tpu.memory_space<vmem>>, vector<32x128xf32>
    %16 = arith.truncf %14 : vector<32x256xf32> to vector<32x256xbf16>
    %c0_10 = arith.constant 0 : index
    %c0_11 = arith.constant 0 : index
    %17 = vector.load %arg6[%c0_10, %c0_11] : memref<256x128xbf16, #tpu.memory_space<vmem>>, vector<256x128xbf16>
    %cst_12 = arith.constant dense<0.000000e+00> : vector<32x128xf32>
    %18 = tpu.matmul %16, %17, %cst_12 {dimension_numbers = #tpu.dot_dimension_numbers<[1], [0], [0], [1], [0, 0, 1, 1], [], []>} : vector<32x256xbf16>, vector<256x128xbf16>, vector<32x128xf32> -> vector<32x128xf32>
    %19 = arith.addf %15, %18 : vector<32x128xf32>
    %c0_13 = arith.constant 0 : index
    %c0_14 = arith.constant 0 : index
    %20 = vector.load %arg9[%c0_13, %c0_14] : memref<32x128xf32, #tpu.memory_space<vmem>>, vector<32x128xf32>
    tpu.vector_store %arg9[%c0_13, %c0_14], %19 {strides = array<i32>} : memref<32x128xf32, #tpu.memory_space<vmem>>, vector<32x128xf32>,
    %c0_i32_15 = arith.constant 0 : i32
    %21 = arith.cmpi eq, %arg1, %c0_i32_15 : i32
    %22 = arith.extui %21 : i1 to i32
    %c0_i32_16 = arith.constant 0 : i32
    %23 = arith.cmpi ne, %22, %c0_i32_16 : i32
    scf.if %23 {
      %c0_17 = arith.constant 0 : index
      %c0_18 = arith.constant 0 : index
      %24 = vector.load %arg9[%c0_17, %c0_18] : memref<32x128xf32, #tpu.memory_space<vmem>>, vector<32x128xf32>
      %25 = arith.mulf %24, %24 : vector<32x128xf32>
      %cst_19 = arith.constant dense<0.000000e+00> : vector<32xf32>
      %26 = vector.multi_reduction <add>, %25, %cst_19 [1] : vector<32x128xf32> to vector<32xf32>
      %27 = vector.shape_cast %26 : vector<32xf32> to vector<32x1xf32>
      %cst_20 = arith.constant 1.280000e+02 : f32
      %28 = vector.broadcast %cst_20 : f32 to vector<32x1xf32>
      %29 = arith.divf %27, %28 : vector<32x1xf32>
      %c0_21 = arith.constant 0 : index
      %c0_22 = arith.constant 0 : index
      %30 = vector.load %arg3[%c0_21, %c0_22] : memref<32x128xbf16, #tpu.memory_space<vmem>>, vector<32x128xbf16>
      %31 = arith.extf %30 : vector<32x128xbf16> to vector<32x128xf32>
      %cst_23 = arith.constant 9.99999974E-6 : f32
      %32 = vector.broadcast %cst_23 : f32 to vector<32x1xf32>
      %33 = arith.addf %29, %32 : vector<32x1xf32>
      %34 = math.rsqrt %33 : vector<32x1xf32>
      %35 = vector.broadcast %34 : vector<32x1xf32> to vector<32x128xf32>
      %36 = arith.mulf %24, %35 : vector<32x128xf32>
      %c0_24 = arith.constant 0 : index
      %c0_25 = arith.constant 0 : index
      %37 = vector.load %arg7[%c0_24, %c0_25] : memref<1x128xf32, #tpu.memory_space<vmem>>, vector<1x128xf32>
      %38 = vector.broadcast %37 : vector<1x128xf32> to vector<32x128xf32>
      %39 = arith.mulf %36, %38 : vector<32x128xf32>
      %40 = arith.addf %31, %39 : vector<32x128xf32>
      %41 = arith.truncf %40 : vector<32x128xf32> to vector<32x128xbf16>
      %c0_26 = arith.constant 0 : index
      %c0_27 = arith.constant 0 : index
      %42 = vector.load %arg8[%c0_26, %c0_27] : memref<32x128xbf16, #tpu.memory_space<vmem>>, vector<32x128xbf16>
      tpu.vector_store %arg8[%c0_26, %c0_27], %41 {strides = array<i32>} : memref<32x128xbf16, #tpu.memory_space<vmem>>, vector<32x128xbf16>,
    } else {
    }
    return
  }
  func.func @transform_0(%arg0: i32, %arg1: i32) -> (i32, i32) {
    %c0_i32 = arith.constant 0 : i32
    %c0_i32_0 = arith.constant 0 : i32
    return %arg0, %c0_i32 : i32, i32
  }
  func.func @transform_1(%arg0: i32, %arg1: i32) -> (i32, i32) {
    %c0_i32 = arith.constant 0 : i32
    %c0_i32_0 = arith.constant 0 : i32
    return %arg0, %c0_i32 : i32, i32
  }
  func.func @transform_2(%arg0: i32, %arg1: i32) -> (i32, i32) {
    %c0_i32 = arith.constant 0 : i32
    %c0_i32_0 = arith.constant 0 : i32
    return %c0_i32, %arg1 : i32, i32
  }
  func.func @transform_3(%arg0: i32, %arg1: i32) -> (i32, i32) {
    %c0_i32 = arith.constant 0 : i32
    %c0_i32_0 = arith.constant 0 : i32
    return %c0_i32, %arg1 : i32, i32
  }
  func.func @transform_4(%arg0: i32, %arg1: i32) -> (i32, i32) {
    %c0_i32 = arith.constant 0 : i32
    %c0_i32_0 = arith.constant 0 : i32
    return %arg1, %c0_i32 : i32, i32
  }
  func.func @transform_5(%arg0: i32, %arg1: i32) -> (i32, i32) {
    %c0_i32 = arith.constant 0 : i32
    %c0_i32_0 = arith.constant 0 : i32
    %c0_i32_1 = arith.constant 0 : i32
    return %c0_i32, %c0_i32_0 : i32, i32
  }
  func.func @transform_6(%arg0: i32, %arg1: i32) -> (i32, i32) {
    %c0_i32 = arith.constant 0 : i32
    %c0_i32_0 = arith.constant 0 : i32
    return %arg0, %c0_i32 : i32, i32
  }
}

module attributes {stable_mosaic.version = 11 : i64} {
  func.func @_ffn_block_kernel(%arg0: i32, %arg1: i32, %arg2: memref<32x128xbf16, #tpu.memory_space<vmem>>, %arg3: memref<32x128xbf16, #tpu.memory_space<vmem>>, %arg4: memref<128x256xbf16, #tpu.memory_space<vmem>>, %arg5: memref<128x256xbf16, #tpu.memory_space<vmem>>, %arg6: memref<256x128xbf16, #tpu.memory_space<vmem>>, %arg7: memref<1x128xf32, #tpu.memory_space<vmem>>, %arg8: memref<32x128xbf16, #tpu.memory_space<vmem>>, %arg9: memref<32x128xf32, #tpu.memory_space<vmem>>) attributes {dimension_semantics = [#tpu.dimension_semantics<parallel>, #tpu.dimension_semantics<arbitrary>], iteration_bounds = array<i64: 1, 1>, scalar_prefetch = 0 : i64, scratch_operands = 1 : i64, tpu.core_type = #tpu.core_type<tc>, window_params = [{transform_indices = @transform_0, window_bounds = array<i64: 32, 128>}, {transform_indices = @transform_1, window_bounds = array<i64: 32, 128>}, {transform_indices = @transform_2, window_bounds = array<i64: 128, 256>}, {transform_indices = @transform_3, window_bounds = array<i64: 128, 256>}, {transform_indices = @transform_4, window_bounds = array<i64: 256, 128>}, {pipeline_mode = #tpu.pipeline_mode<synchronous>, transform_indices = @transform_5, window_bounds = array<i64: 1, 128>}, {transform_indices = @transform_6, window_bounds = array<i64: 32, 128>}]} {
    %c0_i32 = arith.constant 0 : i32
    %0 = arith.cmpi eq, %arg1, %c0_i32 : i32
    %1 = arith.extui %0 : i1 to i32
    %c0_i32_0 = arith.constant 0 : i32
    %2 = arith.cmpi ne, %1, %c0_i32_0 : i32
    scf.if %2 {
      %cst_17 = arith.constant 0.000000e+00 : f32
      %24 = vector.broadcast %cst_17 : f32 to vector<32x128xf32>
      %c0_18 = arith.constant 0 : index
      %c0_19 = arith.constant 0 : index
      %25 = vector.load %arg9[%c0_18, %c0_19] : memref<32x128xf32, #tpu.memory_space<vmem>>, vector<32x128xf32>
      tpu.vector_store %arg9[%c0_18, %c0_19], %24 {strides = array<i32>} : memref<32x128xf32, #tpu.memory_space<vmem>>, vector<32x128xf32>,
    } else {
    }
    %c0 = arith.constant 0 : index
    %c0_1 = arith.constant 0 : index
    %3 = vector.load %arg2[%c0, %c0_1] : memref<32x128xbf16, #tpu.memory_space<vmem>>, vector<32x128xbf16>
    %c0_2 = arith.constant 0 : index
    %c0_3 = arith.constant 0 : index
    %4 = vector.load %arg4[%c0_2, %c0_3] : memref<128x256xbf16, #tpu.memory_space<vmem>>, vector<128x256xbf16>
    %cst = arith.constant dense<0.000000e+00> : vector<32x256xf32>
    %5 = tpu.matmul %3, %4, %cst {dimension_numbers = #tpu.dot_dimension_numbers<[1], [0], [0], [1], [0, 0, 1, 1], [], []>} : vector<32x128xbf16>, vector<128x256xbf16>, vector<32x256xf32> -> vector<32x256xf32>
    %c0_4 = arith.constant 0 : index
    %c0_5 = arith.constant 0 : index
    %6 = vector.load %arg5[%c0_4, %c0_5] : memref<128x256xbf16, #tpu.memory_space<vmem>>, vector<128x256xbf16>
    %cst_6 = arith.constant dense<0.000000e+00> : vector<32x256xf32>
    %7 = tpu.matmul %3, %6, %cst_6 {dimension_numbers = #tpu.dot_dimension_numbers<[1], [0], [0], [1], [0, 0, 1, 1], [], []>} : vector<32x128xbf16>, vector<128x256xbf16>, vector<32x256xf32> -> vector<32x256xf32>
    %8 = arith.negf %5 : vector<32x256xf32>
    %9 = math.exp %8 : vector<32x256xf32>
    %cst_7 = arith.constant 1.000000e+00 : f32
    %10 = vector.broadcast %cst_7 : f32 to vector<32x256xf32>
    %11 = arith.addf %10, %9 : vector<32x256xf32>
    %12 = arith.divf %10, %11 : vector<32x256xf32>
    %13 = arith.mulf %5, %12 : vector<32x256xf32>
    %14 = arith.mulf %13, %7 : vector<32x256xf32>
    %c0_8 = arith.constant 0 : index
    %c0_9 = arith.constant 0 : index
    %15 = vector.load %arg9[%c0_8, %c0_9] : memref<32x128xf32, #tpu.memory_space<vmem>>, vector<32x128xf32>
    %16 = arith.truncf %14 : vector<32x256xf32> to vector<32x256xbf16>
    %c0_10 = arith.constant 0 : index
    %c0_11 = arith.constant 0 : index
    %17 = vector.load %arg6[%c0_10, %c0_11] : memref<256x128xbf16, #tpu.memory_space<vmem>>, vector<256x128xbf16>
    %cst_12 = arith.constant dense<0.000000e+00> : vector<32x128xf32>
    %18 = tpu.matmul %16, %17, %cst_12 {dimension_numbers = #tpu.dot_dimension_numbers<[1], [0], [0], [1], [0, 0, 1, 1], [], []>} : vector<32x256xbf16>, vector<256x128xbf16>, vector<32x128xf32> -> vector<32x128xf32>
    %19 = arith.addf %15, %18 : vector<32x128xf32>
    %c0_13 = arith.constant 0 : index
    %c0_14 = arith.constant 0 : index
    %20 = vector.load %arg9[%c0_13, %c0_14] : memref<32x128xf32, #tpu.memory_space<vmem>>, vector<32x128xf32>
    tpu.vector_store %arg9[%c0_13, %c0_14], %19 {strides = array<i32>} : memref<32x128xf32, #tpu.memory_space<vmem>>, vector<32x128xf32>,
    %c0_i32_15 = arith.constant 0 : i32
    %21 = arith.cmpi eq, %arg1, %c0_i32_15 : i32
    %22 = arith.extui %21 : i1 to i32
    %c0_i32_16 = arith.constant 0 : i32
    %23 = arith.cmpi ne, %22, %c0_i32_16 : i32
    scf.if %23 {
      %c0_17 = arith.constant 0 : index
      %c0_18 = arith.constant 0 : index
      %24 = vector.load %arg9[%c0_17, %c0_18] : memref<32x128xf32, #tpu.memory_space<vmem>>, vector<32x128xf32>
      %25 = arith.mulf %24, %24 : vector<32x128xf32>
      %cst_19 = arith.constant dense<0.000000e+00> : vector<32xf32>
      %26 = vector.multi_reduction <add>, %25, %cst_19 [1] : vector<32x128xf32> to vector<32xf32>
      %27 = vector.shape_cast %26 : vector<32xf32> to vector<32x1xf32>
      %cst_20 = arith.constant 1.280000e+02 : f32
      %28 = vector.broadcast %cst_20 : f32 to vector<32x1xf32>
      %29 = arith.divf %27, %28 : vector<32x1xf32>
      %c0_21 = arith.constant 0 : index
      %c0_22 = arith.constant 0 : index
      %30 = vector.load %arg3[%c0_21, %c0_22] : memref<32x128xbf16, #tpu.memory_space<vmem>>, vector<32x128xbf16>
      %31 = arith.extf %30 : vector<32x128xbf16> to vector<32x128xf32>
      %cst_23 = arith.constant 9.99999974E-6 : f32
      %32 = vector.broadcast %cst_23 : f32 to vector<32x1xf32>
      %33 = arith.addf %29, %32 : vector<32x1xf32>
      %34 = math.rsqrt %33 : vector<32x1xf32>
      %35 = vector.broadcast %34 : vector<32x1xf32> to vector<32x128xf32>
      %36 = arith.mulf %24, %35 : vector<32x128xf32>
      %c0_24 = arith.constant 0 : index
      %c0_25 = arith.constant 0 : index
      %37 = vector.load %arg7[%c0_24, %c0_25] : memref<1x128xf32, #tpu.memory_space<vmem>>, vector<1x128xf32>
      %38 = vector.broadcast %37 : vector<1x128xf32> to vector<32x128xf32>
      %39 = arith.mulf %36, %38 : vector<32x128xf32>
      %40 = arith.addf %31, %39 : vector<32x128xf32>
      %41 = arith.truncf %40 : vector<32x128xf32> to vector<32x128xbf16>
      %c0_26 = arith.constant 0 : index
      %c0_27 = arith.constant 0 : index
      %42 = vector.load %arg8[%c0_26, %c0_27] : memref<32x128xbf16, #tpu.memory_space<vmem>>, vector<32x128xbf16>
      tpu.vector_store %arg8[%c0_26, %c0_27], %41 {strides = array<i32>} : memref<32x128xbf16, #tpu.memory_space<vmem>>, vector<32x128xbf16>,
    } else {
    }
    return
  }
  func.func @transform_0(%arg0: i32, %arg1: i32) -> (i32, i32) {
    %c0_i32 = arith.constant 0 : i32
    %c0_i32_0 = arith.constant 0 : i32
    return %arg0, %c0_i32 : i32, i32
  }
  func.func @transform_1(%arg0: i32, %arg1: i32) -> (i32, i32) {
    %c0_i32 = arith.constant 0 : i32
    %c0_i32_0 = arith.constant 0 : i32
    return %arg0, %c0_i32 : i32, i32
  }
  func.func @transform_2(%arg0: i32, %arg1: i32) -> (i32, i32) {
    %c0_i32 = arith.constant 0 : i32
    %c0_i32_0 = arith.constant 0 : i32
    return %c0_i32, %arg1 : i32, i32
  }
  func.func @transform_3(%arg0: i32, %arg1: i32) -> (i32, i32) {
    %c0_i32 = arith.constant 0 : i32
    %c0_i32_0 = arith.constant 0 : i32
    return %c0_i32, %arg1 : i32, i32
  }
  func.func @transform_4(%arg0: i32, %arg1: i32) -> (i32, i32) {
    %c0_i32 = arith.constant 0 : i32
    %c0_i32_0 = arith.constant 0 : i32
    return %arg1, %c0_i32 : i32, i32
  }
  func.func @transform_5(%arg0: i32, %arg1: i32) -> (i32, i32) {
    %c0_i32 = arith.constant 0 : i32
    %c0_i32_0 = arith.constant 0 : i32
    %c0_i32_1 = arith.constant 0 : i32
    return %c0_i32, %c0_i32_0 : i32, i32
  }
  func.func @transform_6(%arg0: i32, %arg1: i32) -> (i32, i32) {
    %c0_i32 = arith.constant 0 : i32
    %c0_i32_0 = arith.constant 0 : i32
    return %arg0, %c0_i32 : i32, i32
  }
}

module attributes {stable_mosaic.version = 11 : i64} {
  func.func @_attn_block_kernel(%arg0: i32, %arg1: memref<1x16x128xbf16, #tpu.memory_space<vmem>>, %arg2: memref<128x384xbf16, #tpu.memory_space<vmem>>, %arg3: memref<128x128xbf16, #tpu.memory_space<vmem>>, %arg4: memref<1x128xf32, #tpu.memory_space<vmem>>, %arg5: memref<16x16xf32, #tpu.memory_space<vmem>>, %arg6: memref<16x16xf32, #tpu.memory_space<vmem>>, %arg7: memref<1x16x128xbf16, #tpu.memory_space<vmem>>, %arg8: memref<16x128xf32, #tpu.memory_space<vmem>>) attributes {dimension_semantics = [#tpu.dimension_semantics<parallel>], iteration_bounds = array<i64: 2>, scalar_prefetch = 0 : i64, scratch_operands = 1 : i64, tpu.core_type = #tpu.core_type<tc>, window_params = [{transform_indices = @transform_0, window_bounds = array<i64: 1, 16, 128>}, {pipeline_mode = #tpu.pipeline_mode<synchronous>, transform_indices = @transform_1, window_bounds = array<i64: 128, 384>}, {pipeline_mode = #tpu.pipeline_mode<synchronous>, transform_indices = @transform_2, window_bounds = array<i64: 128, 128>}, {pipeline_mode = #tpu.pipeline_mode<synchronous>, transform_indices = @transform_3, window_bounds = array<i64: 1, 128>}, {pipeline_mode = #tpu.pipeline_mode<synchronous>, transform_indices = @transform_4, window_bounds = array<i64: 16, 16>}, {pipeline_mode = #tpu.pipeline_mode<synchronous>, transform_indices = @transform_5, window_bounds = array<i64: 16, 16>}, {transform_indices = @transform_6, window_bounds = array<i64: 1, 16, 128>}]} {
    %c0 = arith.constant 0 : index
    %c0_0 = arith.constant 0 : index
    %c0_1 = arith.constant 0 : index
    %0 = vector.load %arg1[%c0, %c0_0, %c0_1] : memref<1x16x128xbf16, #tpu.memory_space<vmem>>, vector<1x16x128xbf16>
    %1 = vector.shape_cast %0 : vector<1x16x128xbf16> to vector<16x128xbf16>
    %c0_2 = arith.constant 0 : index
    %c0_3 = arith.constant 0 : index
    %2 = vector.load %arg2[%c0_2, %c0_3] : memref<128x384xbf16, #tpu.memory_space<vmem>>, vector<128x384xbf16>
    %cst = arith.constant dense<0.000000e+00> : vector<16x384xf32>
    %3 = tpu.matmul %1, %2, %cst {dimension_numbers = #tpu.dot_dimension_numbers<[1], [0], [0], [1], [0, 0, 1, 1], [], []>} : vector<16x128xbf16>, vector<128x384xbf16>, vector<16x384xf32> -> vector<16x384xf32>
    %c0_4 = arith.constant 0 : index
    %c0_5 = arith.constant 0 : index
    %4 = vector.load %arg5[%c0_4, %c0_5] : memref<16x16xf32, #tpu.memory_space<vmem>>, vector<16x16xf32>
    %c0_6 = arith.constant 0 : index
    %c0_7 = arith.constant 0 : index
    %5 = vector.load %arg6[%c0_6, %c0_7] : memref<16x16xf32, #tpu.memory_space<vmem>>, vector<16x16xf32>
    %6 = tpu.iota {dimensions = array<i32: 0>} : vector<16x16xi32>
    %7 = tpu.iota {dimensions = array<i32: 1>} : vector<16x16xi32>
    %8 = arith.cmpi sle, %7, %6 : vector<16x16xi32>
    %9 = vector.extract_strided_slice %3 {offsets = [0, 0], sizes = [16, 16], strides = [1, 1]} : vector<16x384xf32> to vector<16x16xf32>
    %10 = vector.extract_strided_slice %3 {offsets = [0, 16], sizes = [16, 16], strides = [1, 1]} : vector<16x384xf32> to vector<16x16xf32>
    %11 = vector.extract_strided_slice %3 {offsets = [0, 128], sizes = [16, 16], strides = [1, 1]} : vector<16x384xf32> to vector<16x16xf32>
    %12 = vector.extract_strided_slice %3 {offsets = [0, 144], sizes = [16, 16], strides = [1, 1]} : vector<16x384xf32> to vector<16x16xf32>
    %13 = vector.extract_strided_slice %3 {offsets = [0, 256], sizes = [16, 32], strides = [1, 1]} : vector<16x384xf32> to vector<16x32xf32>
    %14 = arith.truncf %13 : vector<16x32xf32> to vector<16x32xbf16>
    %15 = arith.mulf %9, %4 : vector<16x16xf32>
    %16 = arith.mulf %10, %5 : vector<16x16xf32>
    %17 = arith.subf %15, %16 : vector<16x16xf32>
    %18 = arith.mulf %10, %4 : vector<16x16xf32>
    %19 = arith.mulf %9, %5 : vector<16x16xf32>
    %20 = arith.addf %18, %19 : vector<16x16xf32>
    %21 = tpu.concatenate %17, %20 in 1 : vector<16x16xf32>, vector<16x16xf32> -> vector<16x32xf32>
    %22 = arith.truncf %21 : vector<16x32xf32> to vector<16x32xbf16>
    %23 = arith.mulf %11, %4 : vector<16x16xf32>
    %24 = arith.mulf %12, %5 : vector<16x16xf32>
    %25 = arith.subf %23, %24 : vector<16x16xf32>
    %26 = arith.mulf %12, %4 : vector<16x16xf32>
    %27 = arith.mulf %11, %5 : vector<16x16xf32>
    %28 = arith.addf %26, %27 : vector<16x16xf32>
    %29 = tpu.concatenate %25, %28 in 1 : vector<16x16xf32>, vector<16x16xf32> -> vector<16x32xf32>
    %30 = arith.truncf %29 : vector<16x32xf32> to vector<16x32xbf16>
    %cst_8 = arith.constant dense<0.000000e+00> : vector<16x16xf32>
    %31 = tpu.matmul %22, %30, %cst_8 {dimension_numbers = #tpu.dot_dimension_numbers<[1], [1], [0], [0], [0, 0, 1, 0], [], []>} : vector<16x32xbf16>, vector<16x32xbf16>, vector<16x16xf32> -> vector<16x16xf32>
    %cst_9 = arith.constant 0.176776692 : f32
    %32 = vector.broadcast %cst_9 : f32 to vector<16x16xf32>
    %33 = arith.mulf %31, %32 : vector<16x16xf32>
    %cst_10 = arith.constant -1.000000e+30 : f32
    %34 = vector.broadcast %cst_10 : f32 to vector<16x16xf32>
    %35 = arith.select %8, %33, %34 : vector<16x16xi1>, vector<16x16xf32>
    %cst_11 = arith.constant dense<0xFF800000> : vector<16xf32>
    %36 = vector.multi_reduction <maximumf>, %35, %cst_11 [1] : vector<16x16xf32> to vector<16xf32>
    %37 = vector.shape_cast %36 : vector<16xf32> to vector<16x1xf32>
    %38 = vector.broadcast %37 : vector<16x1xf32> to vector<16x16xf32>
    %39 = arith.subf %35, %38 : vector<16x16xf32>
    %40 = math.exp %39 : vector<16x16xf32>
    %cst_12 = arith.constant dense<0.000000e+00> : vector<16xf32>
    %41 = vector.multi_reduction <add>, %40, %cst_12 [1] : vector<16x16xf32> to vector<16xf32>
    %42 = vector.shape_cast %41 : vector<16xf32> to vector<16x1xf32>
    %43 = tpu.reciprocal %42 {approx = true} : vector<16x1xf32> -> vector<16x1xf32>
    %44 = vector.broadcast %43 : vector<16x1xf32> to vector<16x16xf32>
    %45 = arith.mulf %40, %44 : vector<16x16xf32>
    %46 = arith.truncf %45 : vector<16x16xf32> to vector<16x16xbf16>
    %cst_13 = arith.constant dense<0.000000e+00> : vector<16x32xf32>
    %47 = tpu.matmul %46, %14, %cst_13 {dimension_numbers = #tpu.dot_dimension_numbers<[1], [0], [0], [1], [0, 0, 1, 1], [], []>} : vector<16x16xbf16>, vector<16x32xbf16>, vector<16x32xf32> -> vector<16x32xf32>
    %c0_14 = arith.constant 0 : index
    %c0_15 = arith.constant 0 : index
    %48 = vector.load %arg8[%c0_14, %c0_15] : memref<16x128xf32, #tpu.memory_space<vmem>>, vector<16x32xf32>
    tpu.vector_store %arg8[%c0_14, %c0_15], %47 {strides = array<i32>} : memref<16x128xf32, #tpu.memory_space<vmem>>, vector<16x32xf32>,
    %49 = vector.extract_strided_slice %3 {offsets = [0, 32], sizes = [16, 16], strides = [1, 1]} : vector<16x384xf32> to vector<16x16xf32>
    %50 = vector.extract_strided_slice %3 {offsets = [0, 48], sizes = [16, 16], strides = [1, 1]} : vector<16x384xf32> to vector<16x16xf32>
    %51 = vector.extract_strided_slice %3 {offsets = [0, 160], sizes = [16, 16], strides = [1, 1]} : vector<16x384xf32> to vector<16x16xf32>
    %52 = vector.extract_strided_slice %3 {offsets = [0, 176], sizes = [16, 16], strides = [1, 1]} : vector<16x384xf32> to vector<16x16xf32>
    %53 = vector.extract_strided_slice %3 {offsets = [0, 288], sizes = [16, 32], strides = [1, 1]} : vector<16x384xf32> to vector<16x32xf32>
    %54 = arith.truncf %53 : vector<16x32xf32> to vector<16x32xbf16>
    %55 = arith.mulf %49, %4 : vector<16x16xf32>
    %56 = arith.mulf %50, %5 : vector<16x16xf32>
    %57 = arith.subf %55, %56 : vector<16x16xf32>
    %58 = arith.mulf %50, %4 : vector<16x16xf32>
    %59 = arith.mulf %49, %5 : vector<16x16xf32>
    %60 = arith.addf %58, %59 : vector<16x16xf32>
    %61 = tpu.concatenate %57, %60 in 1 : vector<16x16xf32>, vector<16x16xf32> -> vector<16x32xf32>
    %62 = arith.truncf %61 : vector<16x32xf32> to vector<16x32xbf16>
    %63 = arith.mulf %51, %4 : vector<16x16xf32>
    %64 = arith.mulf %52, %5 : vector<16x16xf32>
    %65 = arith.subf %63, %64 : vector<16x16xf32>
    %66 = arith.mulf %52, %4 : vector<16x16xf32>
    %67 = arith.mulf %51, %5 : vector<16x16xf32>
    %68 = arith.addf %66, %67 : vector<16x16xf32>
    %69 = tpu.concatenate %65, %68 in 1 : vector<16x16xf32>, vector<16x16xf32> -> vector<16x32xf32>
    %70 = arith.truncf %69 : vector<16x32xf32> to vector<16x32xbf16>
    %cst_16 = arith.constant dense<0.000000e+00> : vector<16x16xf32>
    %71 = tpu.matmul %62, %70, %cst_16 {dimension_numbers = #tpu.dot_dimension_numbers<[1], [1], [0], [0], [0, 0, 1, 0], [], []>} : vector<16x32xbf16>, vector<16x32xbf16>, vector<16x16xf32> -> vector<16x16xf32>
    %cst_17 = arith.constant 0.176776692 : f32
    %72 = vector.broadcast %cst_17 : f32 to vector<16x16xf32>
    %73 = arith.mulf %71, %72 : vector<16x16xf32>
    %cst_18 = arith.constant -1.000000e+30 : f32
    %74 = vector.broadcast %cst_18 : f32 to vector<16x16xf32>
    %75 = arith.select %8, %73, %74 : vector<16x16xi1>, vector<16x16xf32>
    %cst_19 = arith.constant dense<0xFF800000> : vector<16xf32>
    %76 = vector.multi_reduction <maximumf>, %75, %cst_19 [1] : vector<16x16xf32> to vector<16xf32>
    %77 = vector.shape_cast %76 : vector<16xf32> to vector<16x1xf32>
    %78 = vector.broadcast %77 : vector<16x1xf32> to vector<16x16xf32>
    %79 = arith.subf %75, %78 : vector<16x16xf32>
    %80 = math.exp %79 : vector<16x16xf32>
    %cst_20 = arith.constant dense<0.000000e+00> : vector<16xf32>
    %81 = vector.multi_reduction <add>, %80, %cst_20 [1] : vector<16x16xf32> to vector<16xf32>
    %82 = vector.shape_cast %81 : vector<16xf32> to vector<16x1xf32>
    %83 = tpu.reciprocal %82 {approx = true} : vector<16x1xf32> -> vector<16x1xf32>
    %84 = vector.broadcast %83 : vector<16x1xf32> to vector<16x16xf32>
    %85 = arith.mulf %80, %84 : vector<16x16xf32>
    %86 = arith.truncf %85 : vector<16x16xf32> to vector<16x16xbf16>
    %cst_21 = arith.constant dense<0.000000e+00> : vector<16x32xf32>
    %87 = tpu.matmul %86, %54, %cst_21 {dimension_numbers = #tpu.dot_dimension_numbers<[1], [0], [0], [1], [0, 0, 1, 1], [], []>} : vector<16x16xbf16>, vector<16x32xbf16>, vector<16x32xf32> -> vector<16x32xf32>
    %c0_22 = arith.constant 0 : index
    %c32 = arith.constant 32 : index
    %88 = vector.load %arg8[%c0_22, %c32] : memref<16x128xf32, #tpu.memory_space<vmem>>, vector<16x32xf32>
    tpu.vector_store %arg8[%c0_22, %c32], %87 {strides = array<i32>} : memref<16x128xf32, #tpu.memory_space<vmem>>, vector<16x32xf32>,
    %89 = vector.extract_strided_slice %3 {offsets = [0, 64], sizes = [16, 16], strides = [1, 1]} : vector<16x384xf32> to vector<16x16xf32>
    %90 = vector.extract_strided_slice %3 {offsets = [0, 80], sizes = [16, 16], strides = [1, 1]} : vector<16x384xf32> to vector<16x16xf32>
    %91 = vector.extract_strided_slice %3 {offsets = [0, 192], sizes = [16, 16], strides = [1, 1]} : vector<16x384xf32> to vector<16x16xf32>
    %92 = vector.extract_strided_slice %3 {offsets = [0, 208], sizes = [16, 16], strides = [1, 1]} : vector<16x384xf32> to vector<16x16xf32>
    %93 = vector.extract_strided_slice %3 {offsets = [0, 320], sizes = [16, 32], strides = [1, 1]} : vector<16x384xf32> to vector<16x32xf32>
    %94 = arith.truncf %93 : vector<16x32xf32> to vector<16x32xbf16>
    %95 = arith.mulf %89, %4 : vector<16x16xf32>
    %96 = arith.mulf %90, %5 : vector<16x16xf32>
    %97 = arith.subf %95, %96 : vector<16x16xf32>
    %98 = arith.mulf %90, %4 : vector<16x16xf32>
    %99 = arith.mulf %89, %5 : vector<16x16xf32>
    %100 = arith.addf %98, %99 : vector<16x16xf32>
    %101 = tpu.concatenate %97, %100 in 1 : vector<16x16xf32>, vector<16x16xf32> -> vector<16x32xf32>
    %102 = arith.truncf %101 : vector<16x32xf32> to vector<16x32xbf16>
    %103 = arith.mulf %91, %4 : vector<16x16xf32>
    %104 = arith.mulf %92, %5 : vector<16x16xf32>
    %105 = arith.subf %103, %104 : vector<16x16xf32>
    %106 = arith.mulf %92, %4 : vector<16x16xf32>
    %107 = arith.mulf %91, %5 : vector<16x16xf32>
    %108 = arith.addf %106, %107 : vector<16x16xf32>
    %109 = tpu.concatenate %105, %108 in 1 : vector<16x16xf32>, vector<16x16xf32> -> vector<16x32xf32>
    %110 = arith.truncf %109 : vector<16x32xf32> to vector<16x32xbf16>
    %cst_23 = arith.constant dense<0.000000e+00> : vector<16x16xf32>
    %111 = tpu.matmul %102, %110, %cst_23 {dimension_numbers = #tpu.dot_dimension_numbers<[1], [1], [0], [0], [0, 0, 1, 0], [], []>} : vector<16x32xbf16>, vector<16x32xbf16>, vector<16x16xf32> -> vector<16x16xf32>
    %cst_24 = arith.constant 0.176776692 : f32
    %112 = vector.broadcast %cst_24 : f32 to vector<16x16xf32>
    %113 = arith.mulf %111, %112 : vector<16x16xf32>
    %cst_25 = arith.constant -1.000000e+30 : f32
    %114 = vector.broadcast %cst_25 : f32 to vector<16x16xf32>
    %115 = arith.select %8, %113, %114 : vector<16x16xi1>, vector<16x16xf32>
    %cst_26 = arith.constant dense<0xFF800000> : vector<16xf32>
    %116 = vector.multi_reduction <maximumf>, %115, %cst_26 [1] : vector<16x16xf32> to vector<16xf32>
    %117 = vector.shape_cast %116 : vector<16xf32> to vector<16x1xf32>
    %118 = vector.broadcast %117 : vector<16x1xf32> to vector<16x16xf32>
    %119 = arith.subf %115, %118 : vector<16x16xf32>
    %120 = math.exp %119 : vector<16x16xf32>
    %cst_27 = arith.constant dense<0.000000e+00> : vector<16xf32>
    %121 = vector.multi_reduction <add>, %120, %cst_27 [1] : vector<16x16xf32> to vector<16xf32>
    %122 = vector.shape_cast %121 : vector<16xf32> to vector<16x1xf32>
    %123 = tpu.reciprocal %122 {approx = true} : vector<16x1xf32> -> vector<16x1xf32>
    %124 = vector.broadcast %123 : vector<16x1xf32> to vector<16x16xf32>
    %125 = arith.mulf %120, %124 : vector<16x16xf32>
    %126 = arith.truncf %125 : vector<16x16xf32> to vector<16x16xbf16>
    %cst_28 = arith.constant dense<0.000000e+00> : vector<16x32xf32>
    %127 = tpu.matmul %126, %94, %cst_28 {dimension_numbers = #tpu.dot_dimension_numbers<[1], [0], [0], [1], [0, 0, 1, 1], [], []>} : vector<16x16xbf16>, vector<16x32xbf16>, vector<16x32xf32> -> vector<16x32xf32>
    %c0_29 = arith.constant 0 : index
    %c64 = arith.constant 64 : index
    %128 = vector.load %arg8[%c0_29, %c64] : memref<16x128xf32, #tpu.memory_space<vmem>>, vector<16x32xf32>
    tpu.vector_store %arg8[%c0_29, %c64], %127 {strides = array<i32>} : memref<16x128xf32, #tpu.memory_space<vmem>>, vector<16x32xf32>,
    %129 = vector.extract_strided_slice %3 {offsets = [0, 96], sizes = [16, 16], strides = [1, 1]} : vector<16x384xf32> to vector<16x16xf32>
    %130 = vector.extract_strided_slice %3 {offsets = [0, 112], sizes = [16, 16], strides = [1, 1]} : vector<16x384xf32> to vector<16x16xf32>
    %131 = vector.extract_strided_slice %3 {offsets = [0, 224], sizes = [16, 16], strides = [1, 1]} : vector<16x384xf32> to vector<16x16xf32>
    %132 = vector.extract_strided_slice %3 {offsets = [0, 240], sizes = [16, 16], strides = [1, 1]} : vector<16x384xf32> to vector<16x16xf32>
    %133 = vector.extract_strided_slice %3 {offsets = [0, 352], sizes = [16, 32], strides = [1, 1]} : vector<16x384xf32> to vector<16x32xf32>
    %134 = arith.truncf %133 : vector<16x32xf32> to vector<16x32xbf16>
    %135 = arith.mulf %129, %4 : vector<16x16xf32>
    %136 = arith.mulf %130, %5 : vector<16x16xf32>
    %137 = arith.subf %135, %136 : vector<16x16xf32>
    %138 = arith.mulf %130, %4 : vector<16x16xf32>
    %139 = arith.mulf %129, %5 : vector<16x16xf32>
    %140 = arith.addf %138, %139 : vector<16x16xf32>
    %141 = tpu.concatenate %137, %140 in 1 : vector<16x16xf32>, vector<16x16xf32> -> vector<16x32xf32>
    %142 = arith.truncf %141 : vector<16x32xf32> to vector<16x32xbf16>
    %143 = arith.mulf %131, %4 : vector<16x16xf32>
    %144 = arith.mulf %132, %5 : vector<16x16xf32>
    %145 = arith.subf %143, %144 : vector<16x16xf32>
    %146 = arith.mulf %132, %4 : vector<16x16xf32>
    %147 = arith.mulf %131, %5 : vector<16x16xf32>
    %148 = arith.addf %146, %147 : vector<16x16xf32>
    %149 = tpu.concatenate %145, %148 in 1 : vector<16x16xf32>, vector<16x16xf32> -> vector<16x32xf32>
    %150 = arith.truncf %149 : vector<16x32xf32> to vector<16x32xbf16>
    %cst_30 = arith.constant dense<0.000000e+00> : vector<16x16xf32>
    %151 = tpu.matmul %142, %150, %cst_30 {dimension_numbers = #tpu.dot_dimension_numbers<[1], [1], [0], [0], [0, 0, 1, 0], [], []>} : vector<16x32xbf16>, vector<16x32xbf16>, vector<16x16xf32> -> vector<16x16xf32>
    %cst_31 = arith.constant 0.176776692 : f32
    %152 = vector.broadcast %cst_31 : f32 to vector<16x16xf32>
    %153 = arith.mulf %151, %152 : vector<16x16xf32>
    %cst_32 = arith.constant -1.000000e+30 : f32
    %154 = vector.broadcast %cst_32 : f32 to vector<16x16xf32>
    %155 = arith.select %8, %153, %154 : vector<16x16xi1>, vector<16x16xf32>
    %cst_33 = arith.constant dense<0xFF800000> : vector<16xf32>
    %156 = vector.multi_reduction <maximumf>, %155, %cst_33 [1] : vector<16x16xf32> to vector<16xf32>
    %157 = vector.shape_cast %156 : vector<16xf32> to vector<16x1xf32>
    %158 = vector.broadcast %157 : vector<16x1xf32> to vector<16x16xf32>
    %159 = arith.subf %155, %158 : vector<16x16xf32>
    %160 = math.exp %159 : vector<16x16xf32>
    %cst_34 = arith.constant dense<0.000000e+00> : vector<16xf32>
    %161 = vector.multi_reduction <add>, %160, %cst_34 [1] : vector<16x16xf32> to vector<16xf32>
    %162 = vector.shape_cast %161 : vector<16xf32> to vector<16x1xf32>
    %163 = tpu.reciprocal %162 {approx = true} : vector<16x1xf32> -> vector<16x1xf32>
    %164 = vector.broadcast %163 : vector<16x1xf32> to vector<16x16xf32>
    %165 = arith.mulf %160, %164 : vector<16x16xf32>
    %166 = arith.truncf %165 : vector<16x16xf32> to vector<16x16xbf16>
    %cst_35 = arith.constant dense<0.000000e+00> : vector<16x32xf32>
    %167 = tpu.matmul %166, %134, %cst_35 {dimension_numbers = #tpu.dot_dimension_numbers<[1], [0], [0], [1], [0, 0, 1, 1], [], []>} : vector<16x16xbf16>, vector<16x32xbf16>, vector<16x32xf32> -> vector<16x32xf32>
    %c0_36 = arith.constant 0 : index
    %c96 = arith.constant 96 : index
    %168 = vector.load %arg8[%c0_36, %c96] : memref<16x128xf32, #tpu.memory_space<vmem>>, vector<16x32xf32>
    tpu.vector_store %arg8[%c0_36, %c96], %167 {strides = array<i32>} : memref<16x128xf32, #tpu.memory_space<vmem>>, vector<16x32xf32>,
    %c0_37 = arith.constant 0 : index
    %c0_38 = arith.constant 0 : index
    %169 = vector.load %arg8[%c0_37, %c0_38] : memref<16x128xf32, #tpu.memory_space<vmem>>, vector<16x128xf32>
    %170 = arith.truncf %169 : vector<16x128xf32> to vector<16x128xbf16>
    %c0_39 = arith.constant 0 : index
    %c0_40 = arith.constant 0 : index
    %171 = vector.load %arg3[%c0_39, %c0_40] : memref<128x128xbf16, #tpu.memory_space<vmem>>, vector<128x128xbf16>
    %cst_41 = arith.constant dense<0.000000e+00> : vector<16x128xf32>
    %172 = tpu.matmul %170, %171, %cst_41 {dimension_numbers = #tpu.dot_dimension_numbers<[1], [0], [0], [1], [0, 0, 1, 1], [], []>} : vector<16x128xbf16>, vector<128x128xbf16>, vector<16x128xf32> -> vector<16x128xf32>
    %173 = arith.mulf %172, %172 : vector<16x128xf32>
    %cst_42 = arith.constant dense<0.000000e+00> : vector<16xf32>
    %174 = vector.multi_reduction <add>, %173, %cst_42 [1] : vector<16x128xf32> to vector<16xf32>
    %175 = vector.shape_cast %174 : vector<16xf32> to vector<16x1xf32>
    %cst_43 = arith.constant 1.280000e+02 : f32
    %176 = vector.broadcast %cst_43 : f32 to vector<16x1xf32>
    %177 = arith.divf %175, %176 : vector<16x1xf32>
    %178 = arith.extf %1 : vector<16x128xbf16> to vector<16x128xf32>
    %cst_44 = arith.constant 9.99999974E-6 : f32
    %179 = vector.broadcast %cst_44 : f32 to vector<16x1xf32>
    %180 = arith.addf %177, %179 : vector<16x1xf32>
    %181 = math.rsqrt %180 : vector<16x1xf32>
    %182 = vector.broadcast %181 : vector<16x1xf32> to vector<16x128xf32>
    %183 = arith.mulf %172, %182 : vector<16x128xf32>
    %c0_45 = arith.constant 0 : index
    %c0_46 = arith.constant 0 : index
    %184 = vector.load %arg4[%c0_45, %c0_46] : memref<1x128xf32, #tpu.memory_space<vmem>>, vector<1x128xf32>
    %185 = vector.broadcast %184 : vector<1x128xf32> to vector<16x128xf32>
    %186 = arith.mulf %183, %185 : vector<16x128xf32>
    %187 = arith.addf %178, %186 : vector<16x128xf32>
    %188 = arith.truncf %187 : vector<16x128xf32> to vector<16x128xbf16>
    %c0_47 = arith.constant 0 : index
    %c0_48 = arith.constant 0 : index
    %c0_49 = arith.constant 0 : index
    %189 = vector.load %arg7[%c0_47, %c0_48, %c0_49] : memref<1x16x128xbf16, #tpu.memory_space<vmem>>, vector<1x16x128xbf16>
    %190 = vector.shape_cast %189 : vector<1x16x128xbf16> to vector<16x128xbf16>
    %191 = vector.shape_cast %188 : vector<16x128xbf16> to vector<1x16x128xbf16>
    tpu.vector_store %arg7[%c0_47, %c0_48, %c0_49], %191 {strides = array<i32>} : memref<1x16x128xbf16, #tpu.memory_space<vmem>>, vector<1x16x128xbf16>,
    return
  }
  func.func @transform_0(%arg0: i32) -> (i32, i32, i32) {
    %c0_i32 = arith.constant 0 : i32
    %c0_i32_0 = arith.constant 0 : i32
    %c0_i32_1 = arith.constant 0 : i32
    return %arg0, %c0_i32, %c0_i32_0 : i32, i32, i32
  }
  func.func @transform_1(%arg0: i32) -> (i32, i32) {
    %c0_i32 = arith.constant 0 : i32
    %c0_i32_0 = arith.constant 0 : i32
    %c0_i32_1 = arith.constant 0 : i32
    return %c0_i32, %c0_i32_0 : i32, i32
  }
  func.func @transform_2(%arg0: i32) -> (i32, i32) {
    %c0_i32 = arith.constant 0 : i32
    %c0_i32_0 = arith.constant 0 : i32
    %c0_i32_1 = arith.constant 0 : i32
    return %c0_i32, %c0_i32_0 : i32, i32
  }
  func.func @transform_3(%arg0: i32) -> (i32, i32) {
    %c0_i32 = arith.constant 0 : i32
    %c0_i32_0 = arith.constant 0 : i32
    %c0_i32_1 = arith.constant 0 : i32
    return %c0_i32, %c0_i32_0 : i32, i32
  }
  func.func @transform_4(%arg0: i32) -> (i32, i32) {
    %c0_i32 = arith.constant 0 : i32
    %c0_i32_0 = arith.constant 0 : i32
    %c0_i32_1 = arith.constant 0 : i32
    return %c0_i32, %c0_i32_0 : i32, i32
  }
  func.func @transform_5(%arg0: i32) -> (i32, i32) {
    %c0_i32 = arith.constant 0 : i32
    %c0_i32_0 = arith.constant 0 : i32
    %c0_i32_1 = arith.constant 0 : i32
    return %c0_i32, %c0_i32_0 : i32, i32
  }
  func.func @transform_6(%arg0: i32) -> (i32, i32, i32) {
    %c0_i32 = arith.constant 0 : i32
    %c0_i32_0 = arith.constant 0 : i32
    %c0_i32_1 = arith.constant 0 : i32
    return %arg0, %c0_i32, %c0_i32_0 : i32, i32, i32
  }
}

module attributes {stable_mosaic.version = 11 : i64} {
  func.func @_attn_block_kernel(%arg0: i32, %arg1: memref<1x16x128xbf16, #tpu.memory_space<vmem>>, %arg2: memref<128x384xbf16, #tpu.memory_space<vmem>>, %arg3: memref<128x128xbf16, #tpu.memory_space<vmem>>, %arg4: memref<1x128xf32, #tpu.memory_space<vmem>>, %arg5: memref<16x16xf32, #tpu.memory_space<vmem>>, %arg6: memref<16x16xf32, #tpu.memory_space<vmem>>, %arg7: memref<1x16x128xbf16, #tpu.memory_space<vmem>>, %arg8: memref<16x128xf32, #tpu.memory_space<vmem>>) attributes {dimension_semantics = [#tpu.dimension_semantics<parallel>], iteration_bounds = array<i64: 2>, scalar_prefetch = 0 : i64, scratch_operands = 1 : i64, tpu.core_type = #tpu.core_type<tc>, window_params = [{transform_indices = @transform_0, window_bounds = array<i64: 1, 16, 128>}, {pipeline_mode = #tpu.pipeline_mode<synchronous>, transform_indices = @transform_1, window_bounds = array<i64: 128, 384>}, {pipeline_mode = #tpu.pipeline_mode<synchronous>, transform_indices = @transform_2, window_bounds = array<i64: 128, 128>}, {pipeline_mode = #tpu.pipeline_mode<synchronous>, transform_indices = @transform_3, window_bounds = array<i64: 1, 128>}, {pipeline_mode = #tpu.pipeline_mode<synchronous>, transform_indices = @transform_4, window_bounds = array<i64: 16, 16>}, {pipeline_mode = #tpu.pipeline_mode<synchronous>, transform_indices = @transform_5, window_bounds = array<i64: 16, 16>}, {transform_indices = @transform_6, window_bounds = array<i64: 1, 16, 128>}]} {
    %c0 = arith.constant 0 : index
    %c0_0 = arith.constant 0 : index
    %c0_1 = arith.constant 0 : index
    %0 = vector.load %arg1[%c0, %c0_0, %c0_1] : memref<1x16x128xbf16, #tpu.memory_space<vmem>>, vector<1x16x128xbf16>
    %1 = vector.shape_cast %0 : vector<1x16x128xbf16> to vector<16x128xbf16>
    %c0_2 = arith.constant 0 : index
    %c0_3 = arith.constant 0 : index
    %2 = vector.load %arg2[%c0_2, %c0_3] : memref<128x384xbf16, #tpu.memory_space<vmem>>, vector<128x384xbf16>
    %cst = arith.constant dense<0.000000e+00> : vector<16x384xf32>
    %3 = tpu.matmul %1, %2, %cst {dimension_numbers = #tpu.dot_dimension_numbers<[1], [0], [0], [1], [0, 0, 1, 1], [], []>} : vector<16x128xbf16>, vector<128x384xbf16>, vector<16x384xf32> -> vector<16x384xf32>
    %c0_4 = arith.constant 0 : index
    %c0_5 = arith.constant 0 : index
    %4 = vector.load %arg5[%c0_4, %c0_5] : memref<16x16xf32, #tpu.memory_space<vmem>>, vector<16x16xf32>
    %c0_6 = arith.constant 0 : index
    %c0_7 = arith.constant 0 : index
    %5 = vector.load %arg6[%c0_6, %c0_7] : memref<16x16xf32, #tpu.memory_space<vmem>>, vector<16x16xf32>
    %6 = tpu.iota {dimensions = array<i32: 0>} : vector<16x16xi32>
    %7 = tpu.iota {dimensions = array<i32: 1>} : vector<16x16xi32>
    %8 = arith.cmpi sle, %7, %6 : vector<16x16xi32>
    %9 = vector.extract_strided_slice %3 {offsets = [0, 0], sizes = [16, 16], strides = [1, 1]} : vector<16x384xf32> to vector<16x16xf32>
    %10 = vector.extract_strided_slice %3 {offsets = [0, 16], sizes = [16, 16], strides = [1, 1]} : vector<16x384xf32> to vector<16x16xf32>
    %11 = vector.extract_strided_slice %3 {offsets = [0, 128], sizes = [16, 16], strides = [1, 1]} : vector<16x384xf32> to vector<16x16xf32>
    %12 = vector.extract_strided_slice %3 {offsets = [0, 144], sizes = [16, 16], strides = [1, 1]} : vector<16x384xf32> to vector<16x16xf32>
    %13 = vector.extract_strided_slice %3 {offsets = [0, 256], sizes = [16, 32], strides = [1, 1]} : vector<16x384xf32> to vector<16x32xf32>
    %14 = arith.truncf %13 : vector<16x32xf32> to vector<16x32xbf16>
    %15 = arith.mulf %9, %4 : vector<16x16xf32>
    %16 = arith.mulf %10, %5 : vector<16x16xf32>
    %17 = arith.subf %15, %16 : vector<16x16xf32>
    %18 = arith.mulf %10, %4 : vector<16x16xf32>
    %19 = arith.mulf %9, %5 : vector<16x16xf32>
    %20 = arith.addf %18, %19 : vector<16x16xf32>
    %21 = tpu.concatenate %17, %20 in 1 : vector<16x16xf32>, vector<16x16xf32> -> vector<16x32xf32>
    %22 = arith.truncf %21 : vector<16x32xf32> to vector<16x32xbf16>
    %23 = arith.mulf %11, %4 : vector<16x16xf32>
    %24 = arith.mulf %12, %5 : vector<16x16xf32>
    %25 = arith.subf %23, %24 : vector<16x16xf32>
    %26 = arith.mulf %12, %4 : vector<16x16xf32>
    %27 = arith.mulf %11, %5 : vector<16x16xf32>
    %28 = arith.addf %26, %27 : vector<16x16xf32>
    %29 = tpu.concatenate %25, %28 in 1 : vector<16x16xf32>, vector<16x16xf32> -> vector<16x32xf32>
    %30 = arith.truncf %29 : vector<16x32xf32> to vector<16x32xbf16>
    %cst_8 = arith.constant dense<0.000000e+00> : vector<16x16xf32>
    %31 = tpu.matmul %22, %30, %cst_8 {dimension_numbers = #tpu.dot_dimension_numbers<[1], [1], [0], [0], [0, 0, 1, 0], [], []>} : vector<16x32xbf16>, vector<16x32xbf16>, vector<16x16xf32> -> vector<16x16xf32>
    %cst_9 = arith.constant 0.176776692 : f32
    %32 = vector.broadcast %cst_9 : f32 to vector<16x16xf32>
    %33 = arith.mulf %31, %32 : vector<16x16xf32>
    %cst_10 = arith.constant -1.000000e+30 : f32
    %34 = vector.broadcast %cst_10 : f32 to vector<16x16xf32>
    %35 = arith.select %8, %33, %34 : vector<16x16xi1>, vector<16x16xf32>
    %cst_11 = arith.constant dense<0xFF800000> : vector<16xf32>
    %36 = vector.multi_reduction <maximumf>, %35, %cst_11 [1] : vector<16x16xf32> to vector<16xf32>
    %37 = vector.shape_cast %36 : vector<16xf32> to vector<16x1xf32>
    %38 = vector.broadcast %37 : vector<16x1xf32> to vector<16x16xf32>
    %39 = arith.subf %35, %38 : vector<16x16xf32>
    %40 = math.exp %39 : vector<16x16xf32>
    %cst_12 = arith.constant dense<0.000000e+00> : vector<16xf32>
    %41 = vector.multi_reduction <add>, %40, %cst_12 [1] : vector<16x16xf32> to vector<16xf32>
    %42 = vector.shape_cast %41 : vector<16xf32> to vector<16x1xf32>
    %43 = tpu.reciprocal %42 {approx = true} : vector<16x1xf32> -> vector<16x1xf32>
    %44 = vector.broadcast %43 : vector<16x1xf32> to vector<16x16xf32>
    %45 = arith.mulf %40, %44 : vector<16x16xf32>
    %46 = arith.truncf %45 : vector<16x16xf32> to vector<16x16xbf16>
    %cst_13 = arith.constant dense<0.000000e+00> : vector<16x32xf32>
    %47 = tpu.matmul %46, %14, %cst_13 {dimension_numbers = #tpu.dot_dimension_numbers<[1], [0], [0], [1], [0, 0, 1, 1], [], []>} : vector<16x16xbf16>, vector<16x32xbf16>, vector<16x32xf32> -> vector<16x32xf32>
    %c0_14 = arith.constant 0 : index
    %c0_15 = arith.constant 0 : index
    %48 = vector.load %arg8[%c0_14, %c0_15] : memref<16x128xf32, #tpu.memory_space<vmem>>, vector<16x32xf32>
    tpu.vector_store %arg8[%c0_14, %c0_15], %47 {strides = array<i32>} : memref<16x128xf32, #tpu.memory_space<vmem>>, vector<16x32xf32>,
    %49 = vector.extract_strided_slice %3 {offsets = [0, 32], sizes = [16, 16], strides = [1, 1]} : vector<16x384xf32> to vector<16x16xf32>
    %50 = vector.extract_strided_slice %3 {offsets = [0, 48], sizes = [16, 16], strides = [1, 1]} : vector<16x384xf32> to vector<16x16xf32>
    %51 = vector.extract_strided_slice %3 {offsets = [0, 160], sizes = [16, 16], strides = [1, 1]} : vector<16x384xf32> to vector<16x16xf32>
    %52 = vector.extract_strided_slice %3 {offsets = [0, 176], sizes = [16, 16], strides = [1, 1]} : vector<16x384xf32> to vector<16x16xf32>
    %53 = vector.extract_strided_slice %3 {offsets = [0, 288], sizes = [16, 32], strides = [1, 1]} : vector<16x384xf32> to vector<16x32xf32>
    %54 = arith.truncf %53 : vector<16x32xf32> to vector<16x32xbf16>
    %55 = arith.mulf %49, %4 : vector<16x16xf32>
    %56 = arith.mulf %50, %5 : vector<16x16xf32>
    %57 = arith.subf %55, %56 : vector<16x16xf32>
    %58 = arith.mulf %50, %4 : vector<16x16xf32>
    %59 = arith.mulf %49, %5 : vector<16x16xf32>
    %60 = arith.addf %58, %59 : vector<16x16xf32>
    %61 = tpu.concatenate %57, %60 in 1 : vector<16x16xf32>, vector<16x16xf32> -> vector<16x32xf32>
    %62 = arith.truncf %61 : vector<16x32xf32> to vector<16x32xbf16>
    %63 = arith.mulf %51, %4 : vector<16x16xf32>
    %64 = arith.mulf %52, %5 : vector<16x16xf32>
    %65 = arith.subf %63, %64 : vector<16x16xf32>
    %66 = arith.mulf %52, %4 : vector<16x16xf32>
    %67 = arith.mulf %51, %5 : vector<16x16xf32>
    %68 = arith.addf %66, %67 : vector<16x16xf32>
    %69 = tpu.concatenate %65, %68 in 1 : vector<16x16xf32>, vector<16x16xf32> -> vector<16x32xf32>
    %70 = arith.truncf %69 : vector<16x32xf32> to vector<16x32xbf16>
    %cst_16 = arith.constant dense<0.000000e+00> : vector<16x16xf32>
    %71 = tpu.matmul %62, %70, %cst_16 {dimension_numbers = #tpu.dot_dimension_numbers<[1], [1], [0], [0], [0, 0, 1, 0], [], []>} : vector<16x32xbf16>, vector<16x32xbf16>, vector<16x16xf32> -> vector<16x16xf32>
    %cst_17 = arith.constant 0.176776692 : f32
    %72 = vector.broadcast %cst_17 : f32 to vector<16x16xf32>
    %73 = arith.mulf %71, %72 : vector<16x16xf32>
    %cst_18 = arith.constant -1.000000e+30 : f32
    %74 = vector.broadcast %cst_18 : f32 to vector<16x16xf32>
    %75 = arith.select %8, %73, %74 : vector<16x16xi1>, vector<16x16xf32>
    %cst_19 = arith.constant dense<0xFF800000> : vector<16xf32>
    %76 = vector.multi_reduction <maximumf>, %75, %cst_19 [1] : vector<16x16xf32> to vector<16xf32>
    %77 = vector.shape_cast %76 : vector<16xf32> to vector<16x1xf32>
    %78 = vector.broadcast %77 : vector<16x1xf32> to vector<16x16xf32>
    %79 = arith.subf %75, %78 : vector<16x16xf32>
    %80 = math.exp %79 : vector<16x16xf32>
    %cst_20 = arith.constant dense<0.000000e+00> : vector<16xf32>
    %81 = vector.multi_reduction <add>, %80, %cst_20 [1] : vector<16x16xf32> to vector<16xf32>
    %82 = vector.shape_cast %81 : vector<16xf32> to vector<16x1xf32>
    %83 = tpu.reciprocal %82 {approx = true} : vector<16x1xf32> -> vector<16x1xf32>
    %84 = vector.broadcast %83 : vector<16x1xf32> to vector<16x16xf32>
    %85 = arith.mulf %80, %84 : vector<16x16xf32>
    %86 = arith.truncf %85 : vector<16x16xf32> to vector<16x16xbf16>
    %cst_21 = arith.constant dense<0.000000e+00> : vector<16x32xf32>
    %87 = tpu.matmul %86, %54, %cst_21 {dimension_numbers = #tpu.dot_dimension_numbers<[1], [0], [0], [1], [0, 0, 1, 1], [], []>} : vector<16x16xbf16>, vector<16x32xbf16>, vector<16x32xf32> -> vector<16x32xf32>
    %c0_22 = arith.constant 0 : index
    %c32 = arith.constant 32 : index
    %88 = vector.load %arg8[%c0_22, %c32] : memref<16x128xf32, #tpu.memory_space<vmem>>, vector<16x32xf32>
    tpu.vector_store %arg8[%c0_22, %c32], %87 {strides = array<i32>} : memref<16x128xf32, #tpu.memory_space<vmem>>, vector<16x32xf32>,
    %89 = vector.extract_strided_slice %3 {offsets = [0, 64], sizes = [16, 16], strides = [1, 1]} : vector<16x384xf32> to vector<16x16xf32>
    %90 = vector.extract_strided_slice %3 {offsets = [0, 80], sizes = [16, 16], strides = [1, 1]} : vector<16x384xf32> to vector<16x16xf32>
    %91 = vector.extract_strided_slice %3 {offsets = [0, 192], sizes = [16, 16], strides = [1, 1]} : vector<16x384xf32> to vector<16x16xf32>
    %92 = vector.extract_strided_slice %3 {offsets = [0, 208], sizes = [16, 16], strides = [1, 1]} : vector<16x384xf32> to vector<16x16xf32>
    %93 = vector.extract_strided_slice %3 {offsets = [0, 320], sizes = [16, 32], strides = [1, 1]} : vector<16x384xf32> to vector<16x32xf32>
    %94 = arith.truncf %93 : vector<16x32xf32> to vector<16x32xbf16>
    %95 = arith.mulf %89, %4 : vector<16x16xf32>
    %96 = arith.mulf %90, %5 : vector<16x16xf32>
    %97 = arith.subf %95, %96 : vector<16x16xf32>
    %98 = arith.mulf %90, %4 : vector<16x16xf32>
    %99 = arith.mulf %89, %5 : vector<16x16xf32>
    %100 = arith.addf %98, %99 : vector<16x16xf32>
    %101 = tpu.concatenate %97, %100 in 1 : vector<16x16xf32>, vector<16x16xf32> -> vector<16x32xf32>
    %102 = arith.truncf %101 : vector<16x32xf32> to vector<16x32xbf16>
    %103 = arith.mulf %91, %4 : vector<16x16xf32>
    %104 = arith.mulf %92, %5 : vector<16x16xf32>
    %105 = arith.subf %103, %104 : vector<16x16xf32>
    %106 = arith.mulf %92, %4 : vector<16x16xf32>
    %107 = arith.mulf %91, %5 : vector<16x16xf32>
    %108 = arith.addf %106, %107 : vector<16x16xf32>
    %109 = tpu.concatenate %105, %108 in 1 : vector<16x16xf32>, vector<16x16xf32> -> vector<16x32xf32>
    %110 = arith.truncf %109 : vector<16x32xf32> to vector<16x32xbf16>
    %cst_23 = arith.constant dense<0.000000e+00> : vector<16x16xf32>
    %111 = tpu.matmul %102, %110, %cst_23 {dimension_numbers = #tpu.dot_dimension_numbers<[1], [1], [0], [0], [0, 0, 1, 0], [], []>} : vector<16x32xbf16>, vector<16x32xbf16>, vector<16x16xf32> -> vector<16x16xf32>
    %cst_24 = arith.constant 0.176776692 : f32
    %112 = vector.broadcast %cst_24 : f32 to vector<16x16xf32>
    %113 = arith.mulf %111, %112 : vector<16x16xf32>
    %cst_25 = arith.constant -1.000000e+30 : f32
    %114 = vector.broadcast %cst_25 : f32 to vector<16x16xf32>
    %115 = arith.select %8, %113, %114 : vector<16x16xi1>, vector<16x16xf32>
    %cst_26 = arith.constant dense<0xFF800000> : vector<16xf32>
    %116 = vector.multi_reduction <maximumf>, %115, %cst_26 [1] : vector<16x16xf32> to vector<16xf32>
    %117 = vector.shape_cast %116 : vector<16xf32> to vector<16x1xf32>
    %118 = vector.broadcast %117 : vector<16x1xf32> to vector<16x16xf32>
    %119 = arith.subf %115, %118 : vector<16x16xf32>
    %120 = math.exp %119 : vector<16x16xf32>
    %cst_27 = arith.constant dense<0.000000e+00> : vector<16xf32>
    %121 = vector.multi_reduction <add>, %120, %cst_27 [1] : vector<16x16xf32> to vector<16xf32>
    %122 = vector.shape_cast %121 : vector<16xf32> to vector<16x1xf32>
    %123 = tpu.reciprocal %122 {approx = true} : vector<16x1xf32> -> vector<16x1xf32>
    %124 = vector.broadcast %123 : vector<16x1xf32> to vector<16x16xf32>
    %125 = arith.mulf %120, %124 : vector<16x16xf32>
    %126 = arith.truncf %125 : vector<16x16xf32> to vector<16x16xbf16>
    %cst_28 = arith.constant dense<0.000000e+00> : vector<16x32xf32>
    %127 = tpu.matmul %126, %94, %cst_28 {dimension_numbers = #tpu.dot_dimension_numbers<[1], [0], [0], [1], [0, 0, 1, 1], [], []>} : vector<16x16xbf16>, vector<16x32xbf16>, vector<16x32xf32> -> vector<16x32xf32>
    %c0_29 = arith.constant 0 : index
    %c64 = arith.constant 64 : index
    %128 = vector.load %arg8[%c0_29, %c64] : memref<16x128xf32, #tpu.memory_space<vmem>>, vector<16x32xf32>
    tpu.vector_store %arg8[%c0_29, %c64], %127 {strides = array<i32>} : memref<16x128xf32, #tpu.memory_space<vmem>>, vector<16x32xf32>,
    %129 = vector.extract_strided_slice %3 {offsets = [0, 96], sizes = [16, 16], strides = [1, 1]} : vector<16x384xf32> to vector<16x16xf32>
    %130 = vector.extract_strided_slice %3 {offsets = [0, 112], sizes = [16, 16], strides = [1, 1]} : vector<16x384xf32> to vector<16x16xf32>
    %131 = vector.extract_strided_slice %3 {offsets = [0, 224], sizes = [16, 16], strides = [1, 1]} : vector<16x384xf32> to vector<16x16xf32>
    %132 = vector.extract_strided_slice %3 {offsets = [0, 240], sizes = [16, 16], strides = [1, 1]} : vector<16x384xf32> to vector<16x16xf32>
    %133 = vector.extract_strided_slice %3 {offsets = [0, 352], sizes = [16, 32], strides = [1, 1]} : vector<16x384xf32> to vector<16x32xf32>
    %134 = arith.truncf %133 : vector<16x32xf32> to vector<16x32xbf16>
    %135 = arith.mulf %129, %4 : vector<16x16xf32>
    %136 = arith.mulf %130, %5 : vector<16x16xf32>
    %137 = arith.subf %135, %136 : vector<16x16xf32>
    %138 = arith.mulf %130, %4 : vector<16x16xf32>
    %139 = arith.mulf %129, %5 : vector<16x16xf32>
    %140 = arith.addf %138, %139 : vector<16x16xf32>
    %141 = tpu.concatenate %137, %140 in 1 : vector<16x16xf32>, vector<16x16xf32> -> vector<16x32xf32>
    %142 = arith.truncf %141 : vector<16x32xf32> to vector<16x32xbf16>
    %143 = arith.mulf %131, %4 : vector<16x16xf32>
    %144 = arith.mulf %132, %5 : vector<16x16xf32>
    %145 = arith.subf %143, %144 : vector<16x16xf32>
    %146 = arith.mulf %132, %4 : vector<16x16xf32>
    %147 = arith.mulf %131, %5 : vector<16x16xf32>
    %148 = arith.addf %146, %147 : vector<16x16xf32>
    %149 = tpu.concatenate %145, %148 in 1 : vector<16x16xf32>, vector<16x16xf32> -> vector<16x32xf32>
    %150 = arith.truncf %149 : vector<16x32xf32> to vector<16x32xbf16>
    %cst_30 = arith.constant dense<0.000000e+00> : vector<16x16xf32>
    %151 = tpu.matmul %142, %150, %cst_30 {dimension_numbers = #tpu.dot_dimension_numbers<[1], [1], [0], [0], [0, 0, 1, 0], [], []>} : vector<16x32xbf16>, vector<16x32xbf16>, vector<16x16xf32> -> vector<16x16xf32>
    %cst_31 = arith.constant 0.176776692 : f32
    %152 = vector.broadcast %cst_31 : f32 to vector<16x16xf32>
    %153 = arith.mulf %151, %152 : vector<16x16xf32>
    %cst_32 = arith.constant -1.000000e+30 : f32
    %154 = vector.broadcast %cst_32 : f32 to vector<16x16xf32>
    %155 = arith.select %8, %153, %154 : vector<16x16xi1>, vector<16x16xf32>
    %cst_33 = arith.constant dense<0xFF800000> : vector<16xf32>
    %156 = vector.multi_reduction <maximumf>, %155, %cst_33 [1] : vector<16x16xf32> to vector<16xf32>
    %157 = vector.shape_cast %156 : vector<16xf32> to vector<16x1xf32>
    %158 = vector.broadcast %157 : vector<16x1xf32> to vector<16x16xf32>
    %159 = arith.subf %155, %158 : vector<16x16xf32>
    %160 = math.exp %159 : vector<16x16xf32>
    %cst_34 = arith.constant dense<0.000000e+00> : vector<16xf32>
    %161 = vector.multi_reduction <add>, %160, %cst_34 [1] : vector<16x16xf32> to vector<16xf32>
    %162 = vector.shape_cast %161 : vector<16xf32> to vector<16x1xf32>
    %163 = tpu.reciprocal %162 {approx = true} : vector<16x1xf32> -> vector<16x1xf32>
    %164 = vector.broadcast %163 : vector<16x1xf32> to vector<16x16xf32>
    %165 = arith.mulf %160, %164 : vector<16x16xf32>
    %166 = arith.truncf %165 : vector<16x16xf32> to vector<16x16xbf16>
    %cst_35 = arith.constant dense<0.000000e+00> : vector<16x32xf32>
    %167 = tpu.matmul %166, %134, %cst_35 {dimension_numbers = #tpu.dot_dimension_numbers<[1], [0], [0], [1], [0, 0, 1, 1], [], []>} : vector<16x16xbf16>, vector<16x32xbf16>, vector<16x32xf32> -> vector<16x32xf32>
    %c0_36 = arith.constant 0 : index
    %c96 = arith.constant 96 : index
    %168 = vector.load %arg8[%c0_36, %c96] : memref<16x128xf32, #tpu.memory_space<vmem>>, vector<16x32xf32>
    tpu.vector_store %arg8[%c0_36, %c96], %167 {strides = array<i32>} : memref<16x128xf32, #tpu.memory_space<vmem>>, vector<16x32xf32>,
    %c0_37 = arith.constant 0 : index
    %c0_38 = arith.constant 0 : index
    %169 = vector.load %arg8[%c0_37, %c0_38] : memref<16x128xf32, #tpu.memory_space<vmem>>, vector<16x128xf32>
    %170 = arith.truncf %169 : vector<16x128xf32> to vector<16x128xbf16>
    %c0_39 = arith.constant 0 : index
    %c0_40 = arith.constant 0 : index
    %171 = vector.load %arg3[%c0_39, %c0_40] : memref<128x128xbf16, #tpu.memory_space<vmem>>, vector<128x128xbf16>
    %cst_41 = arith.constant dense<0.000000e+00> : vector<16x128xf32>
    %172 = tpu.matmul %170, %171, %cst_41 {dimension_numbers = #tpu.dot_dimension_numbers<[1], [0], [0], [1], [0, 0, 1, 1], [], []>} : vector<16x128xbf16>, vector<128x128xbf16>, vector<16x128xf32> -> vector<16x128xf32>
    %173 = arith.mulf %172, %172 : vector<16x128xf32>
    %cst_42 = arith.constant dense<0.000000e+00> : vector<16xf32>
    %174 = vector.multi_reduction <add>, %173, %cst_42 [1] : vector<16x128xf32> to vector<16xf32>
    %175 = vector.shape_cast %174 : vector<16xf32> to vector<16x1xf32>
    %cst_43 = arith.constant 1.280000e+02 : f32
    %176 = vector.broadcast %cst_43 : f32 to vector<16x1xf32>
    %177 = arith.divf %175, %176 : vector<16x1xf32>
    %178 = arith.extf %1 : vector<16x128xbf16> to vector<16x128xf32>
    %cst_44 = arith.constant 9.99999974E-6 : f32
    %179 = vector.broadcast %cst_44 : f32 to vector<16x1xf32>
    %180 = arith.addf %177, %179 : vector<16x1xf32>
    %181 = math.rsqrt %180 : vector<16x1xf32>
    %182 = vector.broadcast %181 : vector<16x1xf32> to vector<16x128xf32>
    %183 = arith.mulf %172, %182 : vector<16x128xf32>
    %c0_45 = arith.constant 0 : index
    %c0_46 = arith.constant 0 : index
    %184 = vector.load %arg4[%c0_45, %c0_46] : memref<1x128xf32, #tpu.memory_space<vmem>>, vector<1x128xf32>
    %185 = vector.broadcast %184 : vector<1x128xf32> to vector<16x128xf32>
    %186 = arith.mulf %183, %185 : vector<16x128xf32>
    %187 = arith.addf %178, %186 : vector<16x128xf32>
    %188 = arith.truncf %187 : vector<16x128xf32> to vector<16x128xbf16>
    %c0_47 = arith.constant 0 : index
    %c0_48 = arith.constant 0 : index
    %c0_49 = arith.constant 0 : index
    %189 = vector.load %arg7[%c0_47, %c0_48, %c0_49] : memref<1x16x128xbf16, #tpu.memory_space<vmem>>, vector<1x16x128xbf16>
    %190 = vector.shape_cast %189 : vector<1x16x128xbf16> to vector<16x128xbf16>
    %191 = vector.shape_cast %188 : vector<16x128xbf16> to vector<1x16x128xbf16>
    tpu.vector_store %arg7[%c0_47, %c0_48, %c0_49], %191 {strides = array<i32>} : memref<1x16x128xbf16, #tpu.memory_space<vmem>>, vector<1x16x128xbf16>,
    return
  }
  func.func @transform_0(%arg0: i32) -> (i32, i32, i32) {
    %c0_i32 = arith.constant 0 : i32
    %c0_i32_0 = arith.constant 0 : i32
    %c0_i32_1 = arith.constant 0 : i32
    return %arg0, %c0_i32, %c0_i32_0 : i32, i32, i32
  }
  func.func @transform_1(%arg0: i32) -> (i32, i32) {
    %c0_i32 = arith.constant 0 : i32
    %c0_i32_0 = arith.constant 0 : i32
    %c0_i32_1 = arith.constant 0 : i32
    return %c0_i32, %c0_i32_0 : i32, i32
  }
  func.func @transform_2(%arg0: i32) -> (i32, i32) {
    %c0_i32 = arith.constant 0 : i32
    %c0_i32_0 = arith.constant 0 : i32
    %c0_i32_1 = arith.constant 0 : i32
    return %c0_i32, %c0_i32_0 : i32, i32
  }
  func.func @transform_3(%arg0: i32) -> (i32, i32) {
    %c0_i32 = arith.constant 0 : i32
    %c0_i32_0 = arith.constant 0 : i32
    %c0_i32_1 = arith.constant 0 : i32
    return %c0_i32, %c0_i32_0 : i32, i32
  }
  func.func @transform_4(%arg0: i32) -> (i32, i32) {
    %c0_i32 = arith.constant 0 : i32
    %c0_i32_0 = arith.constant 0 : i32
    %c0_i32_1 = arith.constant 0 : i32
    return %c0_i32, %c0_i32_0 : i32, i32
  }
  func.func @transform_5(%arg0: i32) -> (i32, i32) {
    %c0_i32 = arith.constant 0 : i32
    %c0_i32_0 = arith.constant 0 : i32
    %c0_i32_1 = arith.constant 0 : i32
    return %c0_i32, %c0_i32_0 : i32, i32
  }
  func.func @transform_6(%arg0: i32) -> (i32, i32, i32) {
    %c0_i32 = arith.constant 0 : i32
    %c0_i32_0 = arith.constant 0 : i32
    %c0_i32_1 = arith.constant 0 : i32
    return %arg0, %c0_i32, %c0_i32_0 : i32, i32, i32
  }
}

module attributes {stable_mosaic.version = 11 : i64} {
  func.func @_norm_logits_kernel(%arg0: i32, %arg1: memref<2x128xbf16, #tpu.memory_space<vmem>>, %arg2: memref<1x128xf32, #tpu.memory_space<vmem>>, %arg3: memref<256x128xbf16, #tpu.memory_space<vmem>>, %arg4: memref<2x256xf32, #tpu.memory_space<vmem>>) attributes {dimension_semantics = [#tpu.dimension_semantics<parallel>], iteration_bounds = array<i64: 1>, scalar_prefetch = 0 : i64, scratch_operands = 0 : i64, tpu.core_type = #tpu.core_type<tc>, window_params = [{pipeline_mode = #tpu.pipeline_mode<synchronous>, transform_indices = @transform_0, window_bounds = array<i64: 2, 128>}, {pipeline_mode = #tpu.pipeline_mode<synchronous>, transform_indices = @transform_1, window_bounds = array<i64: 1, 128>}, {transform_indices = @transform_2, window_bounds = array<i64: 256, 128>}, {transform_indices = @transform_3, window_bounds = array<i64: 2, 256>}]} {
    %c0 = arith.constant 0 : index
    %c0_0 = arith.constant 0 : index
    %0 = vector.load %arg1[%c0, %c0_0] : memref<2x128xbf16, #tpu.memory_space<vmem>>, vector<2x128xbf16>
    %1 = arith.extf %0 : vector<2x128xbf16> to vector<2x128xf32>
    %2 = arith.mulf %1, %1 : vector<2x128xf32>
    %cst = arith.constant dense<0.000000e+00> : vector<2xf32>
    %3 = vector.multi_reduction <add>, %2, %cst [1] : vector<2x128xf32> to vector<2xf32>
    %4 = vector.shape_cast %3 : vector<2xf32> to vector<2x1xf32>
    %cst_1 = arith.constant 1.280000e+02 : f32
    %5 = vector.broadcast %cst_1 : f32 to vector<2x1xf32>
    %6 = arith.divf %4, %5 : vector<2x1xf32>
    %cst_2 = arith.constant 9.99999974E-6 : f32
    %7 = vector.broadcast %cst_2 : f32 to vector<2x1xf32>
    %8 = arith.addf %6, %7 : vector<2x1xf32>
    %9 = math.rsqrt %8 : vector<2x1xf32>
    %10 = vector.broadcast %9 : vector<2x1xf32> to vector<2x128xf32>
    %11 = arith.mulf %1, %10 : vector<2x128xf32>
    %c0_3 = arith.constant 0 : index
    %c0_4 = arith.constant 0 : index
    %12 = vector.load %arg2[%c0_3, %c0_4] : memref<1x128xf32, #tpu.memory_space<vmem>>, vector<1x128xf32>
    %13 = vector.broadcast %12 : vector<1x128xf32> to vector<2x128xf32>
    %14 = arith.mulf %11, %13 : vector<2x128xf32>
    %15 = arith.truncf %14 : vector<2x128xf32> to vector<2x128xbf16>
    %c0_5 = arith.constant 0 : index
    %c0_6 = arith.constant 0 : index
    %16 = vector.load %arg3[%c0_5, %c0_6] : memref<256x128xbf16, #tpu.memory_space<vmem>>, vector<256x128xbf16>
    %cst_7 = arith.constant dense<0.000000e+00> : vector<2x256xf32>
    %17 = tpu.matmul %15, %16, %cst_7 {dimension_numbers = #tpu.dot_dimension_numbers<[1], [1], [0], [0], [0, 0, 1, 0], [], []>} : vector<2x128xbf16>, vector<256x128xbf16>, vector<2x256xf32> -> vector<2x256xf32>
    %c0_8 = arith.constant 0 : index
    %c0_9 = arith.constant 0 : index
    %18 = vector.load %arg4[%c0_8, %c0_9] : memref<2x256xf32, #tpu.memory_space<vmem>>, vector<2x256xf32>
    tpu.vector_store %arg4[%c0_8, %c0_9], %17 {strides = array<i32>} : memref<2x256xf32, #tpu.memory_space<vmem>>, vector<2x256xf32>,
    return
  }
  func.func @transform_0(%arg0: i32) -> (i32, i32) {
    %c0_i32 = arith.constant 0 : i32
    %c0_i32_0 = arith.constant 0 : i32
    %c0_i32_1 = arith.constant 0 : i32
    return %c0_i32, %c0_i32_0 : i32, i32
  }
  func.func @transform_1(%arg0: i32) -> (i32, i32) {
    %c0_i32 = arith.constant 0 : i32
    %c0_i32_0 = arith.constant 0 : i32
    %c0_i32_1 = arith.constant 0 : i32
    return %c0_i32, %c0_i32_0 : i32, i32
  }
  func.func @transform_2(%arg0: i32) -> (i32, i32) {
    %c0_i32 = arith.constant 0 : i32
    %c0_i32_0 = arith.constant 0 : i32
    return %arg0, %c0_i32 : i32, i32
  }
  func.func @transform_3(%arg0: i32) -> (i32, i32) {
    %c0_i32 = arith.constant 0 : i32
    %c0_i32_0 = arith.constant 0 : i32
    return %c0_i32, %arg0 : i32, i32
  }
}

</mosaic_0001>

<llo_original>
// kernel: tpu_custom_call.1
$region0: #{tpu_custom_call.1}
  #allocation0 [shape = 'u32[]', space=smem, size = 0x4, offset = 0x4, fixed_abs, tag = 'smem constant byte address 0x4 - core index']
  #allocation1 [shape = 'u32[144,128]{1,0:T(1,128)}', space=vmem, size = 0x12000, scoped, tag = 'internal scratch']
  %s0 = inlined_call_operand.hbm [shape: f32[8,128], index: 0, kind: input, shape index: {}]
  %s1 = inlined_call_operand.hbm [shape: f32[2,8,128], index: 1, kind: input, shape index: {}]
  %s2 = inlined_call_operand.hbm [shape: f32[2,8,128], index: 2, kind: output, shape index: {}]
  %s3 = sld [smem:[#allocation0]]
  $region49: #{tpu_custom_call.1} parent=0
    _
  %s5 = ssub.s32 1, %s3
  %s6 = scalar_select 0, %s5, %s3
  $region1: #{tpu_custom_call.1} parent=0
    #allocation2 [shape = 'u8[4096]{0}', space=vmem, size = 0x1000, scoped, tag = 'input window, operand 0, single buffered']
    #allocation3 [shape = 's32[2]{0}', space=sflag, size = 0x8, scoped, tag = 'scoped memory for tpu_custom_call.1']
    #allocation4 [shape = 's32[2]{0}', space=sflag, size = 0x8, scoped, tag = 'scoped memory for tpu_custom_call.1']
    #allocation5 [shape = 'u8[8192]{0}', space=vmem, size = 0x2000, scoped, tag = 'input window, operand 1']
    #allocation6 [shape = 's32[2]{0}', space=sflag, size = 0x8, scoped, tag = 'scoped memory for tpu_custom_call.1']
    #allocation7 [shape = 'u8[8192]{0}', space=vmem, size = 0x2000, scoped, tag = 'output window, operand 0']
    %7 = vsyncpa [#allocation3], 0
    %8 = vsyncpa [#allocation6], 0
    %s9 = scalar_lea.sflag [#allocation6], 1
    %10 = vsyncpa %s9, 0
    %11 = vsyncpa [#allocation4], 0
    %s12 = scalar_lea.sflag [#allocation4], 1
    %13 = vsyncpa %s12, 0
    loop: start=0, step=1, limit=4
    $region2: #{tpu_custom_call.1} parent=1 // loop_pre_header
      _
    $region3: #{tpu_custom_call.1} parent=1 // loop_header
      %s15 = sphi 0, %s19
      %p16 = scmp.ge.s32.totalorder %s15, 4
      %s23 = sphi 0, %s23
      %s25 = sphi 0, %s23
      %s26 = sphi 0, %s25
      %s40 = sphi 0, %s26
      %s46 = sphi 0, %s48
      %s49 = sphi 0, %s46
      %s50 = sphi 0, %s49
      %s66 = sphi 0, %s50
      %s72 = sphi 0, %s74
      %s75 = sphi 0, %s72
      %s76 = sphi 0, %s75
      %s92 = sphi 0, %s76
    $region4: #{tpu_custom_call.1} parent=1 // loop_header_branch
      %18 = sbr.rel (%p16) target = $region8
    $region5: #{tpu_custom_call.1} parent=1 // loop_body
      %s20 = ssub.s32 %s15, 1
      %s21 = ssub.s32 %s15, 2
      %s22 = sadd.s32 %s15, 1
      %s24 = sadd.s32 %s23, 1
      %p27 = scmp.eq.s32.totalorder %s15, 1
      %p28 = scmp.ne.s32.totalorder %s23, %s25
      %p29 = scmp.eq.s32.totalorder %s15, 0
      %p30 = por %p28, %p29
      %p31 = scmp.ne.s32.totalorder %s23, %s25
      %p32 = scmp.eq.s32.totalorder %s20, 1
      %p33 = por %p31, %p32
      %p34 = scmp.ne.s32.totalorder %s25, %s26
      %p35 = scmp.eq.s32.totalorder %s20, 0
      %p36 = por %p34, %p35
      %p37 = scmp.ne.s32.totalorder %s25, %s26
      %p38 = scmp.eq.s32.totalorder %s21, 1
      %p39 = por %p37, %p38
      %p41 = scmp.ne.s32.totalorder %s26, %s40
      %p42 = scmp.eq.s32.totalorder %s21, 0
      %p43 = por %p41, %p42
      %s44 = ssub.s32 %s15, %s22
      %p45 = scmp.eq.s32.totalorder %s44, 0
      %s47 = sadd.s32 %s46, 1
      %s48 = scalar_select %p45, %s46, %s47
      %p51 = pneg %p45
      %p52 = scmp.eq.s32.totalorder %s15, 1
      %p53 = por %p51, %p52
      %p54 = scmp.ne.s32.totalorder %s46, %s49
      %p55 = scmp.eq.s32.totalorder %s15, 0
      %p56 = por %p54, %p55
      %p57 = scmp.ne.s32.totalorder %s46, %s49
      %p58 = scmp.eq.s32.totalorder %s20, 1
      %p59 = por %p57, %p58
      %p60 = scmp.ne.s32.totalorder %s49, %s50
      %p61 = scmp.eq.s32.totalorder %s20, 0
      %p62 = por %p60, %p61
      %p63 = scmp.ne.s32.totalorder %s49, %s50
      %p64 = scmp.eq.s32.totalorder %s21, 1
      %p65 = por %p63, %p64
      %p67 = scmp.ne.s32.totalorder %s50, %s66
      %p68 = scmp.eq.s32.totalorder %s21, 0
      %p69 = por %p67, %p68
      %s70 = ssub.s32 %s15, %s22
      %p71 = scmp.eq.s32.totalorder %s70, 0
      %s73 = sadd.s32 %s72, 1
      %s74 = scalar_select %p71, %s72, %s73
      %p77 = pneg %p71
      %p78 = scmp.eq.s32.totalorder %s15, 1
      %p79 = por %p77, %p78
      %p80 = scmp.ne.s32.totalorder %s72, %s75
      %p81 = scmp.eq.s32.totalorder %s15, 0
      %p82 = por %p80, %p81
      %p83 = scmp.ne.s32.totalorder %s72, %s75
      %p84 = scmp.eq.s32.totalorder %s20, 1
      %p85 = por %p83, %p84
      %p86 = scmp.ne.s32.totalorder %s75, %s76
      %p87 = scmp.eq.s32.totalorder %s20, 0
      %p88 = por %p86, %p87
      %p89 = scmp.ne.s32.totalorder %s75, %s76
      %p90 = scmp.eq.s32.totalorder %s21, 1
      %p91 = por %p89, %p90
      %p93 = scmp.ne.s32.totalorder %s76, %s92
      %p94 = scmp.eq.s32.totalorder %s21, 0
      %p95 = por %p93, %p94
      %p96 = scmp.le.s32.totalorder 1, %s15
      %p97 = scmp.lt.s32.totalorder %s15, 3
      %p98 = pnand %p96, %p97
      %p99 = pneg %p98
      // Predicated region
      $region9: #{tpu_custom_call.1} parent=5 // pred_check
        _
      $region10: #{tpu_custom_call.1} parent=5 // pred_check_branch
        %101 = sbr.rel (%p98) target = $region12
      $region11: #{tpu_custom_call.1} parent=5 // pred_region
        %s102 = ssub.s32 %s15, 1
        // Predicated region
        $region13: #{tpu_custom_call.1} parent=11 // pred_check
          %p103 = pneg %p36
        $region14: #{tpu_custom_call.1} parent=11 // pred_check_branch
          %105 = sbr.rel (%p103) target = $region16
        $region15: #{tpu_custom_call.1} parent=11 // pred_region
          %s107 = ssub.s32 128, 128
          %108 = vsyncadd [#allocation3], %s107
          %s110 = sshll.u32 [#allocation2], 4
          %s111 = int_to_ptr.vmem [resolvable:$true] %s110
          %113 = dma.hbm_to_vmem [thread:$0]  %s0, 128, %s111, [#allocation3]
        $region16: #{tpu_custom_call.1} parent=11 // pred_fallthru
          _
      $region12: #{tpu_custom_call.1} parent=5 // pred_fallthru
        _
      %p114 = scmp.lt.s32.totalorder %s15, 2
      // Predicated region
      $region17: #{tpu_custom_call.1} parent=5 // pred_check
        %p115 = pneg %p114
      $region18: #{tpu_custom_call.1} parent=5 // pred_check_branch
        %117 = sbr.rel (%p115) target = $region20
      $region19: #{tpu_custom_call.1} parent=5 // pred_region
        // Predicated region
        $region21: #{tpu_custom_call.1} parent=19 // pred_check
          %p118 = pneg %p56
        $region22: #{tpu_custom_call.1} parent=19 // pred_check_branch
          %120 = sbr.rel (%p118) target = $region24
        $region23: #{tpu_custom_call.1} parent=19 // pred_region
          %s121 = sand.u32 %s46, 1
          %s122 = scalar_lea.sflag [#allocation6], %s121
          %s123 = sand.u32 %s46, 1
          %s124 = smul.addr %s123, 8
          %s125 = scalar_lea.vmem [#allocation5], %s124
          %s127 = ssub.s32 128, 128
          %128 = vsyncadd %s122, %s127
          %s129 = smul.addr %s15, 128
          %s130 = scalar_lea.hbm %s1, %s129
          %s132 = sshll.u32 %s125, 4
          %s133 = int_to_ptr.vmem [resolvable:$true] %s132
          %135 = dma.hbm_to_vmem [thread:$0]  %s130, 128, %s133, %s122
        $region24: #{tpu_custom_call.1} parent=19 // pred_fallthru
          _
      $region20: #{tpu_custom_call.1} parent=5 // pred_fallthru
        _
      %p136 = scmp.le.s32.totalorder 1, %s15
      %p137 = scmp.lt.s32.totalorder %s15, 3
      %p138 = pnand %p136, %p137
      %p139 = pneg %p138
      // Predicated region
      $region25: #{tpu_custom_call.1} parent=5 // pred_check
        _
      $region26: #{tpu_custom_call.1} parent=5 // pred_check_branch
        %141 = sbr.rel (%p138) target = $region28
      $region27: #{tpu_custom_call.1} parent=5 // pred_region
        %s142 = ssub.s32 %s15, 1
        // Predicated region
        $region29: #{tpu_custom_call.1} parent=27 // pred_check
          %p143 = pneg %p36
        $region30: #{tpu_custom_call.1} parent=27 // pred_check_branch
          %145 = sbr.rel (%p143) target = $region32
        $region31: #{tpu_custom_call.1} parent=27 // pred_region
          %146 = dma.done [#allocation3], 128
        $region32: #{tpu_custom_call.1} parent=27 // pred_fallthru
          _
        %s147 = sand.u32 %s49, 1
        %s148 = scalar_lea.sflag [#allocation6], %s147
        %s149 = sand.u32 %s49, 1
        %s150 = smul.addr %s149, 8
        %s151 = scalar_lea.vmem [#allocation5], %s150
        // Predicated region
        $region33: #{tpu_custom_call.1} parent=27 // pred_check
          %p152 = pneg %p62
        $region34: #{tpu_custom_call.1} parent=27 // pred_check_branch
          %154 = sbr.rel (%p152) target = $region36
        $region35: #{tpu_custom_call.1} parent=27 // pred_region
          %155 = dma.done %s148, 128
        $region36: #{tpu_custom_call.1} parent=27 // pred_fallthru
          _
        %p156 = pneg %p36
        %p157 = pneg %p33
        %s158 = sand.u32 %s49, 1
        %s159 = scalar_lea.sflag [#allocation6], %s158
        %s160 = sand.u32 %s49, 1
        %s161 = smul.addr %s160, 8
        %s162 = scalar_lea.vmem [#allocation5], %s161
        %p163 = pneg %p62
        %p164 = pneg %p59
        %p165 = pneg %p88
        %p166 = pneg %p85
        %s167 = sand.u32 %s75, 1
        %s168 = scalar_lea.sflag [#allocation4], %s167
        %s169 = sand.u32 %s75, 1
        %s170 = smul.addr %s169, 8
        %s171 = scalar_lea.vmem [#allocation7], %s170
        %v172 = vld [vmem:[%s151] sm:$0xff]
        %v173 = vld [vmem:[#allocation2] sm:$0xff]
        %v174 = vadd.f32 %v172, %v173
        %175 = vst [vmem:[%s171] sm:$0xff] %v174
        %s176 = sand.u32 %s75, 1
        %s177 = scalar_lea.sflag [#allocation4], %s176
        %s178 = sand.u32 %s75, 1
        %s179 = smul.addr %s178, 8
        %s180 = scalar_lea.vmem [#allocation7], %s179
        // Predicated region
        $region37: #{tpu_custom_call.1} parent=27 // pred_check
          %p181 = pneg %p85
        $region38: #{tpu_custom_call.1} parent=27 // pred_check_branch
          %183 = sbr.rel (%p181) target = $region40
        $region39: #{tpu_custom_call.1} parent=27 // pred_region
          %s185 = ssub.s32 128, 128
          %186 = vsyncadd %s177, %s185
          %s187 = smul.addr %s20, 128
          %s188 = scalar_lea.hbm %s2, %s187
          %s190 = sshll.u32 %s180, 4
          %s191 = int_to_ptr.vmem [resolvable:$true] %s190
          %193 = dma.vmem_to_hbm [thread:$0]  %s191, 128, %s188, %s177
        $region40: #{tpu_custom_call.1} parent=27 // pred_fallthru
          _
      $region28: #{tpu_custom_call.1} parent=5 // pred_fallthru
        _
      %p194 = scmp.le.s32.totalorder 2, %s15
      // Predicated region
      $region41: #{tpu_custom_call.1} parent=5 // pred_check
        %p195 = pneg %p194
      $region42: #{tpu_custom_call.1} parent=5 // pred_check_branch
        %197 = sbr.rel (%p195) target = $region44
      $region43: #{tpu_custom_call.1} parent=5 // pred_region
        %s198 = ssub.s32 %s15, 2
        // Predicated region
        $region45: #{tpu_custom_call.1} parent=43 // pred_check
          %p199 = pneg %p91
        $region46: #{tpu_custom_call.1} parent=43 // pred_check_branch
          %201 = sbr.rel (%p199) target = $region48
        $region47: #{tpu_custom_call.1} parent=43 // pred_region
          %s202 = sand.u32 %s76, 1
          %s203 = scalar_lea.sflag [#allocation4], %s202
          %s204 = sand.u32 %s76, 1
          %s205 = smul.addr %s204, 8
          %s206 = scalar_lea.vmem [#allocation7], %s205
          %207 = dma.done %s203, 128
        $region48: #{tpu_custom_call.1} parent=43 // pred_fallthru
          _
      $region44: #{tpu_custom_call.1} parent=5 // pred_fallthru
        _
    $region6: #{tpu_custom_call.1} parent=1 // loop_footer
      %s19 = sadd.s32 1, %s15
    $region7: #{tpu_custom_call.1} parent=1 // loop_footer_branch
      %14 = sbr.rel target = $region3
    $region8: #{tpu_custom_call.1} parent=1 // loop_exit
      _
    %208 = vsyncpa [#allocation3], 1
    %s209 = scalar_lea.sflag [#allocation3], 1
    %210 = vsyncpa %s209, 1
    %211 = vsyncpa [#allocation6], 1
    %s212 = scalar_lea.sflag [#allocation6], 1
    %213 = vsyncpa %s212, 1
    %214 = vsyncpa [#allocation4], 1
    %s215 = scalar_lea.sflag [#allocation4], 1
    %216 = vsyncpa %s215, 1

// kernel: transformer_forward.8
$region0: #{transformer_forward.8}
  #allocation0 [shape = 'u32[]', space=smem, size = 0x4, offset = 0x4, fixed_abs, tag = 'smem constant byte address 0x4 - core index']
  #allocation1 [shape = 'u32[144,128]{1,0:T(1,128)}', space=vmem, size = 0x12000, scoped, tag = 'internal scratch']
  #allocation2 [shape = 'f32[32,128]{1,0:T(8,128)}', space=vmem, size = 0x4000, scoped, tag = 'scratch operand']
  %s0 = inlined_call_operand.vmem [shape: bf16[32,128], index: 0, kind: input, shape index: {}]
  %s1 = inlined_call_operand.vmem [shape: bf16[32,128], index: 1, kind: input, shape index: {}]
  %s2 = inlined_call_operand.vmem [shape: bf16[128,256], index: 2, kind: input, shape index: {}]
  %s3 = inlined_call_operand.vmem [shape: bf16[128,256], index: 3, kind: input, shape index: {}]
  %s4 = inlined_call_operand.vmem [shape: bf16[256,128], index: 4, kind: input, shape index: {}]
  %s5 = inlined_call_operand.vmem [shape: f32[1,128], index: 5, kind: input, shape index: {}]
  %s6 = inlined_call_operand.vmem [shape: bf16[32,128], index: 6, kind: output, shape index: {}]
  %s7 = sld [smem:[#allocation0]]
  $region42: #{transformer_forward.8} parent=0
    _
  %s9 = ssub.s32 1, %s7
  %s10 = scalar_select 0, %s9, %s7
  // Predicated region
  $region2: #{transformer_forward.8} parent=0 // pred_check
    _
  $region3: #{transformer_forward.8} parent=0 // pred_check_branch
    %12 = sbr.rel (0) target = $region5
  $region4: #{transformer_forward.8} parent=0 // pred_region
    _
  $region5: #{transformer_forward.8} parent=0 // pred_fallthru
    _
  // Predicated region
  $region6: #{transformer_forward.8} parent=0 // pred_check
    _
  $region7: #{transformer_forward.8} parent=0 // pred_check_branch
    %14 = sbr.rel (0) target = $region9
  $region8: #{transformer_forward.8} parent=0 // pred_region
    _
  $region9: #{transformer_forward.8} parent=0 // pred_fallthru
    _
  // Predicated region
  $region10: #{transformer_forward.8} parent=0 // pred_check
    _
  $region11: #{transformer_forward.8} parent=0 // pred_check_branch
    %16 = sbr.rel (0) target = $region13
  $region12: #{transformer_forward.8} parent=0 // pred_region
    _
  $region13: #{transformer_forward.8} parent=0 // pred_fallthru
    _
  // Predicated region
  $region14: #{transformer_forward.8} parent=0 // pred_check
    _
  $region15: #{transformer_forward.8} parent=0 // pred_check_branch
    %18 = sbr.rel (0) target = $region17
  $region16: #{transformer_forward.8} parent=0 // pred_region
    _
  $region17: #{transformer_forward.8} parent=0 // pred_fallthru
    _
  // Predicated region
  $region18: #{transformer_forward.8} parent=0 // pred_check
    _
  $region19: #{transformer_forward.8} parent=0 // pred_check_branch
    %20 = sbr.rel (0) target = $region21
  $region20: #{transformer_forward.8} parent=0 // pred_region
    _
  $region21: #{transformer_forward.8} parent=0 // pred_fallthru
    _
  // Predicated region
  $region22: #{transformer_forward.8} parent=0 // pred_check
    _
  $region23: #{transformer_forward.8} parent=0 // pred_check_branch
    %22 = sbr.rel (0) target = $region25
  $region24: #{transformer_forward.8} parent=0 // pred_region
    _
  $region25: #{transformer_forward.8} parent=0 // pred_fallthru
    _
  %p24 = scmp.eq.s32.totalorder 0, 0
  // Predicated region
  $region26: #{transformer_forward.8} parent=0 // pred_check
    %p25 = pneg %p24
  $region27: #{transformer_forward.8} parent=0 // pred_check_branch
    %27 = sbr.rel (%p25) target = $region29
  $region28: #{transformer_forward.8} parent=0 // pred_region
    %28 = vst [vmem:[#allocation2] sm:$0xff] 0.0
    %29 = vst [vmem:[#allocation2 + $0x8] sm:$0xff] 0.0
    %30 = vst [vmem:[#allocation2 + $0x10] sm:$0xff] 0.0
    %31 = vst [vmem:[#allocation2 + $0x18] sm:$0xff] 0.0
  $region29: #{transformer_forward.8} parent=0 // pred_fallthru
    _
  %v32 = vld [vmem:[%s0] sm:$0xf]
  %v33 = vld [vmem:[%s0 + $0x4] sm:$0xf]
  %v34 = vld [vmem:[%s0 + $0x8] sm:$0xf]
  %v35 = vld [vmem:[%s0 + $0xc] sm:$0xf]
  %v36 = vld [vmem:[%s2] sm:$0xff]
  %v37 = vld [vmem:[%s2 + $0x8] sm:$0xff]
  %v38 = vld [vmem:[%s2 + $0x10] sm:$0xff]
  %v39 = vld [vmem:[%s2 + $0x18] sm:$0xff]
  %v40 = vld [vmem:[%s2 + $0x20] sm:$0xff]
  %v41 = vld [vmem:[%s2 + $0x28] sm:$0xff]
  %v42 = vld [vmem:[%s2 + $0x30] sm:$0xff]
  %v43 = vld [vmem:[%s2 + $0x38] sm:$0xff]
  %v44 = vld [vmem:[%s2 + $0x40] sm:$0xff]
  %v45 = vld [vmem:[%s2 + $0x48] sm:$0xff]
  %v46 = vld [vmem:[%s2 + $0x50] sm:$0xff]
  %v47 = vld [vmem:[%s2 + $0x58] sm:$0xff]
  %v48 = vld [vmem:[%s2 + $0x60] sm:$0xff]
  %v49 = vld [vmem:[%s2 + $0x68] sm:$0xff]
  %v50 = vld [vmem:[%s2 + $0x70] sm:$0xff]
  %v51 = vld [vmem:[%s2 + $0x78] sm:$0xff]
  %v56 = vunpack.c.l.b16 %v32
  %v57 = vunpack.c.l.b16 %v33
  %v58 = vunpack.c.l.b16 %v34
  %v59 = vunpack.c.l.b16 %v35
  %v60 = vpack.c.b16 %v57, %v56
  %v61 = vpack.c.b16 %v59, %v58
  %v80 = vunpack.c.l.b16 %v36
  %v81 = vunpack.c.h.b16 %v36
  %v82 = vunpack.c.l.b16 %v37
  %v83 = vunpack.c.h.b16 %v37
  %v84 = vunpack.c.l.b16 %v38
  %v85 = vunpack.c.h.b16 %v38
  %v86 = vunpack.c.l.b16 %v39
  %v87 = vunpack.c.h.b16 %v39
  %v88 = vunpack.c.l.b16 %v40
  %v89 = vunpack.c.h.b16 %v40
  %v90 = vunpack.c.l.b16 %v41
  %v91 = vunpack.c.h.b16 %v41
  %v92 = vunpack.c.l.b16 %v42
  %v93 = vunpack.c.h.b16 %v42
  %v94 = vunpack.c.l.b16 %v43
  %v95 = vunpack.c.h.b16 %v43
  %v96 = vunpack.c.l.b16 %v44
  %v97 = vunpack.c.h.b16 %v44
  %v98 = vunpack.c.l.b16 %v45
  %v99 = vunpack.c.h.b16 %v45
  %v100 = vunpack.c.l.b16 %v46
  %v101 = vunpack.c.h.b16 %v46
  %v102 = vunpack.c.l.b16 %v47
  %v103 = vunpack.c.h.b16 %v47
  %v104 = vunpack.c.l.b16 %v48
  %v105 = vunpack.c.h.b16 %v48
  %v106 = vunpack.c.l.b16 %v49
  %v107 = vunpack.c.h.b16 %v49
  %v108 = vunpack.c.l.b16 %v50
  %v109 = vunpack.c.h.b16 %v50
  %v110 = vunpack.c.l.b16 %v51
  %v111 = vunpack.c.h.b16 %v51
  %v112 = vpack.c.b16 %v82, %v80
  %v113 = vpack.c.b16 %v83, %v81
  %v114 = vpack.c.b16 %v86, %v84
  %v115 = vpack.c.b16 %v87, %v85
  %v116 = vpack.c.b16 %v90, %v88
  %v117 = vpack.c.b16 %v91, %v89
  %v118 = vpack.c.b16 %v94, %v92
  %v119 = vpack.c.b16 %v95, %v93
  %v120 = vpack.c.b16 %v98, %v96
  %v121 = vpack.c.b16 %v99, %v97
  %v122 = vpack.c.b16 %v102, %v100
  %v123 = vpack.c.b16 %v103, %v101
  %v124 = vpack.c.b16 %v106, %v104
  %v125 = vpack.c.b16 %v107, %v105
  %v126 = vpack.c.b16 %v110, %v108
  %v127 = vpack.c.b16 %v111, %v109
  %144 = vmatprep.subr.bf16.mxu0 %v113
  %145 = vmatpush1.bf16.msra.mxu0 %v112
  %146 = vmatprep.subr.bf16.mxu0 %v115
  %147 = vmatpush1.bf16.msra.mxu0 %v114
  %148 = vmatprep.subr.bf16.mxu0 %v117
  %149 = vmatpush1.bf16.msra.mxu0 %v116
  %150 = vmatprep.subr.bf16.mxu0 %v119
  %151 = vmatpush1.bf16.msra.mxu0 %v118
  %152 = vmatprep.subr.bf16.mxu0 %v121
  %153 = vmatpush1.bf16.msra.mxu0 %v120
  %154 = vmatprep.subr.bf16.mxu0 %v123
  %155 = vmatpush1.bf16.msra.mxu0 %v122
  %156 = vmatprep.subr.bf16.mxu0 %v125
  %157 = vmatpush1.bf16.msra.mxu0 %v124
  %158 = vmatprep.subr.bf16.mxu0 %v127
  %159 = vmatpush1.bf16.msra.mxu0 %v126
  %160 = vmatprep.subr.bf16.mxu0 0
  %161 = vmatpush1.bf16.msra.mxu0 0
  %162 = vmatprep.subr.bf16.mxu0 0
  %163 = vmatpush1.bf16.msra.mxu0 0
  %164 = vmatprep.subr.bf16.mxu0 0
  %165 = vmatpush1.bf16.msra.mxu0 0
  %166 = vmatprep.subr.bf16.mxu0 0
  %167 = vmatpush1.bf16.msra.mxu0 0
  %168 = vmatprep.subr.bf16.mxu0 0
  %169 = vmatpush1.bf16.msra.mxu0 0
  %170 = vmatprep.subr.bf16.mxu0 0
  %171 = vmatpush1.bf16.msra.mxu0 0
  %172 = vmatprep.subr.bf16.mxu0 0
  %173 = vmatpush1.bf16.msra.mxu0 0
  %174 = vmatprep.subr.bf16.mxu0 0
  %175 = vmatpush1.bf16.msra.mxu0 0
  %176 = vmatprep.mubr.bf16.mxu0 0
  %177 = vmatmul.mubr.bf16.gmra.mrb[0].mxu0 %v60
  %v178 = vpop.f32.mrb[0].mxu0
  %v179 = vadd.f32 0.0, %v178
  %v180 = vpop.f32.mrb[0].mxu0
  %v181 = vadd.f32 0.0, %v180
  %v182 = vpop.f32.mrb[0].mxu0
  %v183 = vadd.f32 0.0, %v182
  %v184 = vpop.f32.mrb[0].mxu0
  %v185 = vadd.f32 0.0, %v184
  %186 = vmatprep.mubr.bf16.mxu0 0
  %187 = vmatmul.mubr.bf16.gmra.mrb[0].mxu0 %v61
  %v188 = vpop.f32.mrb[0].mxu0
  %v189 = vadd.f32 0.0, %v188
  %v190 = vpop.f32.mrb[0].mxu0
  %v191 = vadd.f32 0.0, %v190
  %v192 = vpop.f32.mrb[0].mxu0
  %v193 = vadd.f32 0.0, %v192
  %v194 = vpop.f32.mrb[0].mxu0
  %v195 = vadd.f32 0.0, %v194
  %196 = vdwg.mxu0
  %v197 = vld [vmem:[%s3] sm:$0xff]
  %v198 = vld [vmem:[%s3 + $0x8] sm:$0xff]
  %v199 = vld [vmem:[%s3 + $0x10] sm:$0xff]
  %v200 = vld [vmem:[%s3 + $0x18] sm:$0xff]
  %v201 = vld [vmem:[%s3 + $0x20] sm:$0xff]
  %v202 = vld [vmem:[%s3 + $0x28] sm:$0xff]
  %v203 = vld [vmem:[%s3 + $0x30] sm:$0xff]
  %v204 = vld [vmem:[%s3 + $0x38] sm:$0xff]
  %v205 = vld [vmem:[%s3 + $0x40] sm:$0xff]
  %v206 = vld [vmem:[%s3 + $0x48] sm:$0xff]
  %v207 = vld [vmem:[%s3 + $0x50] sm:$0xff]
  %v208 = vld [vmem:[%s3 + $0x58] sm:$0xff]
  %v209 = vld [vmem:[%s3 + $0x60] sm:$0xff]
  %v210 = vld [vmem:[%s3 + $0x68] sm:$0xff]
  %v211 = vld [vmem:[%s3 + $0x70] sm:$0xff]
  %v212 = vld [vmem:[%s3 + $0x78] sm:$0xff]
  %v229 = vunpack.c.l.b16 %v197
  %v230 = vunpack.c.h.b16 %v197
  %v231 = vunpack.c.l.b16 %v198
  %v232 = vunpack.c.h.b16 %v198
  %v233 = vunpack.c.l.b16 %v199
  %v234 = vunpack.c.h.b16 %v199
  %v235 = vunpack.c.l.b16 %v200
  %v236 = vunpack.c.h.b16 %v200
  %v237 = vunpack.c.l.b16 %v201
  %v238 = vunpack.c.h.b16 %v201
  %v239 = vunpack.c.l.b16 %v202
  %v240 = vunpack.c.h.b16 %v202
  %v241 = vunpack.c.l.b16 %v203
  %v242 = vunpack.c.h.b16 %v203
  %v243 = vunpack.c.l.b16 %v204
  %v244 = vunpack.c.h.b16 %v204
  %v245 = vunpack.c.l.b16 %v205
  %v246 = vunpack.c.h.b16 %v205
  %v247 = vunpack.c.l.b16 %v206
  %v248 = vunpack.c.h.b16 %v206
  %v249 = vunpack.c.l.b16 %v207
  %v250 = vunpack.c.h.b16 %v207
  %v251 = vunpack.c.l.b16 %v208
  %v252 = vunpack.c.h.b16 %v208
  %v253 = vunpack.c.l.b16 %v209
  %v254 = vunpack.c.h.b16 %v209
  %v255 = vunpack.c.l.b16 %v210
  %v256 = vunpack.c.h.b16 %v210
  %v257 = vunpack.c.l.b16 %v211
  %v258 = vunpack.c.h.b16 %v211
  %v259 = vunpack.c.l.b16 %v212
  %v260 = vunpack.c.h.b16 %v212
  %v261 = vpack.c.b16 %v231, %v229
  %v262 = vpack.c.b16 %v232, %v230
  %v263 = vpack.c.b16 %v235, %v233
  %v264 = vpack.c.b16 %v236, %v234
  %v265 = vpack.c.b16 %v239, %v237
  %v266 = vpack.c.b16 %v240, %v238
  %v267 = vpack.c.b16 %v243, %v241
  %v268 = vpack.c.b16 %v244, %v242
  %v269 = vpack.c.b16 %v247, %v245
  %v270 = vpack.c.b16 %v248, %v246
  %v271 = vpack.c.b16 %v251, %v249
  %v272 = vpack.c.b16 %v252, %v250
  %v273 = vpack.c.b16 %v255, %v253
  %v274 = vpack.c.b16 %v256, %v254
  %v275 = vpack.c.b16 %v259, %v257
  %v276 = vpack.c.b16 %v260, %v258
  %293 = vmatprep.subr.bf16.mxu0 %v262
  %294 = vmatpush1.bf16.msra.mxu0 %v261
  %295 = vmatprep.subr.bf16.mxu0 %v264
  %296 = vmatpush1.bf16.msra.mxu0 %v263
  %297 = vmatprep.subr.bf16.mxu0 %v266
  %298 = vmatpush1.bf16.msra.mxu0 %v265
  %299 = vmatprep.subr.bf16.mxu0 %v268
  %300 = vmatpush1.bf16.msra.mxu0 %v267
  %301 = vmatprep.subr.bf16.mxu0 %v270
  %302 = vmatpush1.bf16.msra.mxu0 %v269
  %303 = vmatprep.subr.bf16.mxu0 %v272
  %304 = vmatpush1.bf16.msra.mxu0 %v271
  %305 = vmatprep.subr.bf16.mxu0 %v274
  %306 = vmatpush1.bf16.msra.mxu0 %v273
  %307 = vmatprep.subr.bf16.mxu0 %v276
  %308 = vmatpush1.bf16.msra.mxu0 %v275
  %309 = vmatprep.subr.bf16.mxu0 0
  %310 = vmatpush1.bf16.msra.mxu0 0
  %311 = vmatprep.subr.bf16.mxu0 0
  %312 = vmatpush1.bf16.msra.mxu0 0
  %313 = vmatprep.subr.bf16.mxu0 0
  %314 = vmatpush1.bf16.msra.mxu0 0
  %315 = vmatprep.subr.bf16.mxu0 0
  %316 = vmatpush1.bf16.msra.mxu0 0
  %317 = vmatprep.subr.bf16.mxu0 0
  %318 = vmatpush1.bf16.msra.mxu0 0
  %319 = vmatprep.subr.bf16.mxu0 0
  %320 = vmatpush1.bf16.msra.mxu0 0
  %321 = vmatprep.subr.bf16.mxu0 0
  %322 = vmatpush1.bf16.msra.mxu0 0
  %323 = vmatprep.subr.bf16.mxu0 0
  %324 = vmatpush1.bf16.msra.mxu0 0
  %325 = vmatprep.mubr.bf16.mxu0 0
  %326 = vmatmul.mubr.bf16.gmra.mrb[0].mxu0 %v60
  %v327 = vpop.f32.mrb[0].mxu0
  %v328 = vadd.f32 0.0, %v327
  %v329 = vpop.f32.mrb[0].mxu0
  %v330 = vadd.f32 0.0, %v329
  %v331 = vpop.f32.mrb[0].mxu0
  %v332 = vadd.f32 0.0, %v331
  %v333 = vpop.f32.mrb[0].mxu0
  %v334 = vadd.f32 0.0, %v333
  %335 = vmatprep.mubr.bf16.mxu0 0
  %336 = vmatmul.mubr.bf16.gmra.mrb[0].mxu0 %v61
  %v337 = vpop.f32.mrb[0].mxu0
  %v338 = vadd.f32 0.0, %v337
  %v339 = vpop.f32.mrb[0].mxu0
  %v340 = vadd.f32 0.0, %v339
  %v341 = vpop.f32.mrb[0].mxu0
  %v342 = vadd.f32 0.0, %v341
  %v343 = vpop.f32.mrb[0].mxu0
  %v344 = vadd.f32 0.0, %v343
  %345 = vdwg.mxu0
  %v346 = vxor.u32 %v179, 2147483648
  %v347 = vxor.u32 %v181, 2147483648
  %v348 = vxor.u32 %v183, 2147483648
  %v349 = vxor.u32 %v185, 2147483648
  %v350 = vxor.u32 %v189, 2147483648
  %v351 = vxor.u32 %v191, 2147483648
  %v352 = vxor.u32 %v193, 2147483648
  %v353 = vxor.u32 %v195, 2147483648
  %v354 = vmul.f32 %v346, 1.442695
  %v355 = vpow.pop %v354
  %v356 = vmul.f32 %v347, 1.442695
  %v357 = vpow.pop %v356
  %v358 = vmul.f32 %v348, 1.442695
  %v359 = vpow.pop %v358
  %v360 = vmul.f32 %v349, 1.442695
  %v361 = vpow.pop %v360
  %v362 = vmul.f32 %v350, 1.442695
  %v363 = vpow.pop %v362
  %v364 = vmul.f32 %v351, 1.442695
  %v365 = vpow.pop %v364
  %v366 = vmul.f32 %v352, 1.442695
  %v367 = vpow.pop %v366
  %v368 = vmul.f32 %v353, 1.442695
  %v369 = vpow.pop %v368
  %v370 = vadd.f32 %v355, 1.0
  %v371 = vadd.f32 %v357, 1.0
  %v372 = vadd.f32 %v359, 1.0
  %v373 = vadd.f32 %v361, 1.0
  %v374 = vadd.f32 %v363, 1.0
  %v375 = vadd.f32 %v365, 1.0
  %v376 = vadd.f32 %v367, 1.0
  %v377 = vadd.f32 %v369, 1.0
  %v378 = vrcp.pop %v370
  %v379 = vmul.f32 1.0, %v378
  %v380 = vrcp.pop %v371
  %v381 = vmul.f32 1.0, %v380
  %v382 = vrcp.pop %v372
  %v383 = vmul.f32 1.0, %v382
  %v384 = vrcp.pop %v373
  %v385 = vmul.f32 1.0, %v384
  %v386 = vrcp.pop %v374
  %v387 = vmul.f32 1.0, %v386
  %v388 = vrcp.pop %v375
  %v389 = vmul.f32 1.0, %v388
  %v390 = vrcp.pop %v376
  %v391 = vmul.f32 1.0, %v390
  %v392 = vrcp.pop %v377
  %v393 = vmul.f32 1.0, %v392
  %v394 = vmul.f32 %v179, %v379
  %v395 = vmul.f32 %v181, %v381
  %v396 = vmul.f32 %v183, %v383
  %v397 = vmul.f32 %v185, %v385
  %v398 = vmul.f32 %v189, %v387
  %v399 = vmul.f32 %v191, %v389
  %v400 = vmul.f32 %v193, %v391
  %v401 = vmul.f32 %v195, %v393
  %v402 = vmul.f32 %v394, %v328
  %v403 = vmul.f32 %v395, %v330
  %v404 = vmul.f32 %v396, %v332
  %v405 = vmul.f32 %v397, %v334
  %v406 = vmul.f32 %v398, %v338
  %v407 = vmul.f32 %v399, %v340
  %v408 = vmul.f32 %v400, %v342
  %v409 = vmul.f32 %v401, %v344
  %v410 = vld [vmem:[#allocation2] sm:$0xff]
  %v411 = vld [vmem:[#allocation2 + $0x8] sm:$0xff]
  %v412 = vld [vmem:[#allocation2 + $0x10] sm:$0xff]
  %v413 = vld [vmem:[#allocation2 + $0x18] sm:$0xff]
  %v414 = vpack.c.bf16 %v404, %v402
  %v415 = vpack.c.bf16 %v405, %v403
  %v416 = vpack.c.bf16 %v408, %v406
  %v417 = vpack.c.bf16 %v409, %v407
  %v418 = vld [vmem:[%s4] sm:$0xf]
  %v419 = vld [vmem:[%s4 + $0x4] sm:$0xf]
  %v420 = vld [vmem:[%s4 + $0x8] sm:$0xf]
  %v421 = vld [vmem:[%s4 + $0xc] sm:$0xf]
  %v422 = vld [vmem:[%s4 + $0x10] sm:$0xf]
  %v423 = vld [vmem:[%s4 + $0x14] sm:$0xf]
  %v424 = vld [vmem:[%s4 + $0x18] sm:$0xf]
  %v425 = vld [vmem:[%s4 + $0x1c] sm:$0xf]
  %v426 = vld [vmem:[%s4 + $0x20] sm:$0xf]
  %v427 = vld [vmem:[%s4 + $0x24] sm:$0xf]
  %v428 = vld [vmem:[%s4 + $0x28] sm:$0xf]
  %v429 = vld [vmem:[%s4 + $0x2c] sm:$0xf]
  %v430 = vld [vmem:[%s4 + $0x30] sm:$0xf]
  %v431 = vld [vmem:[%s4 + $0x34] sm:$0xf]
  %v432 = vld [vmem:[%s4 + $0x38] sm:$0xf]
  %v433 = vld [vmem:[%s4 + $0x3c] sm:$0xf]
  %v434 = vld [vmem:[%s4 + $0x40] sm:$0xf]
  %v435 = vld [vmem:[%s4 + $0x44] sm:$0xf]
  %v436 = vld [vmem:[%s4 + $0x48] sm:$0xf]
  %v437 = vld [vmem:[%s4 + $0x4c] sm:$0xf]
  %v438 = vld [vmem:[%s4 + $0x50] sm:$0xf]
  %v439 = vld [vmem:[%s4 + $0x54] sm:$0xf]
  %v440 = vld [vmem:[%s4 + $0x58] sm:$0xf]
  %v441 = vld [vmem:[%s4 + $0x5c] sm:$0xf]
  %v442 = vld [vmem:[%s4 + $0x60] sm:$0xf]
  %v443 = vld [vmem:[%s4 + $0x64] sm:$0xf]
  %v444 = vld [vmem:[%s4 + $0x68] sm:$0xf]
  %v445 = vld [vmem:[%s4 + $0x6c] sm:$0xf]
  %v446 = vld [vmem:[%s4 + $0x70] sm:$0xf]
  %v447 = vld [vmem:[%s4 + $0x74] sm:$0xf]
  %v448 = vld [vmem:[%s4 + $0x78] sm:$0xf]
  %v449 = vld [vmem:[%s4 + $0x7c] sm:$0xf]
  %v482 = vunpack.c.l.b16 %v418
  %v483 = vunpack.c.l.b16 %v419
  %v484 = vunpack.c.l.b16 %v420
  %v485 = vunpack.c.l.b16 %v421
  %v486 = vunpack.c.l.b16 %v422
  %v487 = vunpack.c.l.b16 %v423
  %v488 = vunpack.c.l.b16 %v424
  %v489 = vunpack.c.l.b16 %v425
  %v490 = vunpack.c.l.b16 %v426
  %v491 = vunpack.c.l.b16 %v427
  %v492 = vunpack.c.l.b16 %v428
  %v493 = vunpack.c.l.b16 %v429
  %v494 = vunpack.c.l.b16 %v430
  %v495 = vunpack.c.l.b16 %v431
  %v496 = vunpack.c.l.b16 %v432
  %v497 = vunpack.c.l.b16 %v433
  %v498 = vunpack.c.l.b16 %v434
  %v499 = vunpack.c.l.b16 %v435
  %v500 = vunpack.c.l.b16 %v436
  %v501 = vunpack.c.l.b16 %v437
  %v502 = vunpack.c.l.b16 %v438
  %v503 = vunpack.c.l.b16 %v439
  %v504 = vunpack.c.l.b16 %v440
  %v505 = vunpack.c.l.b16 %v441
  %v506 = vunpack.c.l.b16 %v442
  %v507 = vunpack.c.l.b16 %v443
  %v508 = vunpack.c.l.b16 %v444
  %v509 = vunpack.c.l.b16 %v445
  %v510 = vunpack.c.l.b16 %v446
  %v511 = vunpack.c.l.b16 %v447
  %v512 = vunpack.c.l.b16 %v448
  %v513 = vunpack.c.l.b16 %v449
  %v514 = vpack.c.b16 %v483, %v482
  %v515 = vpack.c.b16 %v485, %v484
  %v516 = vpack.c.b16 %v487, %v486
  %v517 = vpack.c.b16 %v489, %v488
  %v518 = vpack.c.b16 %v491, %v490
  %v519 = vpack.c.b16 %v493, %v492
  %v520 = vpack.c.b16 %v495, %v494
  %v521 = vpack.c.b16 %v497, %v496
  %v522 = vpack.c.b16 %v499, %v498
  %v523 = vpack.c.b16 %v501, %v500
  %v524 = vpack.c.b16 %v503, %v502
  %v525 = vpack.c.b16 %v505, %v504
  %v526 = vpack.c.b16 %v507, %v506
  %v527 = vpack.c.b16 %v509, %v508
  %v528 = vpack.c.b16 %v511, %v510
  %v529 = vpack.c.b16 %v513, %v512
  %546 = vmatprep.subr.bf16.mxu0 0
  %547 = vmatpush1.bf16.msra.mxu0 %v514
  %548 = vmatprep.subr.bf16.mxu0 0
  %549 = vmatpush1.bf16.msra.mxu0 %v515
  %550 = vmatprep.subr.bf16.mxu0 0
  %551 = vmatpush1.bf16.msra.mxu0 %v516
  %552 = vmatprep.subr.bf16.mxu0 0
  %553 = vmatpush1.bf16.msra.mxu0 %v517
  %554 = vmatprep.subr.bf16.mxu0 0
  %555 = vmatpush1.bf16.msra.mxu0 %v518
  %556 = vmatprep.subr.bf16.mxu0 0
  %557 = vmatpush1.bf16.msra.mxu0 %v519
  %558 = vmatprep.subr.bf16.mxu0 0
  %559 = vmatpush1.bf16.msra.mxu0 %v520
  %560 = vmatprep.subr.bf16.mxu0 0
  %561 = vmatpush1.bf16.msra.mxu0 %v521
  %562 = vmatprep.subr.bf16.mxu0 0
  %563 = vmatpush1.bf16.msra.mxu0 %v522
  %564 = vmatprep.subr.bf16.mxu0 0
  %565 = vmatpush1.bf16.msra.mxu0 %v523
  %566 = vmatprep.subr.bf16.mxu0 0
  %567 = vmatpush1.bf16.msra.mxu0 %v524
  %568 = vmatprep.subr.bf16.mxu0 0
  %569 = vmatpush1.bf16.msra.mxu0 %v525
  %570 = vmatprep.subr.bf16.mxu0 0
  %571 = vmatpush1.bf16.msra.mxu0 %v526
  %572 = vmatprep.subr.bf16.mxu0 0
  %573 = vmatpush1.bf16.msra.mxu0 %v527
  %574 = vmatprep.subr.bf16.mxu0 0
  %575 = vmatpush1.bf16.msra.mxu0 %v528
  %576 = vmatprep.subr.bf16.mxu0 0
  %577 = vmatpush1.bf16.msra.mxu0 %v529
  %578 = vmatprep.mubr.bf16.mxu0 %v415
  %579 = vmatmul.mubr.bf16.gmra.mrb[0].mxu0 %v414
  %v580 = vpop.f32.mrb[0].mxu0
  %v581 = vadd.f32 0.0, %v580
  %v582 = vpop.f32.mrb[0].mxu0
  %v583 = vpop.f32.mrb[0].mxu0
  %v584 = vadd.f32 0.0, %v583
  %v585 = vpop.f32.mrb[0].mxu0
  %586 = vmatprep.mubr.bf16.mxu0 %v417
  %587 = vmatmul.mubr.bf16.gmra.mrb[0].mxu0 %v416
  %v588 = vpop.f32.mrb[0].mxu0
  %v589 = vadd.f32 0.0, %v588
  %v590 = vpop.f32.mrb[0].mxu0
  %v591 = vpop.f32.mrb[0].mxu0
  %v592 = vadd.f32 0.0, %v591
  %v593 = vpop.f32.mrb[0].mxu0
  %594 = vdwg.mxu0
  %v595 = vadd.f32 %v410, %v581
  %v596 = vadd.f32 %v411, %v584
  %v597 = vadd.f32 %v412, %v589
  %v598 = vadd.f32 %v413, %v592
  %599 = vst [vmem:[#allocation2] sm:$0xff] %v595
  %600 = vst [vmem:[#allocation2 + $0x8] sm:$0xff] %v596
  %601 = vst [vmem:[#allocation2 + $0x10] sm:$0xff] %v597
  %602 = vst [vmem:[#allocation2 + $0x18] sm:$0xff] %v598
  // Predicated region
  $region30: #{transformer_forward.8} parent=0 // pred_check
    %p603 = pneg %p24
  $region31: #{transformer_forward.8} parent=0 // pred_check_branch
    %605 = sbr.rel (%p603) target = $region33
  $region32: #{transformer_forward.8} parent=0 // pred_region
    %v606 = vld [vmem:[#allocation2] sm:$0xff]
    %v607 = vld [vmem:[#allocation2 + $0x8] sm:$0xff]
    %v608 = vld [vmem:[#allocation2 + $0x10] sm:$0xff]
    %v609 = vld [vmem:[#allocation2 + $0x18] sm:$0xff]
    %v610 = vmul.f32 %v606, %v606
    %v611 = vmul.f32 %v607, %v607
    %v612 = vmul.f32 %v608, %v608
    %v613 = vmul.f32 %v609, %v609
    %614 = vadd.xlane.f32.xlu0 %v610
    %v615 = vpop.xlane.xlu0 %614
    %616 = vadd.xlane.f32.xlu0 %v611
    %v617 = vpop.xlane.xlu0 %616
    %618 = vadd.xlane.f32.xlu0 %v612
    %v619 = vpop.xlane.xlu0 %618
    %620 = vadd.xlane.f32.xlu0 %v613
    %v621 = vpop.xlane.xlu0 %620
    %v622 = vrcp.pop 128.0
    %v623 = vmul.f32 %v615, %v622
    %v624 = vmul.f32 %v617, %v622
    %v625 = vmul.f32 %v619, %v622
    %v626 = vmul.f32 %v621, %v622
    %v627 = vld [vmem:[%s1] sm:$0xf]
    %v628 = vld [vmem:[%s1 + $0x4] sm:$0xf]
    %v629 = vld [vmem:[%s1 + $0x8] sm:$0xf]
    %v630 = vld [vmem:[%s1 + $0xc] sm:$0xf]
    %v631 = vunpack.c.l.bf16 %v627
    %v632 = vunpack.c.l.bf16 %v628
    %v633 = vunpack.c.l.bf16 %v629
    %v634 = vunpack.c.l.bf16 %v630
    %v635 = vadd.f32 %v623, 1e-05
    %v636 = vadd.f32 %v624, 1e-05
    %v637 = vadd.f32 %v625, 1e-05
    %v638 = vadd.f32 %v626, 1e-05
    %v639 = vrsqrt.pop %v635
    %v640 = vrsqrt.pop %v636
    %v641 = vrsqrt.pop %v637
    %v642 = vrsqrt.pop %v638
    %v643 = vmul.f32 %v606, %v639
    %v644 = vmul.f32 %v607, %v640
    %v645 = vmul.f32 %v608, %v641
    %v646 = vmul.f32 %v609, %v642
    %v647 = vld [vmem:[%s5] sm:$0x1]
    %v649 = vlaneseq
    %v650 = vshrl.u32 %v649, 7
    %v651 = vsub.s32 0, %v650
    %v652 = vrot.slane %v647, %v651
    %v654 = vmul.f32 %v643, %v652
    %v655 = vmul.f32 %v644, %v652
    %v656 = vmul.f32 %v645, %v652
    %v657 = vmul.f32 %v646, %v652
    %v658 = vadd.f32 %v631, %v654
    %v659 = vadd.f32 %v632, %v655
    %v660 = vadd.f32 %v633, %v656
    %v661 = vadd.f32 %v634, %v657
    %v662 = vpack.c.bf16 %v659, %v658
    %v663 = vpack.c.bf16 %v661, %v660
    %v666 = vunpack.c.l.b16 %v662
    %v667 = vunpack.c.h.b16 %v662
    %v668 = vunpack.c.l.b16 %v663
    %v669 = vunpack.c.h.b16 %v663
    %v670 = vpack.c.b16 %v666, %v666
    %v671 = vpack.c.b16 %v667, %v667
    %v672 = vpack.c.b16 %v668, %v668
    %v673 = vpack.c.b16 %v669, %v669
    %678 = vst [vmem:[%s6] sm:$0xf] %v670
    %679 = vst [vmem:[%s6 + $0x4] sm:$0xf] %v671
    %680 = vst [vmem:[%s6 + $0x8] sm:$0xf] %v672
    %681 = vst [vmem:[%s6 + $0xc] sm:$0xf] %v673
  $region33: #{transformer_forward.8} parent=0 // pred_fallthru
    _
  // Predicated region
  $region34: #{transformer_forward.8} parent=0 // pred_check
    _
  $region35: #{transformer_forward.8} parent=0 // pred_check_branch
    %683 = sbr.rel (0) target = $region37
  $region36: #{transformer_forward.8} parent=0 // pred_region
    _
  $region37: #{transformer_forward.8} parent=0 // pred_fallthru
    _
  // Predicated region
  $region38: #{transformer_forward.8} parent=0 // pred_check
    _
  $region39: #{transformer_forward.8} parent=0 // pred_check_branch
    %685 = sbr.rel (0) target = $region41
  $region40: #{transformer_forward.8} parent=0 // pred_region
    _
  $region41: #{transformer_forward.8} parent=0 // pred_fallthru
    _

// kernel: transformer_forward.6
$region0: #{transformer_forward.6}
  #allocation0 [shape = 'u32[]', space=smem, size = 0x4, offset = 0x4, fixed_abs, tag = 'smem constant byte address 0x4 - core index']
  #allocation1 [shape = 'u32[144,128]{1,0:T(1,128)}', space=vmem, size = 0x12000, scoped, tag = 'internal scratch']
  #allocation2 [shape = 'f32[32,128]{1,0:T(8,128)}', space=vmem, size = 0x4000, scoped, tag = 'scratch operand']
  %s0 = inlined_call_operand.vmem [shape: bf16[32,128], index: 0, kind: input, shape index: {}]
  %s1 = inlined_call_operand.vmem [shape: bf16[32,128], index: 1, kind: input, shape index: {}]
  %s2 = inlined_call_operand.vmem [shape: bf16[128,256], index: 2, kind: input, shape index: {}]
  %s3 = inlined_call_operand.vmem [shape: bf16[128,256], index: 3, kind: input, shape index: {}]
  %s4 = inlined_call_operand.hbm [shape: bf16[256,128], index: 4, kind: input, shape index: {}]
  %s5 = inlined_call_operand.vmem [shape: f32[1,128], index: 5, kind: input, shape index: {}]
  %s6 = inlined_call_operand.vmem [shape: bf16[32,128], index: 6, kind: output, shape index: {}]
  %s7 = sld [smem:[#allocation0]]
  $region46: #{transformer_forward.6} parent=0
    _
  %s9 = ssub.s32 1, %s7
  %s10 = scalar_select 0, %s9, %s7
  $region1: #{transformer_forward.6} parent=0
    #allocation3 [shape = 'u8[65536]{0}', space=vmem, size = 0x10000, scoped, tag = 'input window, operand 4, single buffered']
    #allocation4 [shape = 's32[1]{0}', space=sflag, size = 0x4, scoped, tag = 'scoped memory for transformer_forward.6']
    %11 = vsyncpa [#allocation4], 0
    // Predicated region
    $region2: #{transformer_forward.6} parent=1 // pred_check
      _
    $region3: #{transformer_forward.6} parent=1 // pred_check_branch
      %13 = sbr.rel (0) target = $region5
    $region4: #{transformer_forward.6} parent=1 // pred_region
      _
    $region5: #{transformer_forward.6} parent=1 // pred_fallthru
      _
    // Predicated region
    $region6: #{transformer_forward.6} parent=1 // pred_check
      _
    $region7: #{transformer_forward.6} parent=1 // pred_check_branch
      %15 = sbr.rel (0) target = $region9
    $region8: #{transformer_forward.6} parent=1 // pred_region
      _
    $region9: #{transformer_forward.6} parent=1 // pred_fallthru
      _
    // Predicated region
    $region10: #{transformer_forward.6} parent=1 // pred_check
      _
    $region11: #{transformer_forward.6} parent=1 // pred_check_branch
      %17 = sbr.rel (0) target = $region13
    $region12: #{transformer_forward.6} parent=1 // pred_region
      _
    $region13: #{transformer_forward.6} parent=1 // pred_fallthru
      _
    // Predicated region
    $region14: #{transformer_forward.6} parent=1 // pred_check
      _
    $region15: #{transformer_forward.6} parent=1 // pred_check_branch
      %19 = sbr.rel (0) target = $region17
    $region16: #{transformer_forward.6} parent=1 // pred_region
      _
    $region17: #{transformer_forward.6} parent=1 // pred_fallthru
      _
    // Predicated region
    $region18: #{transformer_forward.6} parent=1 // pred_check
      _
    $region19: #{transformer_forward.6} parent=1 // pred_check_branch
      %21 = sbr.rel (0) target = $region21
    $region20: #{transformer_forward.6} parent=1 // pred_region
      %s23 = ssub.s32 2048, 2048
      %24 = vsyncadd [#allocation4], %s23
      %s25 = sshll.u32 [#allocation3], 4
      %s26 = int_to_ptr.vmem [resolvable:$true] %s25
      %31 = dma.hbm_to_vmem [thread:$0]  %s4, 2048, %s26, [#allocation4], 64, 64, 4
    $region21: #{transformer_forward.6} parent=1 // pred_fallthru
      _
    // Predicated region
    $region22: #{transformer_forward.6} parent=1 // pred_check
      _
    $region23: #{transformer_forward.6} parent=1 // pred_check_branch
      %33 = sbr.rel (0) target = $region25
    $region24: #{transformer_forward.6} parent=1 // pred_region
      _
    $region25: #{transformer_forward.6} parent=1 // pred_fallthru
      _
    // Predicated region
    $region26: #{transformer_forward.6} parent=1 // pred_check
      _
    $region27: #{transformer_forward.6} parent=1 // pred_check_branch
      %35 = sbr.rel (0) target = $region29
    $region28: #{transformer_forward.6} parent=1 // pred_region
      %36 = dma.done [#allocation4], 2048
    $region29: #{transformer_forward.6} parent=1 // pred_fallthru
      _
    %p38 = scmp.eq.s32.totalorder 0, 0
    // Predicated region
    $region30: #{transformer_forward.6} parent=1 // pred_check
      %p39 = pneg %p38
    $region31: #{transformer_forward.6} parent=1 // pred_check_branch
      %41 = sbr.rel (%p39) target = $region33
    $region32: #{transformer_forward.6} parent=1 // pred_region
      %42 = vst [vmem:[#allocation2] sm:$0xff] 0.0
      %43 = vst [vmem:[#allocation2 + $0x8] sm:$0xff] 0.0
      %44 = vst [vmem:[#allocation2 + $0x10] sm:$0xff] 0.0
      %45 = vst [vmem:[#allocation2 + $0x18] sm:$0xff] 0.0
    $region33: #{transformer_forward.6} parent=1 // pred_fallthru
      _
    %v46 = vld [vmem:[%s0] sm:$0xf]
    %v47 = vld [vmem:[%s0 + $0x4] sm:$0xf]
    %v48 = vld [vmem:[%s0 + $0x8] sm:$0xf]
    %v49 = vld [vmem:[%s0 + $0xc] sm:$0xf]
    %v50 = vld [vmem:[%s2] sm:$0xff]
    %v51 = vld [vmem:[%s2 + $0x8] sm:$0xff]
    %v52 = vld [vmem:[%s2 + $0x10] sm:$0xff]
    %v53 = vld [vmem:[%s2 + $0x18] sm:$0xff]
    %v54 = vld [vmem:[%s2 + $0x20] sm:$0xff]
    %v55 = vld [vmem:[%s2 + $0x28] sm:$0xff]
    %v56 = vld [vmem:[%s2 + $0x30] sm:$0xff]
    %v57 = vld [vmem:[%s2 + $0x38] sm:$0xff]
    %v58 = vld [vmem:[%s2 + $0x40] sm:$0xff]
    %v59 = vld [vmem:[%s2 + $0x48] sm:$0xff]
    %v60 = vld [vmem:[%s2 + $0x50] sm:$0xff]
    %v61 = vld [vmem:[%s2 + $0x58] sm:$0xff]
    %v62 = vld [vmem:[%s2 + $0x60] sm:$0xff]
    %v63 = vld [vmem:[%s2 + $0x68] sm:$0xff]
    %v64 = vld [vmem:[%s2 + $0x70] sm:$0xff]
    %v65 = vld [vmem:[%s2 + $0x78] sm:$0xff]
    %v70 = vunpack.c.l.b16 %v46
    %v71 = vunpack.c.l.b16 %v47
    %v72 = vunpack.c.l.b16 %v48
    %v73 = vunpack.c.l.b16 %v49
    %v74 = vpack.c.b16 %v71, %v70
    %v75 = vpack.c.b16 %v73, %v72
    %v94 = vunpack.c.l.b16 %v50
    %v95 = vunpack.c.h.b16 %v50
    %v96 = vunpack.c.l.b16 %v51
    %v97 = vunpack.c.h.b16 %v51
    %v98 = vunpack.c.l.b16 %v52
    %v99 = vunpack.c.h.b16 %v52
    %v100 = vunpack.c.l.b16 %v53
    %v101 = vunpack.c.h.b16 %v53
    %v102 = vunpack.c.l.b16 %v54
    %v103 = vunpack.c.h.b16 %v54
    %v104 = vunpack.c.l.b16 %v55
    %v105 = vunpack.c.h.b16 %v55
    %v106 = vunpack.c.l.b16 %v56
    %v107 = vunpack.c.h.b16 %v56
    %v108 = vunpack.c.l.b16 %v57
    %v109 = vunpack.c.h.b16 %v57
    %v110 = vunpack.c.l.b16 %v58
    %v111 = vunpack.c.h.b16 %v58
    %v112 = vunpack.c.l.b16 %v59
    %v113 = vunpack.c.h.b16 %v59
    %v114 = vunpack.c.l.b16 %v60
    %v115 = vunpack.c.h.b16 %v60
    %v116 = vunpack.c.l.b16 %v61
    %v117 = vunpack.c.h.b16 %v61
    %v118 = vunpack.c.l.b16 %v62
    %v119 = vunpack.c.h.b16 %v62
    %v120 = vunpack.c.l.b16 %v63
    %v121 = vunpack.c.h.b16 %v63
    %v122 = vunpack.c.l.b16 %v64
    %v123 = vunpack.c.h.b16 %v64
    %v124 = vunpack.c.l.b16 %v65
    %v125 = vunpack.c.h.b16 %v65
    %v126 = vpack.c.b16 %v96, %v94
    %v127 = vpack.c.b16 %v97, %v95
    %v128 = vpack.c.b16 %v100, %v98
    %v129 = vpack.c.b16 %v101, %v99
    %v130 = vpack.c.b16 %v104, %v102
    %v131 = vpack.c.b16 %v105, %v103
    %v132 = vpack.c.b16 %v108, %v106
    %v133 = vpack.c.b16 %v109, %v107
    %v134 = vpack.c.b16 %v112, %v110
    %v135 = vpack.c.b16 %v113, %v111
    %v136 = vpack.c.b16 %v116, %v114
    %v137 = vpack.c.b16 %v117, %v115
    %v138 = vpack.c.b16 %v120, %v118
    %v139 = vpack.c.b16 %v121, %v119
    %v140 = vpack.c.b16 %v124, %v122
    %v141 = vpack.c.b16 %v125, %v123
    %158 = vmatprep.subr.bf16.mxu0 %v127
    %159 = vmatpush1.bf16.msra.mxu0 %v126
    %160 = vmatprep.subr.bf16.mxu0 %v129
    %161 = vmatpush1.bf16.msra.mxu0 %v128
    %162 = vmatprep.subr.bf16.mxu0 %v131
    %163 = vmatpush1.bf16.msra.mxu0 %v130
    %164 = vmatprep.subr.bf16.mxu0 %v133
    %165 = vmatpush1.bf16.msra.mxu0 %v132
    %166 = vmatprep.subr.bf16.mxu0 %v135
    %167 = vmatpush1.bf16.msra.mxu0 %v134
    %168 = vmatprep.subr.bf16.mxu0 %v137
    %169 = vmatpush1.bf16.msra.mxu0 %v136
    %170 = vmatprep.subr.bf16.mxu0 %v139
    %171 = vmatpush1.bf16.msra.mxu0 %v138
    %172 = vmatprep.subr.bf16.mxu0 %v141
    %173 = vmatpush1.bf16.msra.mxu0 %v140
    %174 = vmatprep.subr.bf16.mxu0 0
    %175 = vmatpush1.bf16.msra.mxu0 0
    %176 = vmatprep.subr.bf16.mxu0 0
    %177 = vmatpush1.bf16.msra.mxu0 0
    %178 = vmatprep.subr.bf16.mxu0 0
    %179 = vmatpush1.bf16.msra.mxu0 0
    %180 = vmatprep.subr.bf16.mxu0 0
    %181 = vmatpush1.bf16.msra.mxu0 0
    %182 = vmatprep.subr.bf16.mxu0 0
    %183 = vmatpush1.bf16.msra.mxu0 0
    %184 = vmatprep.subr.bf16.mxu0 0
    %185 = vmatpush1.bf16.msra.mxu0 0
    %186 = vmatprep.subr.bf16.mxu0 0
    %187 = vmatpush1.bf16.msra.mxu0 0
    %188 = vmatprep.subr.bf16.mxu0 0
    %189 = vmatpush1.bf16.msra.mxu0 0
    %190 = vmatprep.mubr.bf16.mxu0 0
    %191 = vmatmul.mubr.bf16.gmra.mrb[0].mxu0 %v74
    %v192 = vpop.f32.mrb[0].mxu0
    %v193 = vadd.f32 0.0, %v192
    %v194 = vpop.f32.mrb[0].mxu0
    %v195 = vadd.f32 0.0, %v194
    %v196 = vpop.f32.mrb[0].mxu0
    %v197 = vadd.f32 0.0, %v196
    %v198 = vpop.f32.mrb[0].mxu0
    %v199 = vadd.f32 0.0, %v198
    %200 = vmatprep.mubr.bf16.mxu0 0
    %201 = vmatmul.mubr.bf16.gmra.mrb[0].mxu0 %v75
    %v202 = vpop.f32.mrb[0].mxu0
    %v203 = vadd.f32 0.0, %v202
    %v204 = vpop.f32.mrb[0].mxu0
    %v205 = vadd.f32 0.0, %v204
    %v206 = vpop.f32.mrb[0].mxu0
    %v207 = vadd.f32 0.0, %v206
    %v208 = vpop.f32.mrb[0].mxu0
    %v209 = vadd.f32 0.0, %v208
    %210 = vdwg.mxu0
    %v211 = vld [vmem:[%s3] sm:$0xff]
    %v212 = vld [vmem:[%s3 + $0x8] sm:$0xff]
    %v213 = vld [vmem:[%s3 + $0x10] sm:$0xff]
    %v214 = vld [vmem:[%s3 + $0x18] sm:$0xff]
    %v215 = vld [vmem:[%s3 + $0x20] sm:$0xff]
    %v216 = vld [vmem:[%s3 + $0x28] sm:$0xff]
    %v217 = vld [vmem:[%s3 + $0x30] sm:$0xff]
    %v218 = vld [vmem:[%s3 + $0x38] sm:$0xff]
    %v219 = vld [vmem:[%s3 + $0x40] sm:$0xff]
    %v220 = vld [vmem:[%s3 + $0x48] sm:$0xff]
    %v221 = vld [vmem:[%s3 + $0x50] sm:$0xff]
    %v222 = vld [vmem:[%s3 + $0x58] sm:$0xff]
    %v223 = vld [vmem:[%s3 + $0x60] sm:$0xff]
    %v224 = vld [vmem:[%s3 + $0x68] sm:$0xff]
    %v225 = vld [vmem:[%s3 + $0x70] sm:$0xff]
    %v226 = vld [vmem:[%s3 + $0x78] sm:$0xff]
    %v243 = vunpack.c.l.b16 %v211
    %v244 = vunpack.c.h.b16 %v211
    %v245 = vunpack.c.l.b16 %v212
    %v246 = vunpack.c.h.b16 %v212
    %v247 = vunpack.c.l.b16 %v213
    %v248 = vunpack.c.h.b16 %v213
    %v249 = vunpack.c.l.b16 %v214
    %v250 = vunpack.c.h.b16 %v214
    %v251 = vunpack.c.l.b16 %v215
    %v252 = vunpack.c.h.b16 %v215
    %v253 = vunpack.c.l.b16 %v216
    %v254 = vunpack.c.h.b16 %v216
    %v255 = vunpack.c.l.b16 %v217
    %v256 = vunpack.c.h.b16 %v217
    %v257 = vunpack.c.l.b16 %v218
    %v258 = vunpack.c.h.b16 %v218
    %v259 = vunpack.c.l.b16 %v219
    %v260 = vunpack.c.h.b16 %v219
    %v261 = vunpack.c.l.b16 %v220
    %v262 = vunpack.c.h.b16 %v220
    %v263 = vunpack.c.l.b16 %v221
    %v264 = vunpack.c.h.b16 %v221
    %v265 = vunpack.c.l.b16 %v222
    %v266 = vunpack.c.h.b16 %v222
    %v267 = vunpack.c.l.b16 %v223
    %v268 = vunpack.c.h.b16 %v223
    %v269 = vunpack.c.l.b16 %v224
    %v270 = vunpack.c.h.b16 %v224
    %v271 = vunpack.c.l.b16 %v225
    %v272 = vunpack.c.h.b16 %v225
    %v273 = vunpack.c.l.b16 %v226
    %v274 = vunpack.c.h.b16 %v226
    %v275 = vpack.c.b16 %v245, %v243
    %v276 = vpack.c.b16 %v246, %v244
    %v277 = vpack.c.b16 %v249, %v247
    %v278 = vpack.c.b16 %v250, %v248
    %v279 = vpack.c.b16 %v253, %v251
    %v280 = vpack.c.b16 %v254, %v252
    %v281 = vpack.c.b16 %v257, %v255
    %v282 = vpack.c.b16 %v258, %v256
    %v283 = vpack.c.b16 %v261, %v259
    %v284 = vpack.c.b16 %v262, %v260
    %v285 = vpack.c.b16 %v265, %v263
    %v286 = vpack.c.b16 %v266, %v264
    %v287 = vpack.c.b16 %v269, %v267
    %v288 = vpack.c.b16 %v270, %v268
    %v289 = vpack.c.b16 %v273, %v271
    %v290 = vpack.c.b16 %v274, %v272
    %307 = vmatprep.subr.bf16.mxu0 %v276
    %308 = vmatpush1.bf16.msra.mxu0 %v275
    %309 = vmatprep.subr.bf16.mxu0 %v278
    %310 = vmatpush1.bf16.msra.mxu0 %v277
    %311 = vmatprep.subr.bf16.mxu0 %v280
    %312 = vmatpush1.bf16.msra.mxu0 %v279
    %313 = vmatprep.subr.bf16.mxu0 %v282
    %314 = vmatpush1.bf16.msra.mxu0 %v281
    %315 = vmatprep.subr.bf16.mxu0 %v284
    %316 = vmatpush1.bf16.msra.mxu0 %v283
    %317 = vmatprep.subr.bf16.mxu0 %v286
    %318 = vmatpush1.bf16.msra.mxu0 %v285
    %319 = vmatprep.subr.bf16.mxu0 %v288
    %320 = vmatpush1.bf16.msra.mxu0 %v287
    %321 = vmatprep.subr.bf16.mxu0 %v290
    %322 = vmatpush1.bf16.msra.mxu0 %v289
    %323 = vmatprep.subr.bf16.mxu0 0
    %324 = vmatpush1.bf16.msra.mxu0 0
    %325 = vmatprep.subr.bf16.mxu0 0
    %326 = vmatpush1.bf16.msra.mxu0 0
    %327 = vmatprep.subr.bf16.mxu0 0
    %328 = vmatpush1.bf16.msra.mxu0 0
    %329 = vmatprep.subr.bf16.mxu0 0
    %330 = vmatpush1.bf16.msra.mxu0 0
    %331 = vmatprep.subr.bf16.mxu0 0
    %332 = vmatpush1.bf16.msra.mxu0 0
    %333 = vmatprep.subr.bf16.mxu0 0
    %334 = vmatpush1.bf16.msra.mxu0 0
    %335 = vmatprep.subr.bf16.mxu0 0
    %336 = vmatpush1.bf16.msra.mxu0 0
    %337 = vmatprep.subr.bf16.mxu0 0
    %338 = vmatpush1.bf16.msra.mxu0 0
    %339 = vmatprep.mubr.bf16.mxu0 0
    %340 = vmatmul.mubr.bf16.gmra.mrb[0].mxu0 %v74
    %v341 = vpop.f32.mrb[0].mxu0
    %v342 = vadd.f32 0.0, %v341
    %v343 = vpop.f32.mrb[0].mxu0
    %v344 = vadd.f32 0.0, %v343
    %v345 = vpop.f32.mrb[0].mxu0
    %v346 = vadd.f32 0.0, %v345
    %v347 = vpop.f32.mrb[0].mxu0
    %v348 = vadd.f32 0.0, %v347
    %349 = vmatprep.mubr.bf16.mxu0 0
    %350 = vmatmul.mubr.bf16.gmra.mrb[0].mxu0 %v75
    %v351 = vpop.f32.mrb[0].mxu0
    %v352 = vadd.f32 0.0, %v351
    %v353 = vpop.f32.mrb[0].mxu0
    %v354 = vadd.f32 0.0, %v353
    %v355 = vpop.f32.mrb[0].mxu0
    %v356 = vadd.f32 0.0, %v355
    %v357 = vpop.f32.mrb[0].mxu0
    %v358 = vadd.f32 0.0, %v357
    %359 = vdwg.mxu0
    %v360 = vxor.u32 %v193, 2147483648
    %v361 = vxor.u32 %v195, 2147483648
    %v362 = vxor.u32 %v197, 2147483648
    %v363 = vxor.u32 %v199, 2147483648
    %v364 = vxor.u32 %v203, 2147483648
    %v365 = vxor.u32 %v205, 2147483648
    %v366 = vxor.u32 %v207, 2147483648
    %v367 = vxor.u32 %v209, 2147483648
    %v368 = vmul.f32 %v360, 1.442695
    %v369 = vpow.pop %v368
    %v370 = vmul.f32 %v361, 1.442695
    %v371 = vpow.pop %v370
    %v372 = vmul.f32 %v362, 1.442695
    %v373 = vpow.pop %v372
    %v374 = vmul.f32 %v363, 1.442695
    %v375 = vpow.pop %v374
    %v376 = vmul.f32 %v364, 1.442695
    %v377 = vpow.pop %v376
    %v378 = vmul.f32 %v365, 1.442695
    %v379 = vpow.pop %v378
    %v380 = vmul.f32 %v366, 1.442695
    %v381 = vpow.pop %v380
    %v382 = vmul.f32 %v367, 1.442695
    %v383 = vpow.pop %v382
    %v384 = vadd.f32 %v369, 1.0
    %v385 = vadd.f32 %v371, 1.0
    %v386 = vadd.f32 %v373, 1.0
    %v387 = vadd.f32 %v375, 1.0
    %v388 = vadd.f32 %v377, 1.0
    %v389 = vadd.f32 %v379, 1.0
    %v390 = vadd.f32 %v381, 1.0
    %v391 = vadd.f32 %v383, 1.0
    %v392 = vrcp.pop %v384
    %v393 = vmul.f32 1.0, %v392
    %v394 = vrcp.pop %v385
    %v395 = vmul.f32 1.0, %v394
    %v396 = vrcp.pop %v386
    %v397 = vmul.f32 1.0, %v396
    %v398 = vrcp.pop %v387
    %v399 = vmul.f32 1.0, %v398
    %v400 = vrcp.pop %v388
    %v401 = vmul.f32 1.0, %v400
    %v402 = vrcp.pop %v389
    %v403 = vmul.f32 1.0, %v402
    %v404 = vrcp.pop %v390
    %v405 = vmul.f32 1.0, %v404
    %v406 = vrcp.pop %v391
    %v407 = vmul.f32 1.0, %v406
    %v408 = vmul.f32 %v193, %v393
    %v409 = vmul.f32 %v195, %v395
    %v410 = vmul.f32 %v197, %v397
    %v411 = vmul.f32 %v199, %v399
    %v412 = vmul.f32 %v203, %v401
    %v413 = vmul.f32 %v205, %v403
    %v414 = vmul.f32 %v207, %v405
    %v415 = vmul.f32 %v209, %v407
    %v416 = vmul.f32 %v408, %v342
    %v417 = vmul.f32 %v409, %v344
    %v418 = vmul.f32 %v410, %v346
    %v419 = vmul.f32 %v411, %v348
    %v420 = vmul.f32 %v412, %v352
    %v421 = vmul.f32 %v413, %v354
    %v422 = vmul.f32 %v414, %v356
    %v423 = vmul.f32 %v415, %v358
    %v424 = vld [vmem:[#allocation2] sm:$0xff]
    %v425 = vld [vmem:[#allocation2 + $0x8] sm:$0xff]
    %v426 = vld [vmem:[#allocation2 + $0x10] sm:$0xff]
    %v427 = vld [vmem:[#allocation2 + $0x18] sm:$0xff]
    %v428 = vpack.c.bf16 %v418, %v416
    %v429 = vpack.c.bf16 %v419, %v417
    %v430 = vpack.c.bf16 %v422, %v420
    %v431 = vpack.c.bf16 %v423, %v421
    %v432 = vld [vmem:[#allocation3] sm:$0xf]
    %v433 = vld [vmem:[#allocation3 + $0x4] sm:$0xf]
    %v434 = vld [vmem:[#allocation3 + $0x8] sm:$0xf]
    %v435 = vld [vmem:[#allocation3 + $0xc] sm:$0xf]
    %v436 = vld [vmem:[#allocation3 + $0x10] sm:$0xf]
    %v437 = vld [vmem:[#allocation3 + $0x14] sm:$0xf]
    %v438 = vld [vmem:[#allocation3 + $0x18] sm:$0xf]
    %v439 = vld [vmem:[#allocation3 + $0x1c] sm:$0xf]
    %v440 = vld [vmem:[#allocation3 + $0x20] sm:$0xf]
    %v441 = vld [vmem:[#allocation3 + $0x24] sm:$0xf]
    %v442 = vld [vmem:[#allocation3 + $0x28] sm:$0xf]
    %v443 = vld [vmem:[#allocation3 + $0x2c] sm:$0xf]
    %v444 = vld [vmem:[#allocation3 + $0x30] sm:$0xf]
    %v445 = vld [vmem:[#allocation3 + $0x34] sm:$0xf]
    %v446 = vld [vmem:[#allocation3 + $0x38] sm:$0xf]
    %v447 = vld [vmem:[#allocation3 + $0x3c] sm:$0xf]
    %v448 = vld [vmem:[#allocation3 + $0x40] sm:$0xf]
    %v449 = vld [vmem:[#allocation3 + $0x44] sm:$0xf]
    %v450 = vld [vmem:[#allocation3 + $0x48] sm:$0xf]
    %v451 = vld [vmem:[#allocation3 + $0x4c] sm:$0xf]
    %v452 = vld [vmem:[#allocation3 + $0x50] sm:$0xf]
    %v453 = vld [vmem:[#allocation3 + $0x54] sm:$0xf]
    %v454 = vld [vmem:[#allocation3 + $0x58] sm:$0xf]
    %v455 = vld [vmem:[#allocation3 + $0x5c] sm:$0xf]
    %v456 = vld [vmem:[#allocation3 + $0x60] sm:$0xf]
    %v457 = vld [vmem:[#allocation3 + $0x64] sm:$0xf]
    %v458 = vld [vmem:[#allocation3 + $0x68] sm:$0xf]
    %v459 = vld [vmem:[#allocation3 + $0x6c] sm:$0xf]
    %v460 = vld [vmem:[#allocation3 + $0x70] sm:$0xf]
    %v461 = vld [vmem:[#allocation3 + $0x74] sm:$0xf]
    %v462 = vld [vmem:[#allocation3 + $0x78] sm:$0xf]
    %v463 = vld [vmem:[#allocation3 + $0x7c] sm:$0xf]
    %v496 = vunpack.c.l.b16 %v432
    %v497 = vunpack.c.l.b16 %v433
    %v498 = vunpack.c.l.b16 %v434
    %v499 = vunpack.c.l.b16 %v435
    %v500 = vunpack.c.l.b16 %v436
    %v501 = vunpack.c.l.b16 %v437
    %v502 = vunpack.c.l.b16 %v438
    %v503 = vunpack.c.l.b16 %v439
    %v504 = vunpack.c.l.b16 %v440
    %v505 = vunpack.c.l.b16 %v441
    %v506 = vunpack.c.l.b16 %v442
    %v507 = vunpack.c.l.b16 %v443
    %v508 = vunpack.c.l.b16 %v444
    %v509 = vunpack.c.l.b16 %v445
    %v510 = vunpack.c.l.b16 %v446
    %v511 = vunpack.c.l.b16 %v447
    %v512 = vunpack.c.l.b16 %v448
    %v513 = vunpack.c.l.b16 %v449
    %v514 = vunpack.c.l.b16 %v450
    %v515 = vunpack.c.l.b16 %v451
    %v516 = vunpack.c.l.b16 %v452
    %v517 = vunpack.c.l.b16 %v453
    %v518 = vunpack.c.l.b16 %v454
    %v519 = vunpack.c.l.b16 %v455
    %v520 = vunpack.c.l.b16 %v456
    %v521 = vunpack.c.l.b16 %v457
    %v522 = vunpack.c.l.b16 %v458
    %v523 = vunpack.c.l.b16 %v459
    %v524 = vunpack.c.l.b16 %v460
    %v525 = vunpack.c.l.b16 %v461
    %v526 = vunpack.c.l.b16 %v462
    %v527 = vunpack.c.l.b16 %v463
    %v528 = vpack.c.b16 %v497, %v496
    %v529 = vpack.c.b16 %v499, %v498
    %v530 = vpack.c.b16 %v501, %v500
    %v531 = vpack.c.b16 %v503, %v502
    %v532 = vpack.c.b16 %v505, %v504
    %v533 = vpack.c.b16 %v507, %v506
    %v534 = vpack.c.b16 %v509, %v508
    %v535 = vpack.c.b16 %v511, %v510
    %v536 = vpack.c.b16 %v513, %v512
    %v537 = vpack.c.b16 %v515, %v514
    %v538 = vpack.c.b16 %v517, %v516
    %v539 = vpack.c.b16 %v519, %v518
    %v540 = vpack.c.b16 %v521, %v520
    %v541 = vpack.c.b16 %v523, %v522
    %v542 = vpack.c.b16 %v525, %v524
    %v543 = vpack.c.b16 %v527, %v526
    %560 = vmatprep.subr.bf16.mxu0 0
    %561 = vmatpush1.bf16.msra.mxu0 %v528
    %562 = vmatprep.subr.bf16.mxu0 0
    %563 = vmatpush1.bf16.msra.mxu0 %v529
    %564 = vmatprep.subr.bf16.mxu0 0
    %565 = vmatpush1.bf16.msra.mxu0 %v530
    %566 = vmatprep.subr.bf16.mxu0 0
    %567 = vmatpush1.bf16.msra.mxu0 %v531
    %568 = vmatprep.subr.bf16.mxu0 0
    %569 = vmatpush1.bf16.msra.mxu0 %v532
    %570 = vmatprep.subr.bf16.mxu0 0
    %571 = vmatpush1.bf16.msra.mxu0 %v533
    %572 = vmatprep.subr.bf16.mxu0 0
    %573 = vmatpush1.bf16.msra.mxu0 %v534
    %574 = vmatprep.subr.bf16.mxu0 0
    %575 = vmatpush1.bf16.msra.mxu0 %v535
    %576 = vmatprep.subr.bf16.mxu0 0
    %577 = vmatpush1.bf16.msra.mxu0 %v536
    %578 = vmatprep.subr.bf16.mxu0 0
    %579 = vmatpush1.bf16.msra.mxu0 %v537
    %580 = vmatprep.subr.bf16.mxu0 0
    %581 = vmatpush1.bf16.msra.mxu0 %v538
    %582 = vmatprep.subr.bf16.mxu0 0
    %583 = vmatpush1.bf16.msra.mxu0 %v539
    %584 = vmatprep.subr.bf16.mxu0 0
    %585 = vmatpush1.bf16.msra.mxu0 %v540
    %586 = vmatprep.subr.bf16.mxu0 0
    %587 = vmatpush1.bf16.msra.mxu0 %v541
    %588 = vmatprep.subr.bf16.mxu0 0
    %589 = vmatpush1.bf16.msra.mxu0 %v542
    %590 = vmatprep.subr.bf16.mxu0 0
    %591 = vmatpush1.bf16.msra.mxu0 %v543
    %592 = vmatprep.mubr.bf16.mxu0 %v429
    %593 = vmatmul.mubr.bf16.gmra.mrb[0].mxu0 %v428
    %v594 = vpop.f32.mrb[0].mxu0
    %v595 = vadd.f32 0.0, %v594
    %v596 = vpop.f32.mrb[0].mxu0
    %v597 = vpop.f32.mrb[0].mxu0
    %v598 = vadd.f32 0.0, %v597
    %v599 = vpop.f32.mrb[0].mxu0
    %600 = vmatprep.mubr.bf16.mxu0 %v431
    %601 = vmatmul.mubr.bf16.gmra.mrb[0].mxu0 %v430
    %v602 = vpop.f32.mrb[0].mxu0
    %v603 = vadd.f32 0.0, %v602
    %v604 = vpop.f32.mrb[0].mxu0
    %v605 = vpop.f32.mrb[0].mxu0
    %v606 = vadd.f32 0.0, %v605
    %v607 = vpop.f32.mrb[0].mxu0
    %608 = vdwg.mxu0
    %v609 = vadd.f32 %v424, %v595
    %v610 = vadd.f32 %v425, %v598
    %v611 = vadd.f32 %v426, %v603
    %v612 = vadd.f32 %v427, %v606
    %613 = vst [vmem:[#allocation2] sm:$0xff] %v609
    %614 = vst [vmem:[#allocation2 + $0x8] sm:$0xff] %v610
    %615 = vst [vmem:[#allocation2 + $0x10] sm:$0xff] %v611
    %616 = vst [vmem:[#allocation2 + $0x18] sm:$0xff] %v612
    // Predicated region
    $region34: #{transformer_forward.6} parent=1 // pred_check
      %p617 = pneg %p38
    $region35: #{transformer_forward.6} parent=1 // pred_check_branch
      %619 = sbr.rel (%p617) target = $region37
    $region36: #{transformer_forward.6} parent=1 // pred_region
      %v620 = vld [vmem:[#allocation2] sm:$0xff]
      %v621 = vld [vmem:[#allocation2 + $0x8] sm:$0xff]
      %v622 = vld [vmem:[#allocation2 + $0x10] sm:$0xff]
      %v623 = vld [vmem:[#allocation2 + $0x18] sm:$0xff]
      %v624 = vmul.f32 %v620, %v620
      %v625 = vmul.f32 %v621, %v621
      %v626 = vmul.f32 %v622, %v622
      %v627 = vmul.f32 %v623, %v623
      %628 = vadd.xlane.f32.xlu0 %v624
      %v629 = vpop.xlane.xlu0 %628
      %630 = vadd.xlane.f32.xlu0 %v625
      %v631 = vpop.xlane.xlu0 %630
      %632 = vadd.xlane.f32.xlu0 %v626
      %v633 = vpop.xlane.xlu0 %632
      %634 = vadd.xlane.f32.xlu0 %v627
      %v635 = vpop.xlane.xlu0 %634
      %v636 = vrcp.pop 128.0
      %v637 = vmul.f32 %v629, %v636
      %v638 = vmul.f32 %v631, %v636
      %v639 = vmul.f32 %v633, %v636
      %v640 = vmul.f32 %v635, %v636
      %v641 = vld [vmem:[%s1] sm:$0xf]
      %v642 = vld [vmem:[%s1 + $0x4] sm:$0xf]
      %v643 = vld [vmem:[%s1 + $0x8] sm:$0xf]
      %v644 = vld [vmem:[%s1 + $0xc] sm:$0xf]
      %v645 = vunpack.c.l.bf16 %v641
      %v646 = vunpack.c.l.bf16 %v642
      %v647 = vunpack.c.l.bf16 %v643
      %v648 = vunpack.c.l.bf16 %v644
      %v649 = vadd.f32 %v637, 1e-05
      %v650 = vadd.f32 %v638, 1e-05
      %v651 = vadd.f32 %v639, 1e-05
      %v652 = vadd.f32 %v640, 1e-05
      %v653 = vrsqrt.pop %v649
      %v654 = vrsqrt.pop %v650
      %v655 = vrsqrt.pop %v651
      %v656 = vrsqrt.pop %v652
      %v657 = vmul.f32 %v620, %v653
      %v658 = vmul.f32 %v621, %v654
      %v659 = vmul.f32 %v622, %v655
      %v660 = vmul.f32 %v623, %v656
      %v661 = vld [vmem:[%s5] sm:$0x1]
      %v663 = vlaneseq
      %v664 = vshrl.u32 %v663, 7
      %v665 = vsub.s32 0, %v664
      %v666 = vrot.slane %v661, %v665
      %v668 = vmul.f32 %v657, %v666
      %v669 = vmul.f32 %v658, %v666
      %v670 = vmul.f32 %v659, %v666
      %v671 = vmul.f32 %v660, %v666
      %v672 = vadd.f32 %v645, %v668
      %v673 = vadd.f32 %v646, %v669
      %v674 = vadd.f32 %v647, %v670
      %v675 = vadd.f32 %v648, %v671
      %v676 = vpack.c.bf16 %v673, %v672
      %v677 = vpack.c.bf16 %v675, %v674
      %v680 = vunpack.c.l.b16 %v676
      %v681 = vunpack.c.h.b16 %v676
      %v682 = vunpack.c.l.b16 %v677
      %v683 = vunpack.c.h.b16 %v677
      %v684 = vpack.c.b16 %v680, %v680
      %v685 = vpack.c.b16 %v681, %v681
      %v686 = vpack.c.b16 %v682, %v682
      %v687 = vpack.c.b16 %v683, %v683
      %692 = vst [vmem:[%s6] sm:$0xf] %v684
      %693 = vst [vmem:[%s6 + $0x4] sm:$0xf] %v685
      %694 = vst [vmem:[%s6 + $0x8] sm:$0xf] %v686
      %695 = vst [vmem:[%s6 + $0xc] sm:$0xf] %v687
    $region37: #{transformer_forward.6} parent=1 // pred_fallthru
      _
    // Predicated region
    $region38: #{transformer_forward.6} parent=1 // pred_check
      _
    $region39: #{transformer_forward.6} parent=1 // pred_check_branch
      %697 = sbr.rel (0) target = $region41
    $region40: #{transformer_forward.6} parent=1 // pred_region
      _
    $region41: #{transformer_forward.6} parent=1 // pred_fallthru
      _
    // Predicated region
    $region42: #{transformer_forward.6} parent=1 // pred_check
      _
    $region43: #{transformer_forward.6} parent=1 // pred_check_branch
      %699 = sbr.rel (0) target = $region45
    $region44: #{transformer_forward.6} parent=1 // pred_region
      _
    $region45: #{transformer_forward.6} parent=1 // pred_fallthru
      _
    %700 = vsyncpa [#allocation4], 1

// kernel: transformer_forward.5
$region0: #{transformer_forward.5}
  #allocation0 [shape = 'u32[]', space=smem, size = 0x4, offset = 0x4, fixed_abs, tag = 'smem constant byte address 0x4 - core index']
  #allocation1 [shape = 'u32[144,128]{1,0:T(1,128)}', space=vmem, size = 0x12000, scoped, tag = 'internal scratch']
  #allocation2 [shape = 'f32[16,128]{1,0:T(8,128)}', space=vmem, size = 0x2000, scoped, tag = 'scratch operand']
  %s0 = inlined_call_operand.vmem [shape: bf16[2,16,128], index: 0, kind: input, shape index: {}]
  %s1 = inlined_call_operand.vmem [shape: bf16[128,384], index: 1, kind: input, shape index: {}]
  %s2 = inlined_call_operand.hbm [shape: bf16[128,128], index: 2, kind: input, shape index: {}]
  %s3 = inlined_call_operand.vmem [shape: f32[1,128], index: 3, kind: input, shape index: {}]
  %s4 = inlined_call_operand.vmem [shape: f32[16,16], index: 4, kind: input, shape index: {}]
  %s5 = inlined_call_operand.vmem [shape: f32[16,16], index: 5, kind: input, shape index: {}]
  %s6 = inlined_call_operand.vmem [shape: bf16[2,16,128], index: 6, kind: output, shape index: {}]
  %s7 = sld [smem:[#allocation0]]
  $region61: #{transformer_forward.5} parent=0
    _
  %s9 = ssub.s32 1, %s7
  %s10 = scalar_select 0, %s9, %s7
  $region1: #{transformer_forward.5} parent=0
    #allocation3 [shape = 'u8[32768]{0}', space=vmem, size = 0x8000, scoped, tag = 'input window, operand 2, single buffered']
    #allocation4 [shape = 's32[2]{0}', space=sflag, size = 0x8, scoped, tag = 'scoped memory for transformer_forward.5']
    %11 = vsyncpa [#allocation4], 0
    loop: start=0, step=1, limit=4
    $region2: #{transformer_forward.5} parent=1 // loop_pre_header
      _
    $region3: #{transformer_forward.5} parent=1 // loop_header
      %s13 = sphi 0, %s17
      %p14 = scmp.ge.s32.totalorder %s13, 4
      %s23 = sphi 0, %s25
      %s26 = sphi 0, %s23
      %s27 = sphi 0, %s26
      %s43 = sphi 0, %s27
      %s47 = sphi 0, %s47
      %s49 = sphi 0, %s47
      %s50 = sphi 0, %s49
      %s64 = sphi 0, %s50
      %s68 = sphi 0, %s68
      %s70 = sphi 0, %s68
      %s71 = sphi 0, %s70
      %s85 = sphi 0, %s71
      %s89 = sphi 0, %s89
      %s91 = sphi 0, %s89
      %s92 = sphi 0, %s91
      %s106 = sphi 0, %s92
      %s110 = sphi 0, %s110
      %s112 = sphi 0, %s110
      %s113 = sphi 0, %s112
      %s127 = sphi 0, %s113
      %s131 = sphi 0, %s131
      %s133 = sphi 0, %s131
      %s134 = sphi 0, %s133
      %s148 = sphi 0, %s134
      %s154 = sphi 0, %s156
      %s157 = sphi 0, %s154
      %s158 = sphi 0, %s157
      %s174 = sphi 0, %s158
    $region4: #{transformer_forward.5} parent=1 // loop_header_branch
      %16 = sbr.rel (%p14) target = $region8
    $region5: #{transformer_forward.5} parent=1 // loop_body
      %s18 = ssub.s32 %s13, 1
      %s19 = ssub.s32 %s13, 2
      %s20 = sadd.s32 %s13, 1
      %s21 = ssub.s32 %s13, %s20
      %p22 = scmp.eq.s32.totalorder %s21, 0
      %s24 = sadd.s32 %s23, 1
      %s25 = scalar_select %p22, %s23, %s24
      %p28 = pneg %p22
      %p29 = scmp.eq.s32.totalorder %s13, 1
      %p30 = por %p28, %p29
      %p31 = scmp.ne.s32.totalorder %s23, %s26
      %p32 = scmp.eq.s32.totalorder %s13, 0
      %p33 = por %p31, %p32
      %p34 = scmp.ne.s32.totalorder %s23, %s26
      %p35 = scmp.eq.s32.totalorder %s18, 1
      %p36 = por %p34, %p35
      %p37 = scmp.ne.s32.totalorder %s26, %s27
      %p38 = scmp.eq.s32.totalorder %s18, 0
      %p39 = por %p37, %p38
      %p40 = scmp.ne.s32.totalorder %s26, %s27
      %p41 = scmp.eq.s32.totalorder %s19, 1
      %p42 = por %p40, %p41
      %p44 = scmp.ne.s32.totalorder %s27, %s43
      %p45 = scmp.eq.s32.totalorder %s19, 0
      %p46 = por %p44, %p45
      %s48 = sadd.s32 %s47, 1
      %p51 = scmp.eq.s32.totalorder %s13, 1
      %p52 = scmp.ne.s32.totalorder %s47, %s49
      %p53 = scmp.eq.s32.totalorder %s13, 0
      %p54 = por %p52, %p53
      %p55 = scmp.ne.s32.totalorder %s47, %s49
      %p56 = scmp.eq.s32.totalorder %s18, 1
      %p57 = por %p55, %p56
      %p58 = scmp.ne.s32.totalorder %s49, %s50
      %p59 = scmp.eq.s32.totalorder %s18, 0
      %p60 = por %p58, %p59
      %p61 = scmp.ne.s32.totalorder %s49, %s50
      %p62 = scmp.eq.s32.totalorder %s19, 1
      %p63 = por %p61, %p62
      %p65 = scmp.ne.s32.totalorder %s50, %s64
      %p66 = scmp.eq.s32.totalorder %s19, 0
      %p67 = por %p65, %p66
      %s69 = sadd.s32 %s68, 1
      %p72 = scmp.eq.s32.totalorder %s13, 1
      %p73 = scmp.ne.s32.totalorder %s68, %s70
      %p74 = scmp.eq.s32.totalorder %s13, 0
      %p75 = por %p73, %p74
      %p76 = scmp.ne.s32.totalorder %s68, %s70
      %p77 = scmp.eq.s32.totalorder %s18, 1
      %p78 = por %p76, %p77
      %p79 = scmp.ne.s32.totalorder %s70, %s71
      %p80 = scmp.eq.s32.totalorder %s18, 0
      %p81 = por %p79, %p80
      %p82 = scmp.ne.s32.totalorder %s70, %s71
      %p83 = scmp.eq.s32.totalorder %s19, 1
      %p84 = por %p82, %p83
      %p86 = scmp.ne.s32.totalorder %s71, %s85
      %p87 = scmp.eq.s32.totalorder %s19, 0
      %p88 = por %p86, %p87
      %s90 = sadd.s32 %s89, 1
      %p93 = scmp.eq.s32.totalorder %s13, 1
      %p94 = scmp.ne.s32.totalorder %s89, %s91
      %p95 = scmp.eq.s32.totalorder %s13, 0
      %p96 = por %p94, %p95
      %p97 = scmp.ne.s32.totalorder %s89, %s91
      %p98 = scmp.eq.s32.totalorder %s18, 1
      %p99 = por %p97, %p98
      %p100 = scmp.ne.s32.totalorder %s91, %s92
      %p101 = scmp.eq.s32.totalorder %s18, 0
      %p102 = por %p100, %p101
      %p103 = scmp.ne.s32.totalorder %s91, %s92
      %p104 = scmp.eq.s32.totalorder %s19, 1
      %p105 = por %p103, %p104
      %p107 = scmp.ne.s32.totalorder %s92, %s106
      %p108 = scmp.eq.s32.totalorder %s19, 0
      %p109 = por %p107, %p108
      %s111 = sadd.s32 %s110, 1
      %p114 = scmp.eq.s32.totalorder %s13, 1
      %p115 = scmp.ne.s32.totalorder %s110, %s112
      %p116 = scmp.eq.s32.totalorder %s13, 0
      %p117 = por %p115, %p116
      %p118 = scmp.ne.s32.totalorder %s110, %s112
      %p119 = scmp.eq.s32.totalorder %s18, 1
      %p120 = por %p118, %p119
      %p121 = scmp.ne.s32.totalorder %s112, %s113
      %p122 = scmp.eq.s32.totalorder %s18, 0
      %p123 = por %p121, %p122
      %p124 = scmp.ne.s32.totalorder %s112, %s113
      %p125 = scmp.eq.s32.totalorder %s19, 1
      %p126 = por %p124, %p125
      %p128 = scmp.ne.s32.totalorder %s113, %s127
      %p129 = scmp.eq.s32.totalorder %s19, 0
      %p130 = por %p128, %p129
      %s132 = sadd.s32 %s131, 1
      %p135 = scmp.eq.s32.totalorder %s13, 1
      %p136 = scmp.ne.s32.totalorder %s131, %s133
      %p137 = scmp.eq.s32.totalorder %s13, 0
      %p138 = por %p136, %p137
      %p139 = scmp.ne.s32.totalorder %s131, %s133
      %p140 = scmp.eq.s32.totalorder %s18, 1
      %p141 = por %p139, %p140
      %p142 = scmp.ne.s32.totalorder %s133, %s134
      %p143 = scmp.eq.s32.totalorder %s18, 0
      %p144 = por %p142, %p143
      %p145 = scmp.ne.s32.totalorder %s133, %s134
      %p146 = scmp.eq.s32.totalorder %s19, 1
      %p147 = por %p145, %p146
      %p149 = scmp.ne.s32.totalorder %s134, %s148
      %p150 = scmp.eq.s32.totalorder %s19, 0
      %p151 = por %p149, %p150
      %s152 = ssub.s32 %s13, %s20
      %p153 = scmp.eq.s32.totalorder %s152, 0
      %s155 = sadd.s32 %s154, 1
      %s156 = scalar_select %p153, %s154, %s155
      %p159 = pneg %p153
      %p160 = scmp.eq.s32.totalorder %s13, 1
      %p161 = por %p159, %p160
      %p162 = scmp.ne.s32.totalorder %s154, %s157
      %p163 = scmp.eq.s32.totalorder %s13, 0
      %p164 = por %p162, %p163
      %p165 = scmp.ne.s32.totalorder %s154, %s157
      %p166 = scmp.eq.s32.totalorder %s18, 1
      %p167 = por %p165, %p166
      %p168 = scmp.ne.s32.totalorder %s157, %s158
      %p169 = scmp.eq.s32.totalorder %s18, 0
      %p170 = por %p168, %p169
      %p171 = scmp.ne.s32.totalorder %s157, %s158
      %p172 = scmp.eq.s32.totalorder %s19, 1
      %p173 = por %p171, %p172
      %p175 = scmp.ne.s32.totalorder %s158, %s174
      %p176 = scmp.eq.s32.totalorder %s19, 0
      %p177 = por %p175, %p176
      %p178 = scmp.le.s32.totalorder 1, %s13
      %p179 = scmp.lt.s32.totalorder %s13, 3
      %p180 = pnand %p178, %p179
      %p181 = pneg %p180
      // Predicated region
      $region9: #{transformer_forward.5} parent=5 // pred_check
        _
      $region10: #{transformer_forward.5} parent=5 // pred_check_branch
        %183 = sbr.rel (%p180) target = $region12
      $region11: #{transformer_forward.5} parent=5 // pred_region
        %s184 = ssub.s32 %s13, 1
        // Predicated region
        $region13: #{transformer_forward.5} parent=11 // pred_check
          %p185 = pneg %p60
        $region14: #{transformer_forward.5} parent=11 // pred_check_branch
          %187 = sbr.rel (%p185) target = $region16
        $region15: #{transformer_forward.5} parent=11 // pred_region
          _
        $region16: #{transformer_forward.5} parent=11 // pred_fallthru
          _
        // Predicated region
        $region17: #{transformer_forward.5} parent=11 // pred_check
          %p188 = pneg %p81
        $region18: #{transformer_forward.5} parent=11 // pred_check_branch
          %190 = sbr.rel (%p188) target = $region20
        $region19: #{transformer_forward.5} parent=11 // pred_region
          %s192 = ssub.s32 1024, 1024
          %193 = vsyncadd [#allocation4], %s192
          %s194 = sshll.u32 [#allocation3], 4
          %s195 = int_to_ptr.vmem [resolvable:$true] %s194
          %200 = dma.hbm_to_vmem [thread:$0]  %s2, 1024, %s195, [#allocation4], 64, 64, 4
        $region20: #{transformer_forward.5} parent=11 // pred_fallthru
          _
        // Predicated region
        $region21: #{transformer_forward.5} parent=11 // pred_check
          %p201 = pneg %p102
        $region22: #{transformer_forward.5} parent=11 // pred_check_branch
          %203 = sbr.rel (%p201) target = $region24
        $region23: #{transformer_forward.5} parent=11 // pred_region
          _
        $region24: #{transformer_forward.5} parent=11 // pred_fallthru
          _
        // Predicated region
        $region25: #{transformer_forward.5} parent=11 // pred_check
          %p204 = pneg %p123
        $region26: #{transformer_forward.5} parent=11 // pred_check_branch
          %206 = sbr.rel (%p204) target = $region28
        $region27: #{transformer_forward.5} parent=11 // pred_region
          _
        $region28: #{transformer_forward.5} parent=11 // pred_fallthru
          _
        // Predicated region
        $region29: #{transformer_forward.5} parent=11 // pred_check
          %p207 = pneg %p144
        $region30: #{transformer_forward.5} parent=11 // pred_check_branch
          %209 = sbr.rel (%p207) target = $region32
        $region31: #{transformer_forward.5} parent=11 // pred_region
          _
        $region32: #{transformer_forward.5} parent=11 // pred_fallthru
          _
      $region12: #{transformer_forward.5} parent=5 // pred_fallthru
        _
      %p210 = scmp.lt.s32.totalorder %s13, 2
      // Predicated region
      $region33: #{transformer_forward.5} parent=5 // pred_check
        %p211 = pneg %p210
      $region34: #{transformer_forward.5} parent=5 // pred_check_branch
        %213 = sbr.rel (%p211) target = $region36
      $region35: #{transformer_forward.5} parent=5 // pred_region
        // Predicated region
        $region37: #{transformer_forward.5} parent=35 // pred_check
          %p214 = pneg %p33
        $region38: #{transformer_forward.5} parent=35 // pred_check_branch
          %216 = sbr.rel (%p214) target = $region40
        $region39: #{transformer_forward.5} parent=35 // pred_region
          %p217 = scmp.lt.s32.totalorder %s13, 1
          %s218 = scalar_select %p217, %s13, 1
          %s219 = smul.addr %s218, 2
          %s220 = smul.addr %s219, 4
          %s221 = scalar_lea.vmem %s0, %s220
        $region40: #{transformer_forward.5} parent=35 // pred_fallthru
          _
      $region36: #{transformer_forward.5} parent=5 // pred_fallthru
        _
      %p222 = scmp.le.s32.totalorder 1, %s13
      %p223 = scmp.lt.s32.totalorder %s13, 3
      %p224 = pnand %p222, %p223
      %p225 = pneg %p224
      // Predicated region
      $region41: #{transformer_forward.5} parent=5 // pred_check
        _
      $region42: #{transformer_forward.5} parent=5 // pred_check_branch
        %227 = sbr.rel (%p224) target = $region44
      $region43: #{transformer_forward.5} parent=5 // pred_region
        %s228 = ssub.s32 %s13, 1
        // Predicated region
        $region45: #{transformer_forward.5} parent=43 // pred_check
          %p229 = pneg %p81
        $region46: #{transformer_forward.5} parent=43 // pred_check_branch
          %231 = sbr.rel (%p229) target = $region48
        $region47: #{transformer_forward.5} parent=43 // pred_region
          %232 = dma.done [#allocation4], 1024
        $region48: #{transformer_forward.5} parent=43 // pred_fallthru
          _
        %p233 = scmp.lt.s32.totalorder %s18, 1
        %s234 = scalar_select %p233, %s18, 1
        %s235 = smul.addr %s234, 2
        %s236 = smul.addr %s235, 4
        %s237 = scalar_lea.vmem %s0, %s236
        %p238 = pneg %p39
        %p239 = pneg %p36
        %p240 = pneg %p60
        %p241 = pneg %p57
        %p242 = pneg %p81
        %p243 = pneg %p78
        %p244 = pneg %p102
        %p245 = pneg %p99
        %p246 = pneg %p123
        %p247 = pneg %p120
        %p248 = pneg %p144
        %p249 = pneg %p141
        %p250 = pneg %p170
        %p251 = pneg %p167
        %p252 = scmp.lt.s32.totalorder %s18, 1
        %s253 = scalar_select %p252, %s18, 1
        %s254 = smul.addr %s253, 2
        %s255 = smul.addr %s254, 4
        %s256 = scalar_lea.vmem %s6, %s255
        %p257 = scmp.lt.s32.totalorder %s18, 1
        %s258 = scalar_select %p257, %s18, 1
        %s259 = smul.addr %s258, 2
        %s260 = smul.addr %s259, 4
        %s261 = scalar_lea.vmem %s0, %s260
        %p262 = scmp.lt.s32.totalorder %s18, 1
        %s263 = scalar_select %p262, %s18, 1
        %s264 = smul.addr %s263, 2
        %s265 = smul.addr %s264, 4
        %s266 = scalar_lea.vmem %s6, %s265
        %v268 = vld [vmem:[%s261] sm:$0xf]
        %v269 = vld [vmem:[%s261 + $0x4] sm:$0xf]
        %v270 = vld [vmem:[%s1] sm:$0xff]
        %v271 = vld [vmem:[%s1 + $0x8] sm:$0xf]
        %v272 = vld [vmem:[%s1 + $0xc] sm:$0xff]
        %v273 = vld [vmem:[%s1 + $0x14] sm:$0xf]
        %v274 = vld [vmem:[%s1 + $0x18] sm:$0xff]
        %v275 = vld [vmem:[%s1 + $0x20] sm:$0xf]
        %v276 = vld [vmem:[%s1 + $0x24] sm:$0xff]
        %v277 = vld [vmem:[%s1 + $0x2c] sm:$0xf]
        %v278 = vld [vmem:[%s1 + $0x30] sm:$0xff]
        %v279 = vld [vmem:[%s1 + $0x38] sm:$0xf]
        %v280 = vld [vmem:[%s1 + $0x3c] sm:$0xff]
        %v281 = vld [vmem:[%s1 + $0x44] sm:$0xf]
        %v282 = vld [vmem:[%s1 + $0x48] sm:$0xff]
        %v283 = vld [vmem:[%s1 + $0x50] sm:$0xf]
        %v284 = vld [vmem:[%s1 + $0x54] sm:$0xff]
        %v285 = vld [vmem:[%s1 + $0x5c] sm:$0xf]
        %v286 = vld [vmem:[%s1 + $0x60] sm:$0xff]
        %v287 = vld [vmem:[%s1 + $0x68] sm:$0xf]
        %v288 = vld [vmem:[%s1 + $0x6c] sm:$0xff]
        %v289 = vld [vmem:[%s1 + $0x74] sm:$0xf]
        %v290 = vld [vmem:[%s1 + $0x78] sm:$0xff]
        %v291 = vld [vmem:[%s1 + $0x80] sm:$0xf]
        %v292 = vld [vmem:[%s1 + $0x84] sm:$0xff]
        %v293 = vld [vmem:[%s1 + $0x8c] sm:$0xf]
        %v294 = vld [vmem:[%s1 + $0x90] sm:$0xff]
        %v295 = vld [vmem:[%s1 + $0x98] sm:$0xf]
        %v296 = vld [vmem:[%s1 + $0x9c] sm:$0xff]
        %v297 = vld [vmem:[%s1 + $0xa4] sm:$0xf]
        %v298 = vld [vmem:[%s1 + $0xa8] sm:$0xff]
        %v299 = vld [vmem:[%s1 + $0xb0] sm:$0xf]
        %v300 = vld [vmem:[%s1 + $0xb4] sm:$0xff]
        %v301 = vld [vmem:[%s1 + $0xbc] sm:$0xf]
        %v304 = vunpack.c.l.b16 %v268
        %v305 = vunpack.c.l.b16 %v269
        %v306 = vpack.c.b16 %v305, %v304
        %v340 = vunpack.c.l.b16 %v270
        %v341 = vunpack.c.h.b16 %v270
        %v342 = vunpack.c.l.b16 %v271
        %v343 = vunpack.c.l.b16 %v272
        %v344 = vunpack.c.h.b16 %v272
        %v345 = vunpack.c.l.b16 %v273
        %v346 = vunpack.c.l.b16 %v274
        %v347 = vunpack.c.h.b16 %v274
        %v348 = vunpack.c.l.b16 %v275
        %v349 = vunpack.c.l.b16 %v276
        %v350 = vunpack.c.h.b16 %v276
        %v351 = vunpack.c.l.b16 %v277
        %v352 = vunpack.c.l.b16 %v278
        %v353 = vunpack.c.h.b16 %v278
        %v354 = vunpack.c.l.b16 %v279
        %v355 = vunpack.c.l.b16 %v280
        %v356 = vunpack.c.h.b16 %v280
        %v357 = vunpack.c.l.b16 %v281
        %v358 = vunpack.c.l.b16 %v282
        %v359 = vunpack.c.h.b16 %v282
        %v360 = vunpack.c.l.b16 %v283
        %v361 = vunpack.c.l.b16 %v284
        %v362 = vunpack.c.h.b16 %v284
        %v363 = vunpack.c.l.b16 %v285
        %v364 = vunpack.c.l.b16 %v286
        %v365 = vunpack.c.h.b16 %v286
        %v366 = vunpack.c.l.b16 %v287
        %v367 = vunpack.c.l.b16 %v288
        %v368 = vunpack.c.h.b16 %v288
        %v369 = vunpack.c.l.b16 %v289
        %v370 = vunpack.c.l.b16 %v290
        %v371 = vunpack.c.h.b16 %v290
        %v372 = vunpack.c.l.b16 %v291
        %v373 = vunpack.c.l.b16 %v292
        %v374 = vunpack.c.h.b16 %v292
        %v375 = vunpack.c.l.b16 %v293
        %v376 = vunpack.c.l.b16 %v294
        %v377 = vunpack.c.h.b16 %v294
        %v378 = vunpack.c.l.b16 %v295
        %v379 = vunpack.c.l.b16 %v296
        %v380 = vunpack.c.h.b16 %v296
        %v381 = vunpack.c.l.b16 %v297
        %v382 = vunpack.c.l.b16 %v298
        %v383 = vunpack.c.h.b16 %v298
        %v384 = vunpack.c.l.b16 %v299
        %v385 = vunpack.c.l.b16 %v300
        %v386 = vunpack.c.h.b16 %v300
        %v387 = vunpack.c.l.b16 %v301
        %v388 = vpack.c.b16 %v343, %v340
        %v389 = vpack.c.b16 %v344, %v341
        %v390 = vpack.c.b16 %v345, %v342
        %v391 = vpack.c.b16 %v349, %v346
        %v392 = vpack.c.b16 %v350, %v347
        %v393 = vpack.c.b16 %v351, %v348
        %v394 = vpack.c.b16 %v355, %v352
        %v395 = vpack.c.b16 %v356, %v353
        %v396 = vpack.c.b16 %v357, %v354
        %v397 = vpack.c.b16 %v361, %v358
        %v398 = vpack.c.b16 %v362, %v359
        %v399 = vpack.c.b16 %v363, %v360
        %v400 = vpack.c.b16 %v367, %v364
        %v401 = vpack.c.b16 %v368, %v365
        %v402 = vpack.c.b16 %v369, %v366
        %v403 = vpack.c.b16 %v373, %v370
        %v404 = vpack.c.b16 %v374, %v371
        %v405 = vpack.c.b16 %v375, %v372
        %v406 = vpack.c.b16 %v379, %v376
        %v407 = vpack.c.b16 %v380, %v377
        %v408 = vpack.c.b16 %v381, %v378
        %v409 = vpack.c.b16 %v385, %v382
        %v410 = vpack.c.b16 %v386, %v383
        %v411 = vpack.c.b16 %v387, %v384
        %436 = vmatprep.subr.bf16.mxu0 %v389
        %437 = vmatpush1.bf16.msra.mxu0 %v388
        %438 = vmatprep.subr.bf16.mxu0 %v392
        %439 = vmatpush1.bf16.msra.mxu0 %v391
        %440 = vmatprep.subr.bf16.mxu0 %v395
        %441 = vmatpush1.bf16.msra.mxu0 %v394
        %442 = vmatprep.subr.bf16.mxu0 %v398
        %443 = vmatpush1.bf16.msra.mxu0 %v397
        %444 = vmatprep.subr.bf16.mxu0 %v401
        %445 = vmatpush1.bf16.msra.mxu0 %v400
        %446 = vmatprep.subr.bf16.mxu0 %v404
        %447 = vmatpush1.bf16.msra.mxu0 %v403
        %448 = vmatprep.subr.bf16.mxu0 %v407
        %449 = vmatpush1.bf16.msra.mxu0 %v406
        %450 = vmatprep.subr.bf16.mxu0 %v410
        %451 = vmatpush1.bf16.msra.mxu0 %v409
        %452 = vmatprep.subr.bf16.mxu0 0
        %453 = vmatpush1.bf16.msra.mxu0 0
        %454 = vmatprep.subr.bf16.mxu0 0
        %455 = vmatpush1.bf16.msra.mxu0 0
        %456 = vmatprep.subr.bf16.mxu0 0
        %457 = vmatpush1.bf16.msra.mxu0 0
        %458 = vmatprep.subr.bf16.mxu0 0
        %459 = vmatpush1.bf16.msra.mxu0 0
        %460 = vmatprep.subr.bf16.mxu0 0
        %461 = vmatpush1.bf16.msra.mxu0 0
        %462 = vmatprep.subr.bf16.mxu0 0
        %463 = vmatpush1.bf16.msra.mxu0 0
        %464 = vmatprep.subr.bf16.mxu0 0
        %465 = vmatpush1.bf16.msra.mxu0 0
        %466 = vmatprep.subr.bf16.mxu0 0
        %467 = vmatpush1.bf16.msra.mxu0 0
        %468 = vmatprep.mubr.bf16.mxu0 0
        %469 = vmatmul.mubr.bf16.gmra.mrb[0].mxu0 %v306
        %v470 = vpop.f32.mrb[0].mxu0
        %v471 = vadd.f32 0.0, %v470
        %v472 = vpop.f32.mrb[0].mxu0
        %v473 = vadd.f32 0.0, %v472
        %v474 = vpop.f32.mrb[0].mxu0
        %v475 = vadd.f32 0.0, %v474
        %v476 = vpop.f32.mrb[0].mxu0
        %v477 = vadd.f32 0.0, %v476
        %478 = vdwg.mxu0
        %479 = vmatprep.subr.bf16.mxu0 0
        %480 = vmatpush1.bf16.msra.mxu0 %v390
        %481 = vmatprep.subr.bf16.mxu0 0
        %482 = vmatpush1.bf16.msra.mxu0 %v393
        %483 = vmatprep.subr.bf16.mxu0 0
        %484 = vmatpush1.bf16.msra.mxu0 %v396
        %485 = vmatprep.subr.bf16.mxu0 0
        %486 = vmatpush1.bf16.msra.mxu0 %v399
        %487 = vmatprep.subr.bf16.mxu0 0
        %488 = vmatpush1.bf16.msra.mxu0 %v402
        %489 = vmatprep.subr.bf16.mxu0 0
        %490 = vmatpush1.bf16.msra.mxu0 %v405
        %491 = vmatprep.subr.bf16.mxu0 0
        %492 = vmatpush1.bf16.msra.mxu0 %v408
        %493 = vmatprep.subr.bf16.mxu0 0
        %494 = vmatpush1.bf16.msra.mxu0 %v411
        %495 = vmatprep.subr.bf16.mxu0 0
        %496 = vmatpush1.bf16.msra.mxu0 0
        %497 = vmatprep.subr.bf16.mxu0 0
        %498 = vmatpush1.bf16.msra.mxu0 0
        %499 = vmatprep.subr.bf16.mxu0 0
        %500 = vmatpush1.bf16.msra.mxu0 0
        %501 = vmatprep.subr.bf16.mxu0 0
        %502 = vmatpush1.bf16.msra.mxu0 0
        %503 = vmatprep.subr.bf16.mxu0 0
        %504 = vmatpush1.bf16.msra.mxu0 0
        %505 = vmatprep.subr.bf16.mxu0 0
        %506 = vmatpush1.bf16.msra.mxu0 0
        %507 = vmatprep.subr.bf16.mxu0 0
        %508 = vmatpush1.bf16.msra.mxu0 0
        %509 = vmatprep.subr.bf16.mxu0 0
        %510 = vmatpush1.bf16.msra.mxu0 0
        %511 = vmatprep.mubr.bf16.mxu0 0
        %512 = vmatmul.mubr.bf16.gmra.mrb[0].mxu0 %v306
        %v513 = vpop.f32.mrb[0].mxu0
        %v514 = vadd.f32 0.0, %v513
        %v515 = vpop.f32.mrb[0].mxu0
        %v516 = vpop.f32.mrb[0].mxu0
        %v517 = vadd.f32 0.0, %v516
        %v518 = vpop.f32.mrb[0].mxu0
        %519 = vdwg.mxu0
        %v520 = vld [vmem:[%s4] sm:$0xff]
        %v521 = vld [vmem:[%s4 + $0x8] sm:$0xff]
        %v522 = vld [vmem:[%s5] sm:$0xff]
        %v523 = vld [vmem:[%s5 + $0x8] sm:$0xff]
        %v524 = vlaneseq
        %v525 = vshrl.u32 %v524, 7
        %v526 = vadd.s32 %v525, 8
        %v527 = vlaneseq
        %v528 = vand.u32 %v527, 127
        %vm529 = vcmp.le.s32.totalorder %v528, %v525
        %vm530 = vcmp.le.s32.totalorder %v528, %v526
        %v531 = vpack.c.bf16 %v517, %v514
        %v532 = vmul.f32 %v471, %v520
        %v533 = vmul.f32 %v475, %v521
        %536 = vrot.lane.b32.xlu0 %v522, 16
        %v537 = vpop.permute.xlu0 %536
        %538 = vrot.lane.b32.xlu0 %v523, 16
        %v539 = vpop.permute.xlu0 %538
        %v542 = vmul.f32 %v471, %v537
        %v543 = vmul.f32 %v475, %v539
        %546 = vrot.lane.b32.xlu0 %v542, 112
        %v547 = vpop.permute.xlu0 %546
        %548 = vrot.lane.b32.xlu0 %v543, 112
        %v549 = vpop.permute.xlu0 %548
        %v552 = vsub.f32 %v532, %v547
        %v553 = vsub.f32 %v533, %v549
        %556 = vrot.lane.b32.xlu0 %v520, 16
        %v557 = vpop.permute.xlu0 %556
        %558 = vrot.lane.b32.xlu0 %v521, 16
        %v559 = vpop.permute.xlu0 %558
        %v562 = vmul.f32 %v471, %v557
        %v563 = vmul.f32 %v475, %v559
        %v564 = vmul.f32 %v471, %v522
        %v565 = vmul.f32 %v475, %v523
        %568 = vrot.lane.b32.xlu0 %v564, 16
        %v569 = vpop.permute.xlu0 %568
        %570 = vrot.lane.b32.xlu0 %v565, 16
        %v571 = vpop.permute.xlu0 %570
        %v574 = vadd.f32 %v562, %v569
        %v575 = vadd.f32 %v563, %v571
        %vm576 = vcmask 130048
        %v577 = vsel %vm576, %v552, %v574
        %v578 = vsel %vm576, %v553, %v575
        %v579 = vpack.c.bf16 %v578, %v577
        %v580 = vmul.f32 %v473, %v520
        %v581 = vmul.f32 %v477, %v521
        %v582 = vmul.f32 %v473, %v537
        %v583 = vmul.f32 %v477, %v539
        %586 = vrot.lane.b32.xlu0 %v582, 112
        %v587 = vpop.permute.xlu0 %586
        %588 = vrot.lane.b32.xlu0 %v583, 112
        %v589 = vpop.permute.xlu0 %588
        %v592 = vsub.f32 %v580, %v587
        %v593 = vsub.f32 %v581, %v589
        %v594 = vmul.f32 %v473, %v557
        %v595 = vmul.f32 %v477, %v559
        %v596 = vmul.f32 %v473, %v522
        %v597 = vmul.f32 %v477, %v523
        %600 = vrot.lane.b32.xlu0 %v596, 16
        %v601 = vpop.permute.xlu0 %600
        %602 = vrot.lane.b32.xlu0 %v597, 16
        %v603 = vpop.permute.xlu0 %602
        %v606 = vadd.f32 %v594, %v601
        %v607 = vadd.f32 %v595, %v603
        %v608 = vsel %vm576, %v592, %v606
        %v609 = vsel %vm576, %v593, %v607
        %v610 = vpack.c.bf16 %v609, %v608
        %vm611 = vcmask 261120
        %v613 = vsel %vm611, %v579, 0
        %v616 = vsel %vm611, %v610, 0
        %618 = vmatprep.subr.bf16.mxu0 0
        %619 = vmatpush1.bf16.xpose.msra.mxu0 %v616
        %620 = vmatprep.subr.bf16.mxu0 0
        %621 = vmatpush1.bf16.xpose.msra.mxu0 0
        %622 = vmatprep.subr.bf16.mxu0 0
        %623 = vmatpush1.bf16.xpose.msra.mxu0 0
        %624 = vmatprep.subr.bf16.mxu0 0
        %625 = vmatpush1.bf16.xpose.msra.mxu0 0
        %626 = vmatprep.subr.bf16.mxu0 0
        %627 = vmatpush1.bf16.xpose.msra.mxu0 0
        %628 = vmatprep.subr.bf16.mxu0 0
        %629 = vmatpush1.bf16.xpose.msra.mxu0 0
        %630 = vmatprep.subr.bf16.mxu0 0
        %631 = vmatpush1.bf16.xpose.msra.mxu0 0
        %632 = vmatprep.subr.bf16.mxu0 0
        %633 = vmatpush1.bf16.xpose.msra.mxu0 0
        %634 = vmatprep.subr.bf16.mxu0 0
        %635 = vmatpush1.bf16.xpose.msra.mxu0 0
        %636 = vmatprep.subr.bf16.mxu0 0
        %637 = vmatpush1.bf16.xpose.msra.mxu0 0
        %638 = vmatprep.subr.bf16.mxu0 0
        %639 = vmatpush1.bf16.xpose.msra.mxu0 0
        %640 = vmatprep.subr.bf16.mxu0 0
        %641 = vmatpush1.bf16.xpose.msra.mxu0 0
        %642 = vmatprep.subr.bf16.mxu0 0
        %643 = vmatpush1.bf16.xpose.msra.mxu0 0
        %644 = vmatprep.subr.bf16.mxu0 0
        %645 = vmatpush1.bf16.xpose.msra.mxu0 0
        %646 = vmatprep.subr.bf16.mxu0 0
        %647 = vmatpush1.bf16.xpose.msra.mxu0 0
        %648 = vmatprep.subr.bf16.mxu0 0
        %649 = vmatpush1.bf16.xpose.msra.mxu0 0
        %650 = vmatprep.mubr.bf16.mxu0 0
        %651 = vmatmul.mubr.bf16.gmra.mrb[0].mxu0 %v613
        %v652 = vpop.f32.mrb[0].mxu0
        %v653 = vadd.f32 0.0, %v652
        %v654 = vpop.f32.mrb[0].mxu0
        %v655 = vpop.f32.mrb[0].mxu0
        %v656 = vadd.f32 0.0, %v655
        %v657 = vpop.f32.mrb[0].mxu0
        %658 = vdwg.mxu0
        %v659 = vmul.f32 %v653, 0.17677669
        %v660 = vmul.f32 %v656, 0.17677669
        %v661 = vsel %vm529, %v659, -1e+30
        %v662 = vsel %vm530, %v660, -1e+30
        %v663 = vsel %vm576, %v661, -inf
        %664 = vmax.xlane.f32.xlu0 %v663
        %v665 = vpop.xlane.xlu0 %664
        %v666 = vsel %vm576, %v662, -inf
        %667 = vmax.xlane.f32.xlu0 %v666
        %v668 = vpop.xlane.xlu0 %667
        %v669 = vsub.f32 %v661, %v665
        %v670 = vsub.f32 %v662, %v668
        %v671 = vmul.f32 %v669, 1.442695
        %v672 = vpow.pop %v671
        %v673 = vmul.f32 %v670, 1.442695
        %v674 = vpow.pop %v673
        %v675 = vsel %vm576, %v672, 0.0
        %676 = vadd.xlane.f32.xlu0 %v675
        %v677 = vpop.xlane.xlu0 %676
        %v678 = vsel %vm576, %v674, 0.0
        %679 = vadd.xlane.f32.xlu0 %v678
        %v680 = vpop.xlane.xlu0 %679
        %v681 = vrcp.pop %v677
        %v682 = vrcp.pop %v680
        %v683 = vmul.f32 %v672, %v681
        %v684 = vmul.f32 %v674, %v682
        %v685 = vpack.c.bf16 %v684, %v683
        %v687 = vsel %vm576, %v685, 0
        %689 = vmatprep.subr.bf16.mxu0 0
        %690 = vmatpush1.bf16.msra.mxu0 %v531
        %691 = vmatprep.subr.bf16.mxu0 0
        %692 = vmatpush1.bf16.msra.mxu0 0
        %693 = vmatprep.subr.bf16.mxu0 0
        %694 = vmatpush1.bf16.msra.mxu0 0
        %695 = vmatprep.subr.bf16.mxu0 0
        %696 = vmatpush1.bf16.msra.mxu0 0
        %697 = vmatprep.subr.bf16.mxu0 0
        %698 = vmatpush1.bf16.msra.mxu0 0
        %699 = vmatprep.subr.bf16.mxu0 0
        %700 = vmatpush1.bf16.msra.mxu0 0
        %701 = vmatprep.subr.bf16.mxu0 0
        %702 = vmatpush1.bf16.msra.mxu0 0
        %703 = vmatprep.subr.bf16.mxu0 0
        %704 = vmatpush1.bf16.msra.mxu0 0
        %705 = vmatprep.subr.bf16.mxu0 0
        %706 = vmatpush1.bf16.msra.mxu0 0
        %707 = vmatprep.subr.bf16.mxu0 0
        %708 = vmatpush1.bf16.msra.mxu0 0
        %709 = vmatprep.subr.bf16.mxu0 0
        %710 = vmatpush1.bf16.msra.mxu0 0
        %711 = vmatprep.subr.bf16.mxu0 0
        %712 = vmatpush1.bf16.msra.mxu0 0
        %713 = vmatprep.subr.bf16.mxu0 0
        %714 = vmatpush1.bf16.msra.mxu0 0
        %715 = vmatprep.subr.bf16.mxu0 0
        %716 = vmatpush1.bf16.msra.mxu0 0
        %717 = vmatprep.subr.bf16.mxu0 0
        %718 = vmatpush1.bf16.msra.mxu0 0
        %719 = vmatprep.subr.bf16.mxu0 0
        %720 = vmatpush1.bf16.msra.mxu0 0
        %721 = vmatprep.mubr.bf16.mxu0 0
        %722 = vmatmul.mubr.bf16.gmra.mrb[0].mxu0 %v687
        %v723 = vpop.f32.mrb[0].mxu0
        %v724 = vadd.f32 0.0, %v723
        %v725 = vpop.f32.mrb[0].mxu0
        %v726 = vpop.f32.mrb[0].mxu0
        %v727 = vadd.f32 0.0, %v726
        %v728 = vpop.f32.mrb[0].mxu0
        %729 = vdwg.mxu0
        %730 = vst.msk [vmem:[#allocation2] sm:$0xff] %vm611, %v724
        %731 = vst.msk [vmem:[#allocation2 + $0x8] sm:$0xff] %vm611, %v727
        %732 = vrot.lane.b32.xlu0 %v520, 32
        %v733 = vpop.permute.xlu0 %732
        %734 = vrot.lane.b32.xlu0 %v521, 32
        %v735 = vpop.permute.xlu0 %734
        %v738 = vmul.f32 %v471, %v733
        %v739 = vmul.f32 %v475, %v735
        %740 = vrot.lane.b32.xlu0 %v522, 48
        %v741 = vpop.permute.xlu0 %740
        %742 = vrot.lane.b32.xlu0 %v523, 48
        %v743 = vpop.permute.xlu0 %742
        %v746 = vmul.f32 %v471, %v741
        %v747 = vmul.f32 %v475, %v743
        %750 = vrot.lane.b32.xlu0 %v746, 112
        %v751 = vpop.permute.xlu0 %750
        %752 = vrot.lane.b32.xlu0 %v747, 112
        %v753 = vpop.permute.xlu0 %752
        %v756 = vsub.f32 %v738, %v751
        %v757 = vsub.f32 %v739, %v753
        %758 = vrot.lane.b32.xlu0 %v520, 48
        %v759 = vpop.permute.xlu0 %758
        %760 = vrot.lane.b32.xlu0 %v521, 48
        %v761 = vpop.permute.xlu0 %760
        %v764 = vmul.f32 %v471, %v759
        %v765 = vmul.f32 %v475, %v761
        %766 = vrot.lane.b32.xlu0 %v522, 32
        %v767 = vpop.permute.xlu0 %766
        %768 = vrot.lane.b32.xlu0 %v523, 32
        %v769 = vpop.permute.xlu0 %768
        %v772 = vmul.f32 %v471, %v767
        %v773 = vmul.f32 %v475, %v769
        %776 = vrot.lane.b32.xlu0 %v772, 16
        %v777 = vpop.permute.xlu0 %776
        %778 = vrot.lane.b32.xlu0 %v773, 16
        %v779 = vpop.permute.xlu0 %778
        %v782 = vadd.f32 %v764, %v777
        %v783 = vadd.f32 %v765, %v779
        %786 = vrot.lane.b32.xlu0 %v756, 96
        %v787 = vpop.permute.xlu0 %786
        %788 = vrot.lane.b32.xlu0 %v757, 96
        %v789 = vpop.permute.xlu0 %788
        %794 = vrot.lane.b32.xlu0 %v782, 96
        %v795 = vpop.permute.xlu0 %794
        %796 = vrot.lane.b32.xlu0 %v783, 96
        %v797 = vpop.permute.xlu0 %796
        %v800 = vsel %vm576, %v787, %v795
        %v801 = vsel %vm576, %v789, %v797
        %v802 = vpack.c.bf16 %v801, %v800
        %v803 = vmul.f32 %v473, %v733
        %v804 = vmul.f32 %v477, %v735
        %v805 = vmul.f32 %v473, %v741
        %v806 = vmul.f32 %v477, %v743
        %809 = vrot.lane.b32.xlu0 %v805, 112
        %v810 = vpop.permute.xlu0 %809
        %811 = vrot.lane.b32.xlu0 %v806, 112
        %v812 = vpop.permute.xlu0 %811
        %v815 = vsub.f32 %v803, %v810
        %v816 = vsub.f32 %v804, %v812
        %v817 = vmul.f32 %v473, %v759
        %v818 = vmul.f32 %v477, %v761
        %v819 = vmul.f32 %v473, %v767
        %v820 = vmul.f32 %v477, %v769
        %823 = vrot.lane.b32.xlu0 %v819, 16
        %v824 = vpop.permute.xlu0 %823
        %825 = vrot.lane.b32.xlu0 %v820, 16
        %v826 = vpop.permute.xlu0 %825
        %v829 = vadd.f32 %v817, %v824
        %v830 = vadd.f32 %v818, %v826
        %833 = vrot.lane.b32.xlu0 %v815, 96
        %v834 = vpop.permute.xlu0 %833
        %835 = vrot.lane.b32.xlu0 %v816, 96
        %v836 = vpop.permute.xlu0 %835
        %841 = vrot.lane.b32.xlu0 %v829, 96
        %v842 = vpop.permute.xlu0 %841
        %843 = vrot.lane.b32.xlu0 %v830, 96
        %v844 = vpop.permute.xlu0 %843
        %v847 = vsel %vm576, %v834, %v842
        %v848 = vsel %vm576, %v836, %v844
        %v849 = vpack.c.bf16 %v848, %v847
        %v851 = vsel %vm611, %v802, 0
        %v854 = vsel %vm611, %v849, 0
        %856 = vmatprep.subr.bf16.mxu0 0
        %857 = vmatpush1.bf16.xpose.msra.mxu0 %v854
        %858 = vmatprep.subr.bf16.mxu0 0
        %859 = vmatpush1.bf16.xpose.msra.mxu0 0
        %860 = vmatprep.subr.bf16.mxu0 0
        %861 = vmatpush1.bf16.xpose.msra.mxu0 0
        %862 = vmatprep.subr.bf16.mxu0 0
        %863 = vmatpush1.bf16.xpose.msra.mxu0 0
        %864 = vmatprep.subr.bf16.mxu0 0
        %865 = vmatpush1.bf16.xpose.msra.mxu0 0
        %866 = vmatprep.subr.bf16.mxu0 0
        %867 = vmatpush1.bf16.xpose.msra.mxu0 0
        %868 = vmatprep.subr.bf16.mxu0 0
        %869 = vmatpush1.bf16.xpose.msra.mxu0 0
        %870 = vmatprep.subr.bf16.mxu0 0
        %871 = vmatpush1.bf16.xpose.msra.mxu0 0
        %872 = vmatprep.subr.bf16.mxu0 0
        %873 = vmatpush1.bf16.xpose.msra.mxu0 0
        %874 = vmatprep.subr.bf16.mxu0 0
        %875 = vmatpush1.bf16.xpose.msra.mxu0 0
        %876 = vmatprep.subr.bf16.mxu0 0
        %877 = vmatpush1.bf16.xpose.msra.mxu0 0
        %878 = vmatprep.subr.bf16.mxu0 0
        %879 = vmatpush1.bf16.xpose.msra.mxu0 0
        %880 = vmatprep.subr.bf16.mxu0 0
        %881 = vmatpush1.bf16.xpose.msra.mxu0 0
        %882 = vmatprep.subr.bf16.mxu0 0
        %883 = vmatpush1.bf16.xpose.msra.mxu0 0
        %884 = vmatprep.subr.bf16.mxu0 0
        %885 = vmatpush1.bf16.xpose.msra.mxu0 0
        %886 = vmatprep.subr.bf16.mxu0 0
        %887 = vmatpush1.bf16.xpose.msra.mxu0 0
        %888 = vmatprep.mubr.bf16.mxu0 0
        %889 = vmatmul.mubr.bf16.gmra.mrb[0].mxu0 %v851
        %v890 = vpop.f32.mrb[0].mxu0
        %v891 = vadd.f32 0.0, %v890
        %v892 = vpop.f32.mrb[0].mxu0
        %v893 = vpop.f32.mrb[0].mxu0
        %v894 = vadd.f32 0.0, %v893
        %v895 = vpop.f32.mrb[0].mxu0
        %896 = vdwg.mxu0
        %v897 = vmul.f32 %v891, 0.17677669
        %v898 = vmul.f32 %v894, 0.17677669
        %v899 = vsel %vm529, %v897, -1e+30
        %v900 = vsel %vm530, %v898, -1e+30
        %v901 = vsel %vm576, %v899, -inf
        %902 = vmax.xlane.f32.xlu0 %v901
        %v903 = vpop.xlane.xlu0 %902
        %v904 = vsel %vm576, %v900, -inf
        %905 = vmax.xlane.f32.xlu0 %v904
        %v906 = vpop.xlane.xlu0 %905
        %v907 = vsub.f32 %v899, %v903
        %v908 = vsub.f32 %v900, %v906
        %v909 = vmul.f32 %v907, 1.442695
        %v910 = vpow.pop %v909
        %v911 = vmul.f32 %v908, 1.442695
        %v912 = vpow.pop %v911
        %v913 = vsel %vm576, %v910, 0.0
        %914 = vadd.xlane.f32.xlu0 %v913
        %v915 = vpop.xlane.xlu0 %914
        %v916 = vsel %vm576, %v912, 0.0
        %917 = vadd.xlane.f32.xlu0 %v916
        %v918 = vpop.xlane.xlu0 %917
        %v919 = vrcp.pop %v915
        %v920 = vrcp.pop %v918
        %v921 = vmul.f32 %v910, %v919
        %v922 = vmul.f32 %v912, %v920
        %v923 = vpack.c.bf16 %v922, %v921
        %925 = vrot.lane.b32.xlu0 %v531, 96
        %v926 = vpop.permute.xlu0 %925
        %v929 = vsel %vm576, %v923, 0
        %931 = vmatprep.subr.bf16.mxu0 0
        %932 = vmatpush1.bf16.msra.mxu0 %v926
        %933 = vmatprep.subr.bf16.mxu0 0
        %934 = vmatpush1.bf16.msra.mxu0 0
        %935 = vmatprep.subr.bf16.mxu0 0
        %936 = vmatpush1.bf16.msra.mxu0 0
        %937 = vmatprep.subr.bf16.mxu0 0
        %938 = vmatpush1.bf16.msra.mxu0 0
        %939 = vmatprep.subr.bf16.mxu0 0
        %940 = vmatpush1.bf16.msra.mxu0 0
        %941 = vmatprep.subr.bf16.mxu0 0
        %942 = vmatpush1.bf16.msra.mxu0 0
        %943 = vmatprep.subr.bf16.mxu0 0
        %944 = vmatpush1.bf16.msra.mxu0 0
        %945 = vmatprep.subr.bf16.mxu0 0
        %946 = vmatpush1.bf16.msra.mxu0 0
        %947 = vmatprep.subr.bf16.mxu0 0
        %948 = vmatpush1.bf16.msra.mxu0 0
        %949 = vmatprep.subr.bf16.mxu0 0
        %950 = vmatpush1.bf16.msra.mxu0 0
        %951 = vmatprep.subr.bf16.mxu0 0
        %952 = vmatpush1.bf16.msra.mxu0 0
        %953 = vmatprep.subr.bf16.mxu0 0
        %954 = vmatpush1.bf16.msra.mxu0 0
        %955 = vmatprep.subr.bf16.mxu0 0
        %956 = vmatpush1.bf16.msra.mxu0 0
        %957 = vmatprep.subr.bf16.mxu0 0
        %958 = vmatpush1.bf16.msra.mxu0 0
        %959 = vmatprep.subr.bf16.mxu0 0
        %960 = vmatpush1.bf16.msra.mxu0 0
        %961 = vmatprep.subr.bf16.mxu0 0
        %962 = vmatpush1.bf16.msra.mxu0 0
        %963 = vmatprep.mubr.bf16.mxu0 0
        %964 = vmatmul.mubr.bf16.gmra.mrb[0].mxu0 %v929
        %v965 = vpop.f32.mrb[0].mxu0
        %v966 = vadd.f32 0.0, %v965
        %v967 = vpop.f32.mrb[0].mxu0
        %v968 = vpop.f32.mrb[0].mxu0
        %v969 = vadd.f32 0.0, %v968
        %v970 = vpop.f32.mrb[0].mxu0
        %971 = vdwg.mxu0
        %974 = vrot.lane.b32.xlu0 %v966, 32
        %v975 = vpop.permute.xlu0 %974
        %976 = vrot.lane.b32.xlu0 %v969, 32
        %v977 = vpop.permute.xlu0 %976
        %vm980 = vcmask 523520
        %981 = vst.msk [vmem:[#allocation2] sm:$0xff] %vm980, %v975
        %982 = vst.msk [vmem:[#allocation2 + $0x8] sm:$0xff] %vm980, %v977
        %983 = vrot.lane.b32.xlu0 %v520, 64
        %v984 = vpop.permute.xlu0 %983
        %985 = vrot.lane.b32.xlu0 %v521, 64
        %v986 = vpop.permute.xlu0 %985
        %v989 = vmul.f32 %v471, %v984
        %v990 = vmul.f32 %v475, %v986
        %991 = vrot.lane.b32.xlu0 %v522, 80
        %v992 = vpop.permute.xlu0 %991
        %993 = vrot.lane.b32.xlu0 %v523, 80
        %v994 = vpop.permute.xlu0 %993
        %v997 = vmul.f32 %v471, %v992
        %v998 = vmul.f32 %v475, %v994
        %1001 = vrot.lane.b32.xlu0 %v997, 112
        %v1002 = vpop.permute.xlu0 %1001
        %1003 = vrot.lane.b32.xlu0 %v998, 112
        %v1004 = vpop.permute.xlu0 %1003
        %v1007 = vsub.f32 %v989, %v1002
        %v1008 = vsub.f32 %v990, %v1004
        %1009 = vrot.lane.b32.xlu0 %v520, 80
        %v1010 = vpop.permute.xlu0 %1009
        %1011 = vrot.lane.b32.xlu0 %v521, 80
        %v1012 = vpop.permute.xlu0 %1011
        %v1015 = vmul.f32 %v471, %v1010
        %v1016 = vmul.f32 %v475, %v1012
        %1017 = vrot.lane.b32.xlu0 %v522, 64
        %v1018 = vpop.permute.xlu0 %1017
        %1019 = vrot.lane.b32.xlu0 %v523, 64
        %v1020 = vpop.permute.xlu0 %1019
        %v1023 = vmul.f32 %v471, %v1018
        %v1024 = vmul.f32 %v475, %v1020
        %1027 = vrot.lane.b32.xlu0 %v1023, 16
        %v1028 = vpop.permute.xlu0 %1027
        %1029 = vrot.lane.b32.xlu0 %v1024, 16
        %v1030 = vpop.permute.xlu0 %1029
        %v1033 = vadd.f32 %v1015, %v1028
        %v1034 = vadd.f32 %v1016, %v1030
        %1037 = vrot.lane.b32.xlu0 %v1007, 64
        %v1038 = vpop.permute.xlu0 %1037
        %1039 = vrot.lane.b32.xlu0 %v1008, 64
        %v1040 = vpop.permute.xlu0 %1039
        %1045 = vrot.lane.b32.xlu0 %v1033, 64
        %v1046 = vpop.permute.xlu0 %1045
        %1047 = vrot.lane.b32.xlu0 %v1034, 64
        %v1048 = vpop.permute.xlu0 %1047
        %v1051 = vsel %vm576, %v1038, %v1046
        %v1052 = vsel %vm576, %v1040, %v1048
        %v1053 = vpack.c.bf16 %v1052, %v1051
        %v1054 = vmul.f32 %v473, %v984
        %v1055 = vmul.f32 %v477, %v986
        %v1056 = vmul.f32 %v473, %v992
        %v1057 = vmul.f32 %v477, %v994
        %1060 = vrot.lane.b32.xlu0 %v1056, 112
        %v1061 = vpop.permute.xlu0 %1060
        %1062 = vrot.lane.b32.xlu0 %v1057, 112
        %v1063 = vpop.permute.xlu0 %1062
        %v1066 = vsub.f32 %v1054, %v1061
        %v1067 = vsub.f32 %v1055, %v1063
        %v1068 = vmul.f32 %v473, %v1010
        %v1069 = vmul.f32 %v477, %v1012
        %v1070 = vmul.f32 %v473, %v1018
        %v1071 = vmul.f32 %v477, %v1020
        %1074 = vrot.lane.b32.xlu0 %v1070, 16
        %v1075 = vpop.permute.xlu0 %1074
        %1076 = vrot.lane.b32.xlu0 %v1071, 16
        %v1077 = vpop.permute.xlu0 %1076
        %v1080 = vadd.f32 %v1068, %v1075
        %v1081 = vadd.f32 %v1069, %v1077
        %1084 = vrot.lane.b32.xlu0 %v1066, 64
        %v1085 = vpop.permute.xlu0 %1084
        %1086 = vrot.lane.b32.xlu0 %v1067, 64
        %v1087 = vpop.permute.xlu0 %1086
        %1092 = vrot.lane.b32.xlu0 %v1080, 64
        %v1093 = vpop.permute.xlu0 %1092
        %1094 = vrot.lane.b32.xlu0 %v1081, 64
        %v1095 = vpop.permute.xlu0 %1094
        %v1098 = vsel %vm576, %v1085, %v1093
        %v1099 = vsel %vm576, %v1087, %v1095
        %v1100 = vpack.c.bf16 %v1099, %v1098
        %v1102 = vsel %vm611, %v1053, 0
        %v1105 = vsel %vm611, %v1100, 0
        %1107 = vmatprep.subr.bf16.mxu0 0
        %1108 = vmatpush1.bf16.xpose.msra.mxu0 %v1105
        %1109 = vmatprep.subr.bf16.mxu0 0
        %1110 = vmatpush1.bf16.xpose.msra.mxu0 0
        %1111 = vmatprep.subr.bf16.mxu0 0
        %1112 = vmatpush1.bf16.xpose.msra.mxu0 0
        %1113 = vmatprep.subr.bf16.mxu0 0
        %1114 = vmatpush1.bf16.xpose.msra.mxu0 0
        %1115 = vmatprep.subr.bf16.mxu0 0
        %1116 = vmatpush1.bf16.xpose.msra.mxu0 0
        %1117 = vmatprep.subr.bf16.mxu0 0
        %1118 = vmatpush1.bf16.xpose.msra.mxu0 0
        %1119 = vmatprep.subr.bf16.mxu0 0
        %1120 = vmatpush1.bf16.xpose.msra.mxu0 0
        %1121 = vmatprep.subr.bf16.mxu0 0
        %1122 = vmatpush1.bf16.xpose.msra.mxu0 0
        %1123 = vmatprep.subr.bf16.mxu0 0
        %1124 = vmatpush1.bf16.xpose.msra.mxu0 0
        %1125 = vmatprep.subr.bf16.mxu0 0
        %1126 = vmatpush1.bf16.xpose.msra.mxu0 0
        %1127 = vmatprep.subr.bf16.mxu0 0
        %1128 = vmatpush1.bf16.xpose.msra.mxu0 0
        %1129 = vmatprep.subr.bf16.mxu0 0
        %1130 = vmatpush1.bf16.xpose.msra.mxu0 0
        %1131 = vmatprep.subr.bf16.mxu0 0
        %1132 = vmatpush1.bf16.xpose.msra.mxu0 0
        %1133 = vmatprep.subr.bf16.mxu0 0
        %1134 = vmatpush1.bf16.xpose.msra.mxu0 0
        %1135 = vmatprep.subr.bf16.mxu0 0
        %1136 = vmatpush1.bf16.xpose.msra.mxu0 0
        %1137 = vmatprep.subr.bf16.mxu0 0
        %1138 = vmatpush1.bf16.xpose.msra.mxu0 0
        %1139 = vmatprep.mubr.bf16.mxu0 0
        %1140 = vmatmul.mubr.bf16.gmra.mrb[0].mxu0 %v1102
        %v1141 = vpop.f32.mrb[0].mxu0
        %v1142 = vadd.f32 0.0, %v1141
        %v1143 = vpop.f32.mrb[0].mxu0
        %v1144 = vpop.f32.mrb[0].mxu0
        %v1145 = vadd.f32 0.0, %v1144
        %v1146 = vpop.f32.mrb[0].mxu0
        %1147 = vdwg.mxu0
        %v1148 = vmul.f32 %v1142, 0.17677669
        %v1149 = vmul.f32 %v1145, 0.17677669
        %v1150 = vsel %vm529, %v1148, -1e+30
        %v1151 = vsel %vm530, %v1149, -1e+30
        %v1152 = vsel %vm576, %v1150, -inf
        %1153 = vmax.xlane.f32.xlu0 %v1152
        %v1154 = vpop.xlane.xlu0 %1153
        %v1155 = vsel %vm576, %v1151, -inf
        %1156 = vmax.xlane.f32.xlu0 %v1155
        %v1157 = vpop.xlane.xlu0 %1156
        %v1158 = vsub.f32 %v1150, %v1154
        %v1159 = vsub.f32 %v1151, %v1157
        %v1160 = vmul.f32 %v1158, 1.442695
        %v1161 = vpow.pop %v1160
        %v1162 = vmul.f32 %v1159, 1.442695
        %v1163 = vpow.pop %v1162
        %v1164 = vsel %vm576, %v1161, 0.0
        %1165 = vadd.xlane.f32.xlu0 %v1164
        %v1166 = vpop.xlane.xlu0 %1165
        %v1167 = vsel %vm576, %v1163, 0.0
        %1168 = vadd.xlane.f32.xlu0 %v1167
        %v1169 = vpop.xlane.xlu0 %1168
        %v1170 = vrcp.pop %v1166
        %v1171 = vrcp.pop %v1169
        %v1172 = vmul.f32 %v1161, %v1170
        %v1173 = vmul.f32 %v1163, %v1171
        %v1174 = vpack.c.bf16 %v1173, %v1172
        %1175 = vrot.lane.b32.xlu0 %v531, 64
        %v1176 = vpop.permute.xlu0 %1175
        %v1179 = vsel %vm576, %v1174, 0
        %1181 = vmatprep.subr.bf16.mxu0 0
        %1182 = vmatpush1.bf16.msra.mxu0 %v1176
        %1183 = vmatprep.subr.bf16.mxu0 0
        %1184 = vmatpush1.bf16.msra.mxu0 0
        %1185 = vmatprep.subr.bf16.mxu0 0
        %1186 = vmatpush1.bf16.msra.mxu0 0
        %1187 = vmatprep.subr.bf16.mxu0 0
        %1188 = vmatpush1.bf16.msra.mxu0 0
        %1189 = vmatprep.subr.bf16.mxu0 0
        %1190 = vmatpush1.bf16.msra.mxu0 0
        %1191 = vmatprep.subr.bf16.mxu0 0
        %1192 = vmatpush1.bf16.msra.mxu0 0
        %1193 = vmatprep.subr.bf16.mxu0 0
        %1194 = vmatpush1.bf16.msra.mxu0 0
        %1195 = vmatprep.subr.bf16.mxu0 0
        %1196 = vmatpush1.bf16.msra.mxu0 0
        %1197 = vmatprep.subr.bf16.mxu0 0
        %1198 = vmatpush1.bf16.msra.mxu0 0
        %1199 = vmatprep.subr.bf16.mxu0 0
        %1200 = vmatpush1.bf16.msra.mxu0 0
        %1201 = vmatprep.subr.bf16.mxu0 0
        %1202 = vmatpush1.bf16.msra.mxu0 0
        %1203 = vmatprep.subr.bf16.mxu0 0
        %1204 = vmatpush1.bf16.msra.mxu0 0
        %1205 = vmatprep.subr.bf16.mxu0 0
        %1206 = vmatpush1.bf16.msra.mxu0 0
        %1207 = vmatprep.subr.bf16.mxu0 0
        %1208 = vmatpush1.bf16.msra.mxu0 0
        %1209 = vmatprep.subr.bf16.mxu0 0
        %1210 = vmatpush1.bf16.msra.mxu0 0
        %1211 = vmatprep.subr.bf16.mxu0 0
        %1212 = vmatpush1.bf16.msra.mxu0 0
        %1213 = vmatprep.mubr.bf16.mxu0 0
        %1214 = vmatmul.mubr.bf16.gmra.mrb[0].mxu0 %v1179
        %v1215 = vpop.f32.mrb[0].mxu0
        %v1216 = vadd.f32 0.0, %v1215
        %v1217 = vpop.f32.mrb[0].mxu0
        %v1218 = vpop.f32.mrb[0].mxu0
        %v1219 = vadd.f32 0.0, %v1218
        %v1220 = vpop.f32.mrb[0].mxu0
        %1221 = vdwg.mxu0
        %1224 = vrot.lane.b32.xlu0 %v1216, 64
        %v1225 = vpop.permute.xlu0 %1224
        %1226 = vrot.lane.b32.xlu0 %v1219, 64
        %v1227 = vpop.permute.xlu0 %1226
        %vm1230 = vcmask 785920
        %1231 = vst.msk [vmem:[#allocation2] sm:$0xff] %vm1230, %v1225
        %1232 = vst.msk [vmem:[#allocation2 + $0x8] sm:$0xff] %vm1230, %v1227
        %1233 = vrot.lane.b32.xlu0 %v520, 96
        %v1234 = vpop.permute.xlu0 %1233
        %1235 = vrot.lane.b32.xlu0 %v521, 96
        %v1236 = vpop.permute.xlu0 %1235
        %v1239 = vmul.f32 %v471, %v1234
        %v1240 = vmul.f32 %v475, %v1236
        %1241 = vrot.lane.b32.xlu0 %v522, 112
        %v1242 = vpop.permute.xlu0 %1241
        %1243 = vrot.lane.b32.xlu0 %v523, 112
        %v1244 = vpop.permute.xlu0 %1243
        %v1247 = vmul.f32 %v471, %v1242
        %v1248 = vmul.f32 %v475, %v1244
        %1251 = vrot.lane.b32.xlu0 %v1247, 112
        %v1252 = vpop.permute.xlu0 %1251
        %1253 = vrot.lane.b32.xlu0 %v1248, 112
        %v1254 = vpop.permute.xlu0 %1253
        %v1257 = vsub.f32 %v1239, %v1252
        %v1258 = vsub.f32 %v1240, %v1254
        %1259 = vrot.lane.b32.xlu0 %v520, 112
        %v1260 = vpop.permute.xlu0 %1259
        %1261 = vrot.lane.b32.xlu0 %v521, 112
        %v1262 = vpop.permute.xlu0 %1261
        %v1265 = vmul.f32 %v471, %v1260
        %v1266 = vmul.f32 %v475, %v1262
        %1267 = vrot.lane.b32.xlu0 %v522, 96
        %v1268 = vpop.permute.xlu0 %1267
        %1269 = vrot.lane.b32.xlu0 %v523, 96
        %v1270 = vpop.permute.xlu0 %1269
        %v1273 = vmul.f32 %v471, %v1268
        %v1274 = vmul.f32 %v475, %v1270
        %1277 = vrot.lane.b32.xlu0 %v1273, 16
        %v1278 = vpop.permute.xlu0 %1277
        %1279 = vrot.lane.b32.xlu0 %v1274, 16
        %v1280 = vpop.permute.xlu0 %1279
        %v1283 = vadd.f32 %v1265, %v1278
        %v1284 = vadd.f32 %v1266, %v1280
        %1287 = vrot.lane.b32.xlu0 %v1257, 32
        %v1288 = vpop.permute.xlu0 %1287
        %1289 = vrot.lane.b32.xlu0 %v1258, 32
        %v1290 = vpop.permute.xlu0 %1289
        %1295 = vrot.lane.b32.xlu0 %v1283, 32
        %v1296 = vpop.permute.xlu0 %1295
        %1297 = vrot.lane.b32.xlu0 %v1284, 32
        %v1298 = vpop.permute.xlu0 %1297
        %v1301 = vsel %vm576, %v1288, %v1296
        %v1302 = vsel %vm576, %v1290, %v1298
        %v1303 = vpack.c.bf16 %v1302, %v1301
        %v1304 = vmul.f32 %v473, %v1234
        %v1305 = vmul.f32 %v477, %v1236
        %v1306 = vmul.f32 %v473, %v1242
        %v1307 = vmul.f32 %v477, %v1244
        %1310 = vrot.lane.b32.xlu0 %v1306, 112
        %v1311 = vpop.permute.xlu0 %1310
        %1312 = vrot.lane.b32.xlu0 %v1307, 112
        %v1313 = vpop.permute.xlu0 %1312
        %v1316 = vsub.f32 %v1304, %v1311
        %v1317 = vsub.f32 %v1305, %v1313
        %v1318 = vmul.f32 %v473, %v1260
        %v1319 = vmul.f32 %v477, %v1262
        %v1320 = vmul.f32 %v473, %v1268
        %v1321 = vmul.f32 %v477, %v1270
        %1324 = vrot.lane.b32.xlu0 %v1320, 16
        %v1325 = vpop.permute.xlu0 %1324
        %1326 = vrot.lane.b32.xlu0 %v1321, 16
        %v1327 = vpop.permute.xlu0 %1326
        %v1330 = vadd.f32 %v1318, %v1325
        %v1331 = vadd.f32 %v1319, %v1327
        %1334 = vrot.lane.b32.xlu0 %v1316, 32
        %v1335 = vpop.permute.xlu0 %1334
        %1336 = vrot.lane.b32.xlu0 %v1317, 32
        %v1337 = vpop.permute.xlu0 %1336
        %1342 = vrot.lane.b32.xlu0 %v1330, 32
        %v1343 = vpop.permute.xlu0 %1342
        %1344 = vrot.lane.b32.xlu0 %v1331, 32
        %v1345 = vpop.permute.xlu0 %1344
        %v1348 = vsel %vm576, %v1335, %v1343
        %v1349 = vsel %vm576, %v1337, %v1345
        %v1350 = vpack.c.bf16 %v1349, %v1348
        %v1352 = vsel %vm611, %v1303, 0
        %v1355 = vsel %vm611, %v1350, 0
        %1357 = vmatprep.subr.bf16.mxu0 0
        %1358 = vmatpush1.bf16.xpose.msra.mxu0 %v1355
        %1359 = vmatprep.subr.bf16.mxu0 0
        %1360 = vmatpush1.bf16.xpose.msra.mxu0 0
        %1361 = vmatprep.subr.bf16.mxu0 0
        %1362 = vmatpush1.bf16.xpose.msra.mxu0 0
        %1363 = vmatprep.subr.bf16.mxu0 0
        %1364 = vmatpush1.bf16.xpose.msra.mxu0 0
        %1365 = vmatprep.subr.bf16.mxu0 0
        %1366 = vmatpush1.bf16.xpose.msra.mxu0 0
        %1367 = vmatprep.subr.bf16.mxu0 0
        %1368 = vmatpush1.bf16.xpose.msra.mxu0 0
        %1369 = vmatprep.subr.bf16.mxu0 0
        %1370 = vmatpush1.bf16.xpose.msra.mxu0 0
        %1371 = vmatprep.subr.bf16.mxu0 0
        %1372 = vmatpush1.bf16.xpose.msra.mxu0 0
        %1373 = vmatprep.subr.bf16.mxu0 0
        %1374 = vmatpush1.bf16.xpose.msra.mxu0 0
        %1375 = vmatprep.subr.bf16.mxu0 0
        %1376 = vmatpush1.bf16.xpose.msra.mxu0 0
        %1377 = vmatprep.subr.bf16.mxu0 0
        %1378 = vmatpush1.bf16.xpose.msra.mxu0 0
        %1379 = vmatprep.subr.bf16.mxu0 0
        %1380 = vmatpush1.bf16.xpose.msra.mxu0 0
        %1381 = vmatprep.subr.bf16.mxu0 0
        %1382 = vmatpush1.bf16.xpose.msra.mxu0 0
        %1383 = vmatprep.subr.bf16.mxu0 0
        %1384 = vmatpush1.bf16.xpose.msra.mxu0 0
        %1385 = vmatprep.subr.bf16.mxu0 0
        %1386 = vmatpush1.bf16.xpose.msra.mxu0 0
        %1387 = vmatprep.subr.bf16.mxu0 0
        %1388 = vmatpush1.bf16.xpose.msra.mxu0 0
        %1389 = vmatprep.mubr.bf16.mxu0 0
        %1390 = vmatmul.mubr.bf16.gmra.mrb[0].mxu0 %v1352
        %v1391 = vpop.f32.mrb[0].mxu0
        %v1392 = vadd.f32 0.0, %v1391
        %v1393 = vpop.f32.mrb[0].mxu0
        %v1394 = vpop.f32.mrb[0].mxu0
        %v1395 = vadd.f32 0.0, %v1394
        %v1396 = vpop.f32.mrb[0].mxu0
        %1397 = vdwg.mxu0
        %v1398 = vmul.f32 %v1392, 0.17677669
        %v1399 = vmul.f32 %v1395, 0.17677669
        %v1400 = vsel %vm529, %v1398, -1e+30
        %v1401 = vsel %vm530, %v1399, -1e+30
        %v1402 = vsel %vm576, %v1400, -inf
        %1403 = vmax.xlane.f32.xlu0 %v1402
        %v1404 = vpop.xlane.xlu0 %1403
        %v1405 = vsel %vm576, %v1401, -inf
        %1406 = vmax.xlane.f32.xlu0 %v1405
        %v1407 = vpop.xlane.xlu0 %1406
        %v1408 = vsub.f32 %v1400, %v1404
        %v1409 = vsub.f32 %v1401, %v1407
        %v1410 = vmul.f32 %v1408, 1.442695
        %v1411 = vpow.pop %v1410
        %v1412 = vmul.f32 %v1409, 1.442695
        %v1413 = vpow.pop %v1412
        %v1414 = vsel %vm576, %v1411, 0.0
        %1415 = vadd.xlane.f32.xlu0 %v1414
        %v1416 = vpop.xlane.xlu0 %1415
        %v1417 = vsel %vm576, %v1413, 0.0
        %1418 = vadd.xlane.f32.xlu0 %v1417
        %v1419 = vpop.xlane.xlu0 %1418
        %v1420 = vrcp.pop %v1416
        %v1421 = vrcp.pop %v1419
        %v1422 = vmul.f32 %v1411, %v1420
        %v1423 = vmul.f32 %v1413, %v1421
        %v1424 = vpack.c.bf16 %v1423, %v1422
        %1425 = vrot.lane.b32.xlu0 %v531, 32
        %v1426 = vpop.permute.xlu0 %1425
        %v1429 = vsel %vm576, %v1424, 0
        %1431 = vmatprep.subr.bf16.mxu0 0
        %1432 = vmatpush1.bf16.msra.mxu0 %v1426
        %1433 = vmatprep.subr.bf16.mxu0 0
        %1434 = vmatpush1.bf16.msra.mxu0 0
        %1435 = vmatprep.subr.bf16.mxu0 0
        %1436 = vmatpush1.bf16.msra.mxu0 0
        %1437 = vmatprep.subr.bf16.mxu0 0
        %1438 = vmatpush1.bf16.msra.mxu0 0
        %1439 = vmatprep.subr.bf16.mxu0 0
        %1440 = vmatpush1.bf16.msra.mxu0 0
        %1441 = vmatprep.subr.bf16.mxu0 0
        %1442 = vmatpush1.bf16.msra.mxu0 0
        %1443 = vmatprep.subr.bf16.mxu0 0
        %1444 = vmatpush1.bf16.msra.mxu0 0
        %1445 = vmatprep.subr.bf16.mxu0 0
        %1446 = vmatpush1.bf16.msra.mxu0 0
        %1447 = vmatprep.subr.bf16.mxu0 0
        %1448 = vmatpush1.bf16.msra.mxu0 0
        %1449 = vmatprep.subr.bf16.mxu0 0
        %1450 = vmatpush1.bf16.msra.mxu0 0
        %1451 = vmatprep.subr.bf16.mxu0 0
        %1452 = vmatpush1.bf16.msra.mxu0 0
        %1453 = vmatprep.subr.bf16.mxu0 0
        %1454 = vmatpush1.bf16.msra.mxu0 0
        %1455 = vmatprep.subr.bf16.mxu0 0
        %1456 = vmatpush1.bf16.msra.mxu0 0
        %1457 = vmatprep.subr.bf16.mxu0 0
        %1458 = vmatpush1.bf16.msra.mxu0 0
        %1459 = vmatprep.subr.bf16.mxu0 0
        %1460 = vmatpush1.bf16.msra.mxu0 0
        %1461 = vmatprep.subr.bf16.mxu0 0
        %1462 = vmatpush1.bf16.msra.mxu0 0
        %1463 = vmatprep.mubr.bf16.mxu0 0
        %1464 = vmatmul.mubr.bf16.gmra.mrb[0].mxu0 %v1429
        %v1465 = vpop.f32.mrb[0].mxu0
        %v1466 = vadd.f32 0.0, %v1465
        %v1467 = vpop.f32.mrb[0].mxu0
        %v1468 = vpop.f32.mrb[0].mxu0
        %v1469 = vadd.f32 0.0, %v1468
        %v1470 = vpop.f32.mrb[0].mxu0
        %1471 = vdwg.mxu0
        %1474 = vrot.lane.b32.xlu0 %v1466, 96
        %v1475 = vpop.permute.xlu0 %1474
        %1476 = vrot.lane.b32.xlu0 %v1469, 96
        %v1477 = vpop.permute.xlu0 %1476
        %vm1480 = vcmask 1048320
        %1481 = vst.msk [vmem:[#allocation2] sm:$0xff] %vm1480, %v1475
        %1482 = vst.msk [vmem:[#allocation2 + $0x8] sm:$0xff] %vm1480, %v1477
        %v1483 = vld [vmem:[#allocation2] sm:$0xff]
        %v1484 = vld [vmem:[#allocation2 + $0x8] sm:$0xff]
        %v1485 = vpack.c.bf16 %v1484, %v1483
        %v1486 = vld [vmem:[#allocation3] sm:$0xf]
        %v1487 = vld [vmem:[#allocation3 + $0x4] sm:$0xf]
        %v1488 = vld [vmem:[#allocation3 + $0x8] sm:$0xf]
        %v1489 = vld [vmem:[#allocation3 + $0xc] sm:$0xf]
        %v1490 = vld [vmem:[#allocation3 + $0x10] sm:$0xf]
        %v1491 = vld [vmem:[#allocation3 + $0x14] sm:$0xf]
        %v1492 = vld [vmem:[#allocation3 + $0x18] sm:$0xf]
        %v1493 = vld [vmem:[#allocation3 + $0x1c] sm:$0xf]
        %v1494 = vld [vmem:[#allocation3 + $0x20] sm:$0xf]
        %v1495 = vld [vmem:[#allocation3 + $0x24] sm:$0xf]
        %v1496 = vld [vmem:[#allocation3 + $0x28] sm:$0xf]
        %v1497 = vld [vmem:[#allocation3 + $0x2c] sm:$0xf]
        %v1498 = vld [vmem:[#allocation3 + $0x30] sm:$0xf]
        %v1499 = vld [vmem:[#allocation3 + $0x34] sm:$0xf]
        %v1500 = vld [vmem:[#allocation3 + $0x38] sm:$0xf]
        %v1501 = vld [vmem:[#allocation3 + $0x3c] sm:$0xf]
        %v1518 = vunpack.c.l.b16 %v1486
        %v1519 = vunpack.c.l.b16 %v1487
        %v1520 = vunpack.c.l.b16 %v1488
        %v1521 = vunpack.c.l.b16 %v1489
        %v1522 = vunpack.c.l.b16 %v1490
        %v1523 = vunpack.c.l.b16 %v1491
        %v1524 = vunpack.c.l.b16 %v1492
        %v1525 = vunpack.c.l.b16 %v1493
        %v1526 = vunpack.c.l.b16 %v1494
        %v1527 = vunpack.c.l.b16 %v1495
        %v1528 = vunpack.c.l.b16 %v1496
        %v1529 = vunpack.c.l.b16 %v1497
        %v1530 = vunpack.c.l.b16 %v1498
        %v1531 = vunpack.c.l.b16 %v1499
        %v1532 = vunpack.c.l.b16 %v1500
        %v1533 = vunpack.c.l.b16 %v1501
        %v1534 = vpack.c.b16 %v1519, %v1518
        %v1535 = vpack.c.b16 %v1521, %v1520
        %v1536 = vpack.c.b16 %v1523, %v1522
        %v1537 = vpack.c.b16 %v1525, %v1524
        %v1538 = vpack.c.b16 %v1527, %v1526
        %v1539 = vpack.c.b16 %v1529, %v1528
        %v1540 = vpack.c.b16 %v1531, %v1530
        %v1541 = vpack.c.b16 %v1533, %v1532
        %1550 = vmatprep.subr.bf16.mxu0 0
        %1551 = vmatpush1.bf16.msra.mxu0 %v1534
        %1552 = vmatprep.subr.bf16.mxu0 0
        %1553 = vmatpush1.bf16.msra.mxu0 %v1535
        %1554 = vmatprep.subr.bf16.mxu0 0
        %1555 = vmatpush1.bf16.msra.mxu0 %v1536
        %1556 = vmatprep.subr.bf16.mxu0 0
        %1557 = vmatpush1.bf16.msra.mxu0 %v1537
        %1558 = vmatprep.subr.bf16.mxu0 0
        %1559 = vmatpush1.bf16.msra.mxu0 %v1538
        %1560 = vmatprep.subr.bf16.mxu0 0
        %1561 = vmatpush1.bf16.msra.mxu0 %v1539
        %1562 = vmatprep.subr.bf16.mxu0 0
        %1563 = vmatpush1.bf16.msra.mxu0 %v1540
        %1564 = vmatprep.subr.bf16.mxu0 0
        %1565 = vmatpush1.bf16.msra.mxu0 %v1541
        %1566 = vmatprep.subr.bf16.mxu0 0
        %1567 = vmatpush1.bf16.msra.mxu0 0
        %1568 = vmatprep.subr.bf16.mxu0 0
        %1569 = vmatpush1.bf16.msra.mxu0 0
        %1570 = vmatprep.subr.bf16.mxu0 0
        %1571 = vmatpush1.bf16.msra.mxu0 0
        %1572 = vmatprep.subr.bf16.mxu0 0
        %1573 = vmatpush1.bf16.msra.mxu0 0
        %1574 = vmatprep.subr.bf16.mxu0 0
        %1575 = vmatpush1.bf16.msra.mxu0 0
        %1576 = vmatprep.subr.bf16.mxu0 0
        %1577 = vmatpush1.bf16.msra.mxu0 0
        %1578 = vmatprep.subr.bf16.mxu0 0
        %1579 = vmatpush1.bf16.msra.mxu0 0
        %1580 = vmatprep.subr.bf16.mxu0 0
        %1581 = vmatpush1.bf16.msra.mxu0 0
        %1582 = vmatprep.mubr.bf16.mxu0 0
        %1583 = vmatmul.mubr.bf16.gmra.mrb[0].mxu0 %v1485
        %v1584 = vpop.f32.mrb[0].mxu0
        %v1585 = vadd.f32 0.0, %v1584
        %v1586 = vpop.f32.mrb[0].mxu0
        %v1587 = vpop.f32.mrb[0].mxu0
        %v1588 = vadd.f32 0.0, %v1587
        %v1589 = vpop.f32.mrb[0].mxu0
        %1590 = vdwg.mxu0
        %v1591 = vmul.f32 %v1585, %v1585
        %v1592 = vmul.f32 %v1588, %v1588
        %1593 = vadd.xlane.f32.xlu0 %v1591
        %v1594 = vpop.xlane.xlu0 %1593
        %1595 = vadd.xlane.f32.xlu0 %v1592
        %v1596 = vpop.xlane.xlu0 %1595
        %v1597 = vrcp.pop 128.0
        %v1598 = vmul.f32 %v1594, %v1597
        %v1599 = vmul.f32 %v1596, %v1597
        %v1600 = vunpack.c.l.bf16 %v268
        %v1601 = vunpack.c.l.bf16 %v269
        %v1602 = vadd.f32 %v1598, 1e-05
        %v1603 = vadd.f32 %v1599, 1e-05
        %v1604 = vrsqrt.pop %v1602
        %v1605 = vrsqrt.pop %v1603
        %v1606 = vmul.f32 %v1585, %v1604
        %v1607 = vmul.f32 %v1588, %v1605
        %v1608 = vld [vmem:[%s3] sm:$0x1]
        %v1610 = vlaneseq
        %v1611 = vshrl.u32 %v1610, 7
        %v1612 = vsub.s32 0, %v1611
        %v1613 = vrot.slane %v1608, %v1612
        %v1615 = vmul.f32 %v1606, %v1613
        %v1616 = vmul.f32 %v1607, %v1613
        %v1617 = vadd.f32 %v1600, %v1615
        %v1618 = vadd.f32 %v1601, %v1616
        %v1619 = vpack.c.bf16 %v1618, %v1617
        %v1621 = vunpack.c.l.b16 %v1619
        %v1622 = vunpack.c.h.b16 %v1619
        %v1623 = vpack.c.b16 %v1621, %v1621
        %v1624 = vpack.c.b16 %v1622, %v1622
        %1627 = vst [vmem:[%s266] sm:$0xf] %v1623
        %1628 = vst [vmem:[%s266 + $0x4] sm:$0xf] %v1624
        %p1629 = scmp.lt.s32.totalorder %s18, 1
        %s1630 = scalar_select %p1629, %s18, 1
        %s1631 = smul.addr %s1630, 2
        %s1632 = smul.addr %s1631, 4
        %s1633 = scalar_lea.vmem %s6, %s1632
        // Predicated region
        $region49: #{transformer_forward.5} parent=43 // pred_check
          %p1634 = pneg %p167
        $region50: #{transformer_forward.5} parent=43 // pred_check_branch
          %1636 = sbr.rel (%p1634) target = $region52
        $region51: #{transformer_forward.5} parent=43 // pred_region
          _
        $region52: #{transformer_forward.5} parent=43 // pred_fallthru
          _
      $region44: #{transformer_forward.5} parent=5 // pred_fallthru
        _
      %p1637 = scmp.le.s32.totalorder 2, %s13
      // Predicated region
      $region53: #{transformer_forward.5} parent=5 // pred_check
        %p1638 = pneg %p1637
      $region54: #{transformer_forward.5} parent=5 // pred_check_branch
        %1640 = sbr.rel (%p1638) target = $region56
      $region55: #{transformer_forward.5} parent=5 // pred_region
        %s1641 = ssub.s32 %s13, 2
        // Predicated region
        $region57: #{transformer_forward.5} parent=55 // pred_check
          %p1642 = pneg %p173
        $region58: #{transformer_forward.5} parent=55 // pred_check_branch
          %1644 = sbr.rel (%p1642) target = $region60
        $region59: #{transformer_forward.5} parent=55 // pred_region
          %p1645 = scmp.lt.s32.totalorder %s19, 1
          %s1646 = scalar_select %p1645, %s19, 1
          %s1647 = smul.addr %s1646, 2
          %s1648 = smul.addr %s1647, 4
          %s1649 = scalar_lea.vmem %s6, %s1648
        $region60: #{transformer_forward.5} parent=55 // pred_fallthru
          _
      $region56: #{transformer_forward.5} parent=5 // pred_fallthru
        _
    $region6: #{transformer_forward.5} parent=1 // loop_footer
      %s17 = sadd.s32 1, %s13
    $region7: #{transformer_forward.5} parent=1 // loop_footer_branch
      %12 = sbr.rel target = $region3
    $region8: #{transformer_forward.5} parent=1 // loop_exit
      _
    %1650 = vsyncpa [#allocation4], 1
    %s1651 = scalar_lea.sflag [#allocation4], 1
    %1652 = vsyncpa %s1651, 1

// kernel: transformer_forward.7
$region0: #{transformer_forward.7}
  #allocation0 [shape = 'u32[]', space=smem, size = 0x4, offset = 0x4, fixed_abs, tag = 'smem constant byte address 0x4 - core index']
  #allocation1 [shape = 'u32[144,128]{1,0:T(1,128)}', space=vmem, size = 0x12000, scoped, tag = 'internal scratch']
  #allocation2 [shape = 'f32[16,128]{1,0:T(8,128)}', space=vmem, size = 0x2000, scoped, tag = 'scratch operand']
  %s0 = inlined_call_operand.vmem [shape: bf16[2,16,128], index: 0, kind: input, shape index: {}]
  %s1 = inlined_call_operand.vmem [shape: bf16[128,384], index: 1, kind: input, shape index: {}]
  %s2 = inlined_call_operand.vmem [shape: bf16[128,128], index: 2, kind: input, shape index: {}]
  %s3 = inlined_call_operand.vmem [shape: f32[1,128], index: 3, kind: input, shape index: {}]
  %s4 = inlined_call_operand.vmem [shape: f32[16,16], index: 4, kind: input, shape index: {}]
  %s5 = inlined_call_operand.vmem [shape: f32[16,16], index: 5, kind: input, shape index: {}]
  %s6 = inlined_call_operand.vmem [shape: bf16[2,16,128], index: 6, kind: output, shape index: {}]
  %s7 = sld [smem:[#allocation0]]
  $region57: #{transformer_forward.7} parent=0
    _
  %s9 = ssub.s32 1, %s7
  %s10 = scalar_select 0, %s9, %s7
  loop: start=0, step=1, limit=4
  $region2: #{transformer_forward.7} parent=0 // loop_pre_header
    _
  $region3: #{transformer_forward.7} parent=0 // loop_header
    %s12 = sphi 0, %s16
    %p13 = scmp.ge.s32.totalorder %s12, 4
    %s22 = sphi 0, %s24
    %s25 = sphi 0, %s22
    %s26 = sphi 0, %s25
    %s42 = sphi 0, %s26
    %s46 = sphi 0, %s46
    %s48 = sphi 0, %s46
    %s49 = sphi 0, %s48
    %s63 = sphi 0, %s49
    %s67 = sphi 0, %s67
    %s69 = sphi 0, %s67
    %s70 = sphi 0, %s69
    %s84 = sphi 0, %s70
    %s88 = sphi 0, %s88
    %s90 = sphi 0, %s88
    %s91 = sphi 0, %s90
    %s105 = sphi 0, %s91
    %s109 = sphi 0, %s109
    %s111 = sphi 0, %s109
    %s112 = sphi 0, %s111
    %s126 = sphi 0, %s112
    %s130 = sphi 0, %s130
    %s132 = sphi 0, %s130
    %s133 = sphi 0, %s132
    %s147 = sphi 0, %s133
    %s153 = sphi 0, %s155
    %s156 = sphi 0, %s153
    %s157 = sphi 0, %s156
    %s173 = sphi 0, %s157
  $region4: #{transformer_forward.7} parent=0 // loop_header_branch
    %15 = sbr.rel (%p13) target = $region8
  $region5: #{transformer_forward.7} parent=0 // loop_body
    %s17 = ssub.s32 %s12, 1
    %s18 = ssub.s32 %s12, 2
    %s19 = sadd.s32 %s12, 1
    %s20 = ssub.s32 %s12, %s19
    %p21 = scmp.eq.s32.totalorder %s20, 0
    %s23 = sadd.s32 %s22, 1
    %s24 = scalar_select %p21, %s22, %s23
    %p27 = pneg %p21
    %p28 = scmp.eq.s32.totalorder %s12, 1
    %p29 = por %p27, %p28
    %p30 = scmp.ne.s32.totalorder %s22, %s25
    %p31 = scmp.eq.s32.totalorder %s12, 0
    %p32 = por %p30, %p31
    %p33 = scmp.ne.s32.totalorder %s22, %s25
    %p34 = scmp.eq.s32.totalorder %s17, 1
    %p35 = por %p33, %p34
    %p36 = scmp.ne.s32.totalorder %s25, %s26
    %p37 = scmp.eq.s32.totalorder %s17, 0
    %p38 = por %p36, %p37
    %p39 = scmp.ne.s32.totalorder %s25, %s26
    %p40 = scmp.eq.s32.totalorder %s18, 1
    %p41 = por %p39, %p40
    %p43 = scmp.ne.s32.totalorder %s26, %s42
    %p44 = scmp.eq.s32.totalorder %s18, 0
    %p45 = por %p43, %p44
    %s47 = sadd.s32 %s46, 1
    %p50 = scmp.eq.s32.totalorder %s12, 1
    %p51 = scmp.ne.s32.totalorder %s46, %s48
    %p52 = scmp.eq.s32.totalorder %s12, 0
    %p53 = por %p51, %p52
    %p54 = scmp.ne.s32.totalorder %s46, %s48
    %p55 = scmp.eq.s32.totalorder %s17, 1
    %p56 = por %p54, %p55
    %p57 = scmp.ne.s32.totalorder %s48, %s49
    %p58 = scmp.eq.s32.totalorder %s17, 0
    %p59 = por %p57, %p58
    %p60 = scmp.ne.s32.totalorder %s48, %s49
    %p61 = scmp.eq.s32.totalorder %s18, 1
    %p62 = por %p60, %p61
    %p64 = scmp.ne.s32.totalorder %s49, %s63
    %p65 = scmp.eq.s32.totalorder %s18, 0
    %p66 = por %p64, %p65
    %s68 = sadd.s32 %s67, 1
    %p71 = scmp.eq.s32.totalorder %s12, 1
    %p72 = scmp.ne.s32.totalorder %s67, %s69
    %p73 = scmp.eq.s32.totalorder %s12, 0
    %p74 = por %p72, %p73
    %p75 = scmp.ne.s32.totalorder %s67, %s69
    %p76 = scmp.eq.s32.totalorder %s17, 1
    %p77 = por %p75, %p76
    %p78 = scmp.ne.s32.totalorder %s69, %s70
    %p79 = scmp.eq.s32.totalorder %s17, 0
    %p80 = por %p78, %p79
    %p81 = scmp.ne.s32.totalorder %s69, %s70
    %p82 = scmp.eq.s32.totalorder %s18, 1
    %p83 = por %p81, %p82
    %p85 = scmp.ne.s32.totalorder %s70, %s84
    %p86 = scmp.eq.s32.totalorder %s18, 0
    %p87 = por %p85, %p86
    %s89 = sadd.s32 %s88, 1
    %p92 = scmp.eq.s32.totalorder %s12, 1
    %p93 = scmp.ne.s32.totalorder %s88, %s90
    %p94 = scmp.eq.s32.totalorder %s12, 0
    %p95 = por %p93, %p94
    %p96 = scmp.ne.s32.totalorder %s88, %s90
    %p97 = scmp.eq.s32.totalorder %s17, 1
    %p98 = por %p96, %p97
    %p99 = scmp.ne.s32.totalorder %s90, %s91
    %p100 = scmp.eq.s32.totalorder %s17, 0
    %p101 = por %p99, %p100
    %p102 = scmp.ne.s32.totalorder %s90, %s91
    %p103 = scmp.eq.s32.totalorder %s18, 1
    %p104 = por %p102, %p103
    %p106 = scmp.ne.s32.totalorder %s91, %s105
    %p107 = scmp.eq.s32.totalorder %s18, 0
    %p108 = por %p106, %p107
    %s110 = sadd.s32 %s109, 1
    %p113 = scmp.eq.s32.totalorder %s12, 1
    %p114 = scmp.ne.s32.totalorder %s109, %s111
    %p115 = scmp.eq.s32.totalorder %s12, 0
    %p116 = por %p114, %p115
    %p117 = scmp.ne.s32.totalorder %s109, %s111
    %p118 = scmp.eq.s32.totalorder %s17, 1
    %p119 = por %p117, %p118
    %p120 = scmp.ne.s32.totalorder %s111, %s112
    %p121 = scmp.eq.s32.totalorder %s17, 0
    %p122 = por %p120, %p121
    %p123 = scmp.ne.s32.totalorder %s111, %s112
    %p124 = scmp.eq.s32.totalorder %s18, 1
    %p125 = por %p123, %p124
    %p127 = scmp.ne.s32.totalorder %s112, %s126
    %p128 = scmp.eq.s32.totalorder %s18, 0
    %p129 = por %p127, %p128
    %s131 = sadd.s32 %s130, 1
    %p134 = scmp.eq.s32.totalorder %s12, 1
    %p135 = scmp.ne.s32.totalorder %s130, %s132
    %p136 = scmp.eq.s32.totalorder %s12, 0
    %p137 = por %p135, %p136
    %p138 = scmp.ne.s32.totalorder %s130, %s132
    %p139 = scmp.eq.s32.totalorder %s17, 1
    %p140 = por %p138, %p139
    %p141 = scmp.ne.s32.totalorder %s132, %s133
    %p142 = scmp.eq.s32.totalorder %s17, 0
    %p143 = por %p141, %p142
    %p144 = scmp.ne.s32.totalorder %s132, %s133
    %p145 = scmp.eq.s32.totalorder %s18, 1
    %p146 = por %p144, %p145
    %p148 = scmp.ne.s32.totalorder %s133, %s147
    %p149 = scmp.eq.s32.totalorder %s18, 0
    %p150 = por %p148, %p149
    %s151 = ssub.s32 %s12, %s19
    %p152 = scmp.eq.s32.totalorder %s151, 0
    %s154 = sadd.s32 %s153, 1
    %s155 = scalar_select %p152, %s153, %s154
    %p158 = pneg %p152
    %p159 = scmp.eq.s32.totalorder %s12, 1
    %p160 = por %p158, %p159
    %p161 = scmp.ne.s32.totalorder %s153, %s156
    %p162 = scmp.eq.s32.totalorder %s12, 0
    %p163 = por %p161, %p162
    %p164 = scmp.ne.s32.totalorder %s153, %s156
    %p165 = scmp.eq.s32.totalorder %s17, 1
    %p166 = por %p164, %p165
    %p167 = scmp.ne.s32.totalorder %s156, %s157
    %p168 = scmp.eq.s32.totalorder %s17, 0
    %p169 = por %p167, %p168
    %p170 = scmp.ne.s32.totalorder %s156, %s157
    %p171 = scmp.eq.s32.totalorder %s18, 1
    %p172 = por %p170, %p171
    %p174 = scmp.ne.s32.totalorder %s157, %s173
    %p175 = scmp.eq.s32.totalorder %s18, 0
    %p176 = por %p174, %p175
    %p177 = scmp.le.s32.totalorder 1, %s12
    %p178 = scmp.lt.s32.totalorder %s12, 3
    %p179 = pnand %p177, %p178
    %p180 = pneg %p179
    // Predicated region
    $region9: #{transformer_forward.7} parent=5 // pred_check
      _
    $region10: #{transformer_forward.7} parent=5 // pred_check_branch
      %182 = sbr.rel (%p179) target = $region12
    $region11: #{transformer_forward.7} parent=5 // pred_region
      %s183 = ssub.s32 %s12, 1
      // Predicated region
      $region13: #{transformer_forward.7} parent=11 // pred_check
        %p184 = pneg %p59
      $region14: #{transformer_forward.7} parent=11 // pred_check_branch
        %186 = sbr.rel (%p184) target = $region16
      $region15: #{transformer_forward.7} parent=11 // pred_region
        _
      $region16: #{transformer_forward.7} parent=11 // pred_fallthru
        _
      // Predicated region
      $region17: #{transformer_forward.7} parent=11 // pred_check
        %p187 = pneg %p80
      $region18: #{transformer_forward.7} parent=11 // pred_check_branch
        %189 = sbr.rel (%p187) target = $region20
      $region19: #{transformer_forward.7} parent=11 // pred_region
        _
      $region20: #{transformer_forward.7} parent=11 // pred_fallthru
        _
      // Predicated region
      $region21: #{transformer_forward.7} parent=11 // pred_check
        %p190 = pneg %p101
      $region22: #{transformer_forward.7} parent=11 // pred_check_branch
        %192 = sbr.rel (%p190) target = $region24
      $region23: #{transformer_forward.7} parent=11 // pred_region
        _
      $region24: #{transformer_forward.7} parent=11 // pred_fallthru
        _
      // Predicated region
      $region25: #{transformer_forward.7} parent=11 // pred_check
        %p193 = pneg %p122
      $region26: #{transformer_forward.7} parent=11 // pred_check_branch
        %195 = sbr.rel (%p193) target = $region28
      $region27: #{transformer_forward.7} parent=11 // pred_region
        _
      $region28: #{transformer_forward.7} parent=11 // pred_fallthru
        _
      // Predicated region
      $region29: #{transformer_forward.7} parent=11 // pred_check
        %p196 = pneg %p143
      $region30: #{transformer_forward.7} parent=11 // pred_check_branch
        %198 = sbr.rel (%p196) target = $region32
      $region31: #{transformer_forward.7} parent=11 // pred_region
        _
      $region32: #{transformer_forward.7} parent=11 // pred_fallthru
        _
    $region12: #{transformer_forward.7} parent=5 // pred_fallthru
      _
    %p199 = scmp.lt.s32.totalorder %s12, 2
    // Predicated region
    $region33: #{transformer_forward.7} parent=5 // pred_check
      %p200 = pneg %p199
    $region34: #{transformer_forward.7} parent=5 // pred_check_branch
      %202 = sbr.rel (%p200) target = $region36
    $region35: #{transformer_forward.7} parent=5 // pred_region
      // Predicated region
      $region37: #{transformer_forward.7} parent=35 // pred_check
        %p203 = pneg %p32
      $region38: #{transformer_forward.7} parent=35 // pred_check_branch
        %205 = sbr.rel (%p203) target = $region40
      $region39: #{transformer_forward.7} parent=35 // pred_region
        %p206 = scmp.lt.s32.totalorder %s12, 1
        %s207 = scalar_select %p206, %s12, 1
        %s208 = smul.addr %s207, 2
        %s209 = smul.addr %s208, 4
        %s210 = scalar_lea.vmem %s0, %s209
      $region40: #{transformer_forward.7} parent=35 // pred_fallthru
        _
    $region36: #{transformer_forward.7} parent=5 // pred_fallthru
      _
    %p211 = scmp.le.s32.totalorder 1, %s12
    %p212 = scmp.lt.s32.totalorder %s12, 3
    %p213 = pnand %p211, %p212
    %p214 = pneg %p213
    // Predicated region
    $region41: #{transformer_forward.7} parent=5 // pred_check
      _
    $region42: #{transformer_forward.7} parent=5 // pred_check_branch
      %216 = sbr.rel (%p213) target = $region44
    $region43: #{transformer_forward.7} parent=5 // pred_region
      %s217 = ssub.s32 %s12, 1
      %p218 = scmp.lt.s32.totalorder %s17, 1
      %s219 = scalar_select %p218, %s17, 1
      %s220 = smul.addr %s219, 2
      %s221 = smul.addr %s220, 4
      %s222 = scalar_lea.vmem %s0, %s221
      %p223 = pneg %p38
      %p224 = pneg %p35
      %p225 = pneg %p59
      %p226 = pneg %p56
      %p227 = pneg %p80
      %p228 = pneg %p77
      %p229 = pneg %p101
      %p230 = pneg %p98
      %p231 = pneg %p122
      %p232 = pneg %p119
      %p233 = pneg %p143
      %p234 = pneg %p140
      %p235 = pneg %p169
      %p236 = pneg %p166
      %p237 = scmp.lt.s32.totalorder %s17, 1
      %s238 = scalar_select %p237, %s17, 1
      %s239 = smul.addr %s238, 2
      %s240 = smul.addr %s239, 4
      %s241 = scalar_lea.vmem %s6, %s240
      %p242 = scmp.lt.s32.totalorder %s17, 1
      %s243 = scalar_select %p242, %s17, 1
      %s244 = smul.addr %s243, 2
      %s245 = smul.addr %s244, 4
      %s246 = scalar_lea.vmem %s0, %s245
      %p247 = scmp.lt.s32.totalorder %s17, 1
      %s248 = scalar_select %p247, %s17, 1
      %s249 = smul.addr %s248, 2
      %s250 = smul.addr %s249, 4
      %s251 = scalar_lea.vmem %s6, %s250
      %v253 = vld [vmem:[%s246] sm:$0xf]
      %v254 = vld [vmem:[%s246 + $0x4] sm:$0xf]
      %v255 = vld [vmem:[%s1] sm:$0xff]
      %v256 = vld [vmem:[%s1 + $0x8] sm:$0xf]
      %v257 = vld [vmem:[%s1 + $0xc] sm:$0xff]
      %v258 = vld [vmem:[%s1 + $0x14] sm:$0xf]
      %v259 = vld [vmem:[%s1 + $0x18] sm:$0xff]
      %v260 = vld [vmem:[%s1 + $0x20] sm:$0xf]
      %v261 = vld [vmem:[%s1 + $0x24] sm:$0xff]
      %v262 = vld [vmem:[%s1 + $0x2c] sm:$0xf]
      %v263 = vld [vmem:[%s1 + $0x30] sm:$0xff]
      %v264 = vld [vmem:[%s1 + $0x38] sm:$0xf]
      %v265 = vld [vmem:[%s1 + $0x3c] sm:$0xff]
      %v266 = vld [vmem:[%s1 + $0x44] sm:$0xf]
      %v267 = vld [vmem:[%s1 + $0x48] sm:$0xff]
      %v268 = vld [vmem:[%s1 + $0x50] sm:$0xf]
      %v269 = vld [vmem:[%s1 + $0x54] sm:$0xff]
      %v270 = vld [vmem:[%s1 + $0x5c] sm:$0xf]
      %v271 = vld [vmem:[%s1 + $0x60] sm:$0xff]
      %v272 = vld [vmem:[%s1 + $0x68] sm:$0xf]
      %v273 = vld [vmem:[%s1 + $0x6c] sm:$0xff]
      %v274 = vld [vmem:[%s1 + $0x74] sm:$0xf]
      %v275 = vld [vmem:[%s1 + $0x78] sm:$0xff]
      %v276 = vld [vmem:[%s1 + $0x80] sm:$0xf]
      %v277 = vld [vmem:[%s1 + $0x84] sm:$0xff]
      %v278 = vld [vmem:[%s1 + $0x8c] sm:$0xf]
      %v279 = vld [vmem:[%s1 + $0x90] sm:$0xff]
      %v280 = vld [vmem:[%s1 + $0x98] sm:$0xf]
      %v281 = vld [vmem:[%s1 + $0x9c] sm:$0xff]
      %v282 = vld [vmem:[%s1 + $0xa4] sm:$0xf]
      %v283 = vld [vmem:[%s1 + $0xa8] sm:$0xff]
      %v284 = vld [vmem:[%s1 + $0xb0] sm:$0xf]
      %v285 = vld [vmem:[%s1 + $0xb4] sm:$0xff]
      %v286 = vld [vmem:[%s1 + $0xbc] sm:$0xf]
      %v289 = vunpack.c.l.b16 %v253
      %v290 = vunpack.c.l.b16 %v254
      %v291 = vpack.c.b16 %v290, %v289
      %v325 = vunpack.c.l.b16 %v255
      %v326 = vunpack.c.h.b16 %v255
      %v327 = vunpack.c.l.b16 %v256
      %v328 = vunpack.c.l.b16 %v257
      %v329 = vunpack.c.h.b16 %v257
      %v330 = vunpack.c.l.b16 %v258
      %v331 = vunpack.c.l.b16 %v259
      %v332 = vunpack.c.h.b16 %v259
      %v333 = vunpack.c.l.b16 %v260
      %v334 = vunpack.c.l.b16 %v261
      %v335 = vunpack.c.h.b16 %v261
      %v336 = vunpack.c.l.b16 %v262
      %v337 = vunpack.c.l.b16 %v263
      %v338 = vunpack.c.h.b16 %v263
      %v339 = vunpack.c.l.b16 %v264
      %v340 = vunpack.c.l.b16 %v265
      %v341 = vunpack.c.h.b16 %v265
      %v342 = vunpack.c.l.b16 %v266
      %v343 = vunpack.c.l.b16 %v267
      %v344 = vunpack.c.h.b16 %v267
      %v345 = vunpack.c.l.b16 %v268
      %v346 = vunpack.c.l.b16 %v269
      %v347 = vunpack.c.h.b16 %v269
      %v348 = vunpack.c.l.b16 %v270
      %v349 = vunpack.c.l.b16 %v271
      %v350 = vunpack.c.h.b16 %v271
      %v351 = vunpack.c.l.b16 %v272
      %v352 = vunpack.c.l.b16 %v273
      %v353 = vunpack.c.h.b16 %v273
      %v354 = vunpack.c.l.b16 %v274
      %v355 = vunpack.c.l.b16 %v275
      %v356 = vunpack.c.h.b16 %v275
      %v357 = vunpack.c.l.b16 %v276
      %v358 = vunpack.c.l.b16 %v277
      %v359 = vunpack.c.h.b16 %v277
      %v360 = vunpack.c.l.b16 %v278
      %v361 = vunpack.c.l.b16 %v279
      %v362 = vunpack.c.h.b16 %v279
      %v363 = vunpack.c.l.b16 %v280
      %v364 = vunpack.c.l.b16 %v281
      %v365 = vunpack.c.h.b16 %v281
      %v366 = vunpack.c.l.b16 %v282
      %v367 = vunpack.c.l.b16 %v283
      %v368 = vunpack.c.h.b16 %v283
      %v369 = vunpack.c.l.b16 %v284
      %v370 = vunpack.c.l.b16 %v285
      %v371 = vunpack.c.h.b16 %v285
      %v372 = vunpack.c.l.b16 %v286
      %v373 = vpack.c.b16 %v328, %v325
      %v374 = vpack.c.b16 %v329, %v326
      %v375 = vpack.c.b16 %v330, %v327
      %v376 = vpack.c.b16 %v334, %v331
      %v377 = vpack.c.b16 %v335, %v332
      %v378 = vpack.c.b16 %v336, %v333
      %v379 = vpack.c.b16 %v340, %v337
      %v380 = vpack.c.b16 %v341, %v338
      %v381 = vpack.c.b16 %v342, %v339
      %v382 = vpack.c.b16 %v346, %v343
      %v383 = vpack.c.b16 %v347, %v344
      %v384 = vpack.c.b16 %v348, %v345
      %v385 = vpack.c.b16 %v352, %v349
      %v386 = vpack.c.b16 %v353, %v350
      %v387 = vpack.c.b16 %v354, %v351
      %v388 = vpack.c.b16 %v358, %v355
      %v389 = vpack.c.b16 %v359, %v356
      %v390 = vpack.c.b16 %v360, %v357
      %v391 = vpack.c.b16 %v364, %v361
      %v392 = vpack.c.b16 %v365, %v362
      %v393 = vpack.c.b16 %v366, %v363
      %v394 = vpack.c.b16 %v370, %v367
      %v395 = vpack.c.b16 %v371, %v368
      %v396 = vpack.c.b16 %v372, %v369
      %421 = vmatprep.subr.bf16.mxu0 %v374
      %422 = vmatpush1.bf16.msra.mxu0 %v373
      %423 = vmatprep.subr.bf16.mxu0 %v377
      %424 = vmatpush1.bf16.msra.mxu0 %v376
      %425 = vmatprep.subr.bf16.mxu0 %v380
      %426 = vmatpush1.bf16.msra.mxu0 %v379
      %427 = vmatprep.subr.bf16.mxu0 %v383
      %428 = vmatpush1.bf16.msra.mxu0 %v382
      %429 = vmatprep.subr.bf16.mxu0 %v386
      %430 = vmatpush1.bf16.msra.mxu0 %v385
      %431 = vmatprep.subr.bf16.mxu0 %v389
      %432 = vmatpush1.bf16.msra.mxu0 %v388
      %433 = vmatprep.subr.bf16.mxu0 %v392
      %434 = vmatpush1.bf16.msra.mxu0 %v391
      %435 = vmatprep.subr.bf16.mxu0 %v395
      %436 = vmatpush1.bf16.msra.mxu0 %v394
      %437 = vmatprep.subr.bf16.mxu0 0
      %438 = vmatpush1.bf16.msra.mxu0 0
      %439 = vmatprep.subr.bf16.mxu0 0
      %440 = vmatpush1.bf16.msra.mxu0 0
      %441 = vmatprep.subr.bf16.mxu0 0
      %442 = vmatpush1.bf16.msra.mxu0 0
      %443 = vmatprep.subr.bf16.mxu0 0
      %444 = vmatpush1.bf16.msra.mxu0 0
      %445 = vmatprep.subr.bf16.mxu0 0
      %446 = vmatpush1.bf16.msra.mxu0 0
      %447 = vmatprep.subr.bf16.mxu0 0
      %448 = vmatpush1.bf16.msra.mxu0 0
      %449 = vmatprep.subr.bf16.mxu0 0
      %450 = vmatpush1.bf16.msra.mxu0 0
      %451 = vmatprep.subr.bf16.mxu0 0
      %452 = vmatpush1.bf16.msra.mxu0 0
      %453 = vmatprep.mubr.bf16.mxu0 0
      %454 = vmatmul.mubr.bf16.gmra.mrb[0].mxu0 %v291
      %v455 = vpop.f32.mrb[0].mxu0
      %v456 = vadd.f32 0.0, %v455
      %v457 = vpop.f32.mrb[0].mxu0
      %v458 = vadd.f32 0.0, %v457
      %v459 = vpop.f32.mrb[0].mxu0
      %v460 = vadd.f32 0.0, %v459
      %v461 = vpop.f32.mrb[0].mxu0
      %v462 = vadd.f32 0.0, %v461
      %463 = vdwg.mxu0
      %464 = vmatprep.subr.bf16.mxu0 0
      %465 = vmatpush1.bf16.msra.mxu0 %v375
      %466 = vmatprep.subr.bf16.mxu0 0
      %467 = vmatpush1.bf16.msra.mxu0 %v378
      %468 = vmatprep.subr.bf16.mxu0 0
      %469 = vmatpush1.bf16.msra.mxu0 %v381
      %470 = vmatprep.subr.bf16.mxu0 0
      %471 = vmatpush1.bf16.msra.mxu0 %v384
      %472 = vmatprep.subr.bf16.mxu0 0
      %473 = vmatpush1.bf16.msra.mxu0 %v387
      %474 = vmatprep.subr.bf16.mxu0 0
      %475 = vmatpush1.bf16.msra.mxu0 %v390
      %476 = vmatprep.subr.bf16.mxu0 0
      %477 = vmatpush1.bf16.msra.mxu0 %v393
      %478 = vmatprep.subr.bf16.mxu0 0
      %479 = vmatpush1.bf16.msra.mxu0 %v396
      %480 = vmatprep.subr.bf16.mxu0 0
      %481 = vmatpush1.bf16.msra.mxu0 0
      %482 = vmatprep.subr.bf16.mxu0 0
      %483 = vmatpush1.bf16.msra.mxu0 0
      %484 = vmatprep.subr.bf16.mxu0 0
      %485 = vmatpush1.bf16.msra.mxu0 0
      %486 = vmatprep.subr.bf16.mxu0 0
      %487 = vmatpush1.bf16.msra.mxu0 0
      %488 = vmatprep.subr.bf16.mxu0 0
      %489 = vmatpush1.bf16.msra.mxu0 0
      %490 = vmatprep.subr.bf16.mxu0 0
      %491 = vmatpush1.bf16.msra.mxu0 0
      %492 = vmatprep.subr.bf16.mxu0 0
      %493 = vmatpush1.bf16.msra.mxu0 0
      %494 = vmatprep.subr.bf16.mxu0 0
      %495 = vmatpush1.bf16.msra.mxu0 0
      %496 = vmatprep.mubr.bf16.mxu0 0
      %497 = vmatmul.mubr.bf16.gmra.mrb[0].mxu0 %v291
      %v498 = vpop.f32.mrb[0].mxu0
      %v499 = vadd.f32 0.0, %v498
      %v500 = vpop.f32.mrb[0].mxu0
      %v501 = vpop.f32.mrb[0].mxu0
      %v502 = vadd.f32 0.0, %v501
      %v503 = vpop.f32.mrb[0].mxu0
      %504 = vdwg.mxu0
      %v505 = vld [vmem:[%s4] sm:$0xff]
      %v506 = vld [vmem:[%s4 + $0x8] sm:$0xff]
      %v507 = vld [vmem:[%s5] sm:$0xff]
      %v508 = vld [vmem:[%s5 + $0x8] sm:$0xff]
      %v509 = vlaneseq
      %v510 = vshrl.u32 %v509, 7
      %v511 = vadd.s32 %v510, 8
      %v512 = vlaneseq
      %v513 = vand.u32 %v512, 127
      %vm514 = vcmp.le.s32.totalorder %v513, %v510
      %vm515 = vcmp.le.s32.totalorder %v513, %v511
      %v516 = vpack.c.bf16 %v502, %v499
      %v517 = vmul.f32 %v456, %v505
      %v518 = vmul.f32 %v460, %v506
      %521 = vrot.lane.b32.xlu0 %v507, 16
      %v522 = vpop.permute.xlu0 %521
      %523 = vrot.lane.b32.xlu0 %v508, 16
      %v524 = vpop.permute.xlu0 %523
      %v527 = vmul.f32 %v456, %v522
      %v528 = vmul.f32 %v460, %v524
      %531 = vrot.lane.b32.xlu0 %v527, 112
      %v532 = vpop.permute.xlu0 %531
      %533 = vrot.lane.b32.xlu0 %v528, 112
      %v534 = vpop.permute.xlu0 %533
      %v537 = vsub.f32 %v517, %v532
      %v538 = vsub.f32 %v518, %v534
      %541 = vrot.lane.b32.xlu0 %v505, 16
      %v542 = vpop.permute.xlu0 %541
      %543 = vrot.lane.b32.xlu0 %v506, 16
      %v544 = vpop.permute.xlu0 %543
      %v547 = vmul.f32 %v456, %v542
      %v548 = vmul.f32 %v460, %v544
      %v549 = vmul.f32 %v456, %v507
      %v550 = vmul.f32 %v460, %v508
      %553 = vrot.lane.b32.xlu0 %v549, 16
      %v554 = vpop.permute.xlu0 %553
      %555 = vrot.lane.b32.xlu0 %v550, 16
      %v556 = vpop.permute.xlu0 %555
      %v559 = vadd.f32 %v547, %v554
      %v560 = vadd.f32 %v548, %v556
      %vm561 = vcmask 130048
      %v562 = vsel %vm561, %v537, %v559
      %v563 = vsel %vm561, %v538, %v560
      %v564 = vpack.c.bf16 %v563, %v562
      %v565 = vmul.f32 %v458, %v505
      %v566 = vmul.f32 %v462, %v506
      %v567 = vmul.f32 %v458, %v522
      %v568 = vmul.f32 %v462, %v524
      %571 = vrot.lane.b32.xlu0 %v567, 112
      %v572 = vpop.permute.xlu0 %571
      %573 = vrot.lane.b32.xlu0 %v568, 112
      %v574 = vpop.permute.xlu0 %573
      %v577 = vsub.f32 %v565, %v572
      %v578 = vsub.f32 %v566, %v574
      %v579 = vmul.f32 %v458, %v542
      %v580 = vmul.f32 %v462, %v544
      %v581 = vmul.f32 %v458, %v507
      %v582 = vmul.f32 %v462, %v508
      %585 = vrot.lane.b32.xlu0 %v581, 16
      %v586 = vpop.permute.xlu0 %585
      %587 = vrot.lane.b32.xlu0 %v582, 16
      %v588 = vpop.permute.xlu0 %587
      %v591 = vadd.f32 %v579, %v586
      %v592 = vadd.f32 %v580, %v588
      %v593 = vsel %vm561, %v577, %v591
      %v594 = vsel %vm561, %v578, %v592
      %v595 = vpack.c.bf16 %v594, %v593
      %vm596 = vcmask 261120
      %v598 = vsel %vm596, %v564, 0
      %v601 = vsel %vm596, %v595, 0
      %603 = vmatprep.subr.bf16.mxu0 0
      %604 = vmatpush1.bf16.xpose.msra.mxu0 %v601
      %605 = vmatprep.subr.bf16.mxu0 0
      %606 = vmatpush1.bf16.xpose.msra.mxu0 0
      %607 = vmatprep.subr.bf16.mxu0 0
      %608 = vmatpush1.bf16.xpose.msra.mxu0 0
      %609 = vmatprep.subr.bf16.mxu0 0
      %610 = vmatpush1.bf16.xpose.msra.mxu0 0
      %611 = vmatprep.subr.bf16.mxu0 0
      %612 = vmatpush1.bf16.xpose.msra.mxu0 0
      %613 = vmatprep.subr.bf16.mxu0 0
      %614 = vmatpush1.bf16.xpose.msra.mxu0 0
      %615 = vmatprep.subr.bf16.mxu0 0
      %616 = vmatpush1.bf16.xpose.msra.mxu0 0
      %617 = vmatprep.subr.bf16.mxu0 0
      %618 = vmatpush1.bf16.xpose.msra.mxu0 0
      %619 = vmatprep.subr.bf16.mxu0 0
      %620 = vmatpush1.bf16.xpose.msra.mxu0 0
      %621 = vmatprep.subr.bf16.mxu0 0
      %622 = vmatpush1.bf16.xpose.msra.mxu0 0
      %623 = vmatprep.subr.bf16.mxu0 0
      %624 = vmatpush1.bf16.xpose.msra.mxu0 0
      %625 = vmatprep.subr.bf16.mxu0 0
      %626 = vmatpush1.bf16.xpose.msra.mxu0 0
      %627 = vmatprep.subr.bf16.mxu0 0
      %628 = vmatpush1.bf16.xpose.msra.mxu0 0
      %629 = vmatprep.subr.bf16.mxu0 0
      %630 = vmatpush1.bf16.xpose.msra.mxu0 0
      %631 = vmatprep.subr.bf16.mxu0 0
      %632 = vmatpush1.bf16.xpose.msra.mxu0 0
      %633 = vmatprep.subr.bf16.mxu0 0
      %634 = vmatpush1.bf16.xpose.msra.mxu0 0
      %635 = vmatprep.mubr.bf16.mxu0 0
      %636 = vmatmul.mubr.bf16.gmra.mrb[0].mxu0 %v598
      %v637 = vpop.f32.mrb[0].mxu0
      %v638 = vadd.f32 0.0, %v637
      %v639 = vpop.f32.mrb[0].mxu0
      %v640 = vpop.f32.mrb[0].mxu0
      %v641 = vadd.f32 0.0, %v640
      %v642 = vpop.f32.mrb[0].mxu0
      %643 = vdwg.mxu0
      %v644 = vmul.f32 %v638, 0.17677669
      %v645 = vmul.f32 %v641, 0.17677669
      %v646 = vsel %vm514, %v644, -1e+30
      %v647 = vsel %vm515, %v645, -1e+30
      %v648 = vsel %vm561, %v646, -inf
      %649 = vmax.xlane.f32.xlu0 %v648
      %v650 = vpop.xlane.xlu0 %649
      %v651 = vsel %vm561, %v647, -inf
      %652 = vmax.xlane.f32.xlu0 %v651
      %v653 = vpop.xlane.xlu0 %652
      %v654 = vsub.f32 %v646, %v650
      %v655 = vsub.f32 %v647, %v653
      %v656 = vmul.f32 %v654, 1.442695
      %v657 = vpow.pop %v656
      %v658 = vmul.f32 %v655, 1.442695
      %v659 = vpow.pop %v658
      %v660 = vsel %vm561, %v657, 0.0
      %661 = vadd.xlane.f32.xlu0 %v660
      %v662 = vpop.xlane.xlu0 %661
      %v663 = vsel %vm561, %v659, 0.0
      %664 = vadd.xlane.f32.xlu0 %v663
      %v665 = vpop.xlane.xlu0 %664
      %v666 = vrcp.pop %v662
      %v667 = vrcp.pop %v665
      %v668 = vmul.f32 %v657, %v666
      %v669 = vmul.f32 %v659, %v667
      %v670 = vpack.c.bf16 %v669, %v668
      %v672 = vsel %vm561, %v670, 0
      %674 = vmatprep.subr.bf16.mxu0 0
      %675 = vmatpush1.bf16.msra.mxu0 %v516
      %676 = vmatprep.subr.bf16.mxu0 0
      %677 = vmatpush1.bf16.msra.mxu0 0
      %678 = vmatprep.subr.bf16.mxu0 0
      %679 = vmatpush1.bf16.msra.mxu0 0
      %680 = vmatprep.subr.bf16.mxu0 0
      %681 = vmatpush1.bf16.msra.mxu0 0
      %682 = vmatprep.subr.bf16.mxu0 0
      %683 = vmatpush1.bf16.msra.mxu0 0
      %684 = vmatprep.subr.bf16.mxu0 0
      %685 = vmatpush1.bf16.msra.mxu0 0
      %686 = vmatprep.subr.bf16.mxu0 0
      %687 = vmatpush1.bf16.msra.mxu0 0
      %688 = vmatprep.subr.bf16.mxu0 0
      %689 = vmatpush1.bf16.msra.mxu0 0
      %690 = vmatprep.subr.bf16.mxu0 0
      %691 = vmatpush1.bf16.msra.mxu0 0
      %692 = vmatprep.subr.bf16.mxu0 0
      %693 = vmatpush1.bf16.msra.mxu0 0
      %694 = vmatprep.subr.bf16.mxu0 0
      %695 = vmatpush1.bf16.msra.mxu0 0
      %696 = vmatprep.subr.bf16.mxu0 0
      %697 = vmatpush1.bf16.msra.mxu0 0
      %698 = vmatprep.subr.bf16.mxu0 0
      %699 = vmatpush1.bf16.msra.mxu0 0
      %700 = vmatprep.subr.bf16.mxu0 0
      %701 = vmatpush1.bf16.msra.mxu0 0
      %702 = vmatprep.subr.bf16.mxu0 0
      %703 = vmatpush1.bf16.msra.mxu0 0
      %704 = vmatprep.subr.bf16.mxu0 0
      %705 = vmatpush1.bf16.msra.mxu0 0
      %706 = vmatprep.mubr.bf16.mxu0 0
      %707 = vmatmul.mubr.bf16.gmra.mrb[0].mxu0 %v672
      %v708 = vpop.f32.mrb[0].mxu0
      %v709 = vadd.f32 0.0, %v708
      %v710 = vpop.f32.mrb[0].mxu0
      %v711 = vpop.f32.mrb[0].mxu0
      %v712 = vadd.f32 0.0, %v711
      %v713 = vpop.f32.mrb[0].mxu0
      %714 = vdwg.mxu0
      %715 = vst.msk [vmem:[#allocation2] sm:$0xff] %vm596, %v709
      %716 = vst.msk [vmem:[#allocation2 + $0x8] sm:$0xff] %vm596, %v712
      %717 = vrot.lane.b32.xlu0 %v505, 32
      %v718 = vpop.permute.xlu0 %717
      %719 = vrot.lane.b32.xlu0 %v506, 32
      %v720 = vpop.permute.xlu0 %719
      %v723 = vmul.f32 %v456, %v718
      %v724 = vmul.f32 %v460, %v720
      %725 = vrot.lane.b32.xlu0 %v507, 48
      %v726 = vpop.permute.xlu0 %725
      %727 = vrot.lane.b32.xlu0 %v508, 48
      %v728 = vpop.permute.xlu0 %727
      %v731 = vmul.f32 %v456, %v726
      %v732 = vmul.f32 %v460, %v728
      %735 = vrot.lane.b32.xlu0 %v731, 112
      %v736 = vpop.permute.xlu0 %735
      %737 = vrot.lane.b32.xlu0 %v732, 112
      %v738 = vpop.permute.xlu0 %737
      %v741 = vsub.f32 %v723, %v736
      %v742 = vsub.f32 %v724, %v738
      %743 = vrot.lane.b32.xlu0 %v505, 48
      %v744 = vpop.permute.xlu0 %743
      %745 = vrot.lane.b32.xlu0 %v506, 48
      %v746 = vpop.permute.xlu0 %745
      %v749 = vmul.f32 %v456, %v744
      %v750 = vmul.f32 %v460, %v746
      %751 = vrot.lane.b32.xlu0 %v507, 32
      %v752 = vpop.permute.xlu0 %751
      %753 = vrot.lane.b32.xlu0 %v508, 32
      %v754 = vpop.permute.xlu0 %753
      %v757 = vmul.f32 %v456, %v752
      %v758 = vmul.f32 %v460, %v754
      %761 = vrot.lane.b32.xlu0 %v757, 16
      %v762 = vpop.permute.xlu0 %761
      %763 = vrot.lane.b32.xlu0 %v758, 16
      %v764 = vpop.permute.xlu0 %763
      %v767 = vadd.f32 %v749, %v762
      %v768 = vadd.f32 %v750, %v764
      %771 = vrot.lane.b32.xlu0 %v741, 96
      %v772 = vpop.permute.xlu0 %771
      %773 = vrot.lane.b32.xlu0 %v742, 96
      %v774 = vpop.permute.xlu0 %773
      %779 = vrot.lane.b32.xlu0 %v767, 96
      %v780 = vpop.permute.xlu0 %779
      %781 = vrot.lane.b32.xlu0 %v768, 96
      %v782 = vpop.permute.xlu0 %781
      %v785 = vsel %vm561, %v772, %v780
      %v786 = vsel %vm561, %v774, %v782
      %v787 = vpack.c.bf16 %v786, %v785
      %v788 = vmul.f32 %v458, %v718
      %v789 = vmul.f32 %v462, %v720
      %v790 = vmul.f32 %v458, %v726
      %v791 = vmul.f32 %v462, %v728
      %794 = vrot.lane.b32.xlu0 %v790, 112
      %v795 = vpop.permute.xlu0 %794
      %796 = vrot.lane.b32.xlu0 %v791, 112
      %v797 = vpop.permute.xlu0 %796
      %v800 = vsub.f32 %v788, %v795
      %v801 = vsub.f32 %v789, %v797
      %v802 = vmul.f32 %v458, %v744
      %v803 = vmul.f32 %v462, %v746
      %v804 = vmul.f32 %v458, %v752
      %v805 = vmul.f32 %v462, %v754
      %808 = vrot.lane.b32.xlu0 %v804, 16
      %v809 = vpop.permute.xlu0 %808
      %810 = vrot.lane.b32.xlu0 %v805, 16
      %v811 = vpop.permute.xlu0 %810
      %v814 = vadd.f32 %v802, %v809
      %v815 = vadd.f32 %v803, %v811
      %818 = vrot.lane.b32.xlu0 %v800, 96
      %v819 = vpop.permute.xlu0 %818
      %820 = vrot.lane.b32.xlu0 %v801, 96
      %v821 = vpop.permute.xlu0 %820
      %826 = vrot.lane.b32.xlu0 %v814, 96
      %v827 = vpop.permute.xlu0 %826
      %828 = vrot.lane.b32.xlu0 %v815, 96
      %v829 = vpop.permute.xlu0 %828
      %v832 = vsel %vm561, %v819, %v827
      %v833 = vsel %vm561, %v821, %v829
      %v834 = vpack.c.bf16 %v833, %v832
      %v836 = vsel %vm596, %v787, 0
      %v839 = vsel %vm596, %v834, 0
      %841 = vmatprep.subr.bf16.mxu0 0
      %842 = vmatpush1.bf16.xpose.msra.mxu0 %v839
      %843 = vmatprep.subr.bf16.mxu0 0
      %844 = vmatpush1.bf16.xpose.msra.mxu0 0
      %845 = vmatprep.subr.bf16.mxu0 0
      %846 = vmatpush1.bf16.xpose.msra.mxu0 0
      %847 = vmatprep.subr.bf16.mxu0 0
      %848 = vmatpush1.bf16.xpose.msra.mxu0 0
      %849 = vmatprep.subr.bf16.mxu0 0
      %850 = vmatpush1.bf16.xpose.msra.mxu0 0
      %851 = vmatprep.subr.bf16.mxu0 0
      %852 = vmatpush1.bf16.xpose.msra.mxu0 0
      %853 = vmatprep.subr.bf16.mxu0 0
      %854 = vmatpush1.bf16.xpose.msra.mxu0 0
      %855 = vmatprep.subr.bf16.mxu0 0
      %856 = vmatpush1.bf16.xpose.msra.mxu0 0
      %857 = vmatprep.subr.bf16.mxu0 0
      %858 = vmatpush1.bf16.xpose.msra.mxu0 0
      %859 = vmatprep.subr.bf16.mxu0 0
      %860 = vmatpush1.bf16.xpose.msra.mxu0 0
      %861 = vmatprep.subr.bf16.mxu0 0
      %862 = vmatpush1.bf16.xpose.msra.mxu0 0
      %863 = vmatprep.subr.bf16.mxu0 0
      %864 = vmatpush1.bf16.xpose.msra.mxu0 0
      %865 = vmatprep.subr.bf16.mxu0 0
      %866 = vmatpush1.bf16.xpose.msra.mxu0 0
      %867 = vmatprep.subr.bf16.mxu0 0
      %868 = vmatpush1.bf16.xpose.msra.mxu0 0
      %869 = vmatprep.subr.bf16.mxu0 0
      %870 = vmatpush1.bf16.xpose.msra.mxu0 0
      %871 = vmatprep.subr.bf16.mxu0 0
      %872 = vmatpush1.bf16.xpose.msra.mxu0 0
      %873 = vmatprep.mubr.bf16.mxu0 0
      %874 = vmatmul.mubr.bf16.gmra.mrb[0].mxu0 %v836
      %v875 = vpop.f32.mrb[0].mxu0
      %v876 = vadd.f32 0.0, %v875
      %v877 = vpop.f32.mrb[0].mxu0
      %v878 = vpop.f32.mrb[0].mxu0
      %v879 = vadd.f32 0.0, %v878
      %v880 = vpop.f32.mrb[0].mxu0
      %881 = vdwg.mxu0
      %v882 = vmul.f32 %v876, 0.17677669
      %v883 = vmul.f32 %v879, 0.17677669
      %v884 = vsel %vm514, %v882, -1e+30
      %v885 = vsel %vm515, %v883, -1e+30
      %v886 = vsel %vm561, %v884, -inf
      %887 = vmax.xlane.f32.xlu0 %v886
      %v888 = vpop.xlane.xlu0 %887
      %v889 = vsel %vm561, %v885, -inf
      %890 = vmax.xlane.f32.xlu0 %v889
      %v891 = vpop.xlane.xlu0 %890
      %v892 = vsub.f32 %v884, %v888
      %v893 = vsub.f32 %v885, %v891
      %v894 = vmul.f32 %v892, 1.442695
      %v895 = vpow.pop %v894
      %v896 = vmul.f32 %v893, 1.442695
      %v897 = vpow.pop %v896
      %v898 = vsel %vm561, %v895, 0.0
      %899 = vadd.xlane.f32.xlu0 %v898
      %v900 = vpop.xlane.xlu0 %899
      %v901 = vsel %vm561, %v897, 0.0
      %902 = vadd.xlane.f32.xlu0 %v901
      %v903 = vpop.xlane.xlu0 %902
      %v904 = vrcp.pop %v900
      %v905 = vrcp.pop %v903
      %v906 = vmul.f32 %v895, %v904
      %v907 = vmul.f32 %v897, %v905
      %v908 = vpack.c.bf16 %v907, %v906
      %910 = vrot.lane.b32.xlu0 %v516, 96
      %v911 = vpop.permute.xlu0 %910
      %v914 = vsel %vm561, %v908, 0
      %916 = vmatprep.subr.bf16.mxu0 0
      %917 = vmatpush1.bf16.msra.mxu0 %v911
      %918 = vmatprep.subr.bf16.mxu0 0
      %919 = vmatpush1.bf16.msra.mxu0 0
      %920 = vmatprep.subr.bf16.mxu0 0
      %921 = vmatpush1.bf16.msra.mxu0 0
      %922 = vmatprep.subr.bf16.mxu0 0
      %923 = vmatpush1.bf16.msra.mxu0 0
      %924 = vmatprep.subr.bf16.mxu0 0
      %925 = vmatpush1.bf16.msra.mxu0 0
      %926 = vmatprep.subr.bf16.mxu0 0
      %927 = vmatpush1.bf16.msra.mxu0 0
      %928 = vmatprep.subr.bf16.mxu0 0
      %929 = vmatpush1.bf16.msra.mxu0 0
      %930 = vmatprep.subr.bf16.mxu0 0
      %931 = vmatpush1.bf16.msra.mxu0 0
      %932 = vmatprep.subr.bf16.mxu0 0
      %933 = vmatpush1.bf16.msra.mxu0 0
      %934 = vmatprep.subr.bf16.mxu0 0
      %935 = vmatpush1.bf16.msra.mxu0 0
      %936 = vmatprep.subr.bf16.mxu0 0
      %937 = vmatpush1.bf16.msra.mxu0 0
      %938 = vmatprep.subr.bf16.mxu0 0
      %939 = vmatpush1.bf16.msra.mxu0 0
      %940 = vmatprep.subr.bf16.mxu0 0
      %941 = vmatpush1.bf16.msra.mxu0 0
      %942 = vmatprep.subr.bf16.mxu0 0
      %943 = vmatpush1.bf16.msra.mxu0 0
      %944 = vmatprep.subr.bf16.mxu0 0
      %945 = vmatpush1.bf16.msra.mxu0 0
      %946 = vmatprep.subr.bf16.mxu0 0
      %947 = vmatpush1.bf16.msra.mxu0 0
      %948 = vmatprep.mubr.bf16.mxu0 0
      %949 = vmatmul.mubr.bf16.gmra.mrb[0].mxu0 %v914
      %v950 = vpop.f32.mrb[0].mxu0
      %v951 = vadd.f32 0.0, %v950
      %v952 = vpop.f32.mrb[0].mxu0
      %v953 = vpop.f32.mrb[0].mxu0
      %v954 = vadd.f32 0.0, %v953
      %v955 = vpop.f32.mrb[0].mxu0
      %956 = vdwg.mxu0
      %959 = vrot.lane.b32.xlu0 %v951, 32
      %v960 = vpop.permute.xlu0 %959
      %961 = vrot.lane.b32.xlu0 %v954, 32
      %v962 = vpop.permute.xlu0 %961
      %vm965 = vcmask 523520
      %966 = vst.msk [vmem:[#allocation2] sm:$0xff] %vm965, %v960
      %967 = vst.msk [vmem:[#allocation2 + $0x8] sm:$0xff] %vm965, %v962
      %968 = vrot.lane.b32.xlu0 %v505, 64
      %v969 = vpop.permute.xlu0 %968
      %970 = vrot.lane.b32.xlu0 %v506, 64
      %v971 = vpop.permute.xlu0 %970
      %v974 = vmul.f32 %v456, %v969
      %v975 = vmul.f32 %v460, %v971
      %976 = vrot.lane.b32.xlu0 %v507, 80
      %v977 = vpop.permute.xlu0 %976
      %978 = vrot.lane.b32.xlu0 %v508, 80
      %v979 = vpop.permute.xlu0 %978
      %v982 = vmul.f32 %v456, %v977
      %v983 = vmul.f32 %v460, %v979
      %986 = vrot.lane.b32.xlu0 %v982, 112
      %v987 = vpop.permute.xlu0 %986
      %988 = vrot.lane.b32.xlu0 %v983, 112
      %v989 = vpop.permute.xlu0 %988
      %v992 = vsub.f32 %v974, %v987
      %v993 = vsub.f32 %v975, %v989
      %994 = vrot.lane.b32.xlu0 %v505, 80
      %v995 = vpop.permute.xlu0 %994
      %996 = vrot.lane.b32.xlu0 %v506, 80
      %v997 = vpop.permute.xlu0 %996
      %v1000 = vmul.f32 %v456, %v995
      %v1001 = vmul.f32 %v460, %v997
      %1002 = vrot.lane.b32.xlu0 %v507, 64
      %v1003 = vpop.permute.xlu0 %1002
      %1004 = vrot.lane.b32.xlu0 %v508, 64
      %v1005 = vpop.permute.xlu0 %1004
      %v1008 = vmul.f32 %v456, %v1003
      %v1009 = vmul.f32 %v460, %v1005
      %1012 = vrot.lane.b32.xlu0 %v1008, 16
      %v1013 = vpop.permute.xlu0 %1012
      %1014 = vrot.lane.b32.xlu0 %v1009, 16
      %v1015 = vpop.permute.xlu0 %1014
      %v1018 = vadd.f32 %v1000, %v1013
      %v1019 = vadd.f32 %v1001, %v1015
      %1022 = vrot.lane.b32.xlu0 %v992, 64
      %v1023 = vpop.permute.xlu0 %1022
      %1024 = vrot.lane.b32.xlu0 %v993, 64
      %v1025 = vpop.permute.xlu0 %1024
      %1030 = vrot.lane.b32.xlu0 %v1018, 64
      %v1031 = vpop.permute.xlu0 %1030
      %1032 = vrot.lane.b32.xlu0 %v1019, 64
      %v1033 = vpop.permute.xlu0 %1032
      %v1036 = vsel %vm561, %v1023, %v1031
      %v1037 = vsel %vm561, %v1025, %v1033
      %v1038 = vpack.c.bf16 %v1037, %v1036
      %v1039 = vmul.f32 %v458, %v969
      %v1040 = vmul.f32 %v462, %v971
      %v1041 = vmul.f32 %v458, %v977
      %v1042 = vmul.f32 %v462, %v979
      %1045 = vrot.lane.b32.xlu0 %v1041, 112
      %v1046 = vpop.permute.xlu0 %1045
      %1047 = vrot.lane.b32.xlu0 %v1042, 112
      %v1048 = vpop.permute.xlu0 %1047
      %v1051 = vsub.f32 %v1039, %v1046
      %v1052 = vsub.f32 %v1040, %v1048
      %v1053 = vmul.f32 %v458, %v995
      %v1054 = vmul.f32 %v462, %v997
      %v1055 = vmul.f32 %v458, %v1003
      %v1056 = vmul.f32 %v462, %v1005
      %1059 = vrot.lane.b32.xlu0 %v1055, 16
      %v1060 = vpop.permute.xlu0 %1059
      %1061 = vrot.lane.b32.xlu0 %v1056, 16
      %v1062 = vpop.permute.xlu0 %1061
      %v1065 = vadd.f32 %v1053, %v1060
      %v1066 = vadd.f32 %v1054, %v1062
      %1069 = vrot.lane.b32.xlu0 %v1051, 64
      %v1070 = vpop.permute.xlu0 %1069
      %1071 = vrot.lane.b32.xlu0 %v1052, 64
      %v1072 = vpop.permute.xlu0 %1071
      %1077 = vrot.lane.b32.xlu0 %v1065, 64
      %v1078 = vpop.permute.xlu0 %1077
      %1079 = vrot.lane.b32.xlu0 %v1066, 64
      %v1080 = vpop.permute.xlu0 %1079
      %v1083 = vsel %vm561, %v1070, %v1078
      %v1084 = vsel %vm561, %v1072, %v1080
      %v1085 = vpack.c.bf16 %v1084, %v1083
      %v1087 = vsel %vm596, %v1038, 0
      %v1090 = vsel %vm596, %v1085, 0
      %1092 = vmatprep.subr.bf16.mxu0 0
      %1093 = vmatpush1.bf16.xpose.msra.mxu0 %v1090
      %1094 = vmatprep.subr.bf16.mxu0 0
      %1095 = vmatpush1.bf16.xpose.msra.mxu0 0
      %1096 = vmatprep.subr.bf16.mxu0 0
      %1097 = vmatpush1.bf16.xpose.msra.mxu0 0
      %1098 = vmatprep.subr.bf16.mxu0 0
      %1099 = vmatpush1.bf16.xpose.msra.mxu0 0
      %1100 = vmatprep.subr.bf16.mxu0 0
      %1101 = vmatpush1.bf16.xpose.msra.mxu0 0
      %1102 = vmatprep.subr.bf16.mxu0 0
      %1103 = vmatpush1.bf16.xpose.msra.mxu0 0
      %1104 = vmatprep.subr.bf16.mxu0 0
      %1105 = vmatpush1.bf16.xpose.msra.mxu0 0
      %1106 = vmatprep.subr.bf16.mxu0 0
      %1107 = vmatpush1.bf16.xpose.msra.mxu0 0
      %1108 = vmatprep.subr.bf16.mxu0 0
      %1109 = vmatpush1.bf16.xpose.msra.mxu0 0
      %1110 = vmatprep.subr.bf16.mxu0 0
      %1111 = vmatpush1.bf16.xpose.msra.mxu0 0
      %1112 = vmatprep.subr.bf16.mxu0 0
      %1113 = vmatpush1.bf16.xpose.msra.mxu0 0
      %1114 = vmatprep.subr.bf16.mxu0 0
      %1115 = vmatpush1.bf16.xpose.msra.mxu0 0
      %1116 = vmatprep.subr.bf16.mxu0 0
      %1117 = vmatpush1.bf16.xpose.msra.mxu0 0
      %1118 = vmatprep.subr.bf16.mxu0 0
      %1119 = vmatpush1.bf16.xpose.msra.mxu0 0
      %1120 = vmatprep.subr.bf16.mxu0 0
      %1121 = vmatpush1.bf16.xpose.msra.mxu0 0
      %1122 = vmatprep.subr.bf16.mxu0 0
      %1123 = vmatpush1.bf16.xpose.msra.mxu0 0
      %1124 = vmatprep.mubr.bf16.mxu0 0
      %1125 = vmatmul.mubr.bf16.gmra.mrb[0].mxu0 %v1087
      %v1126 = vpop.f32.mrb[0].mxu0
      %v1127 = vadd.f32 0.0, %v1126
      %v1128 = vpop.f32.mrb[0].mxu0
      %v1129 = vpop.f32.mrb[0].mxu0
      %v1130 = vadd.f32 0.0, %v1129
      %v1131 = vpop.f32.mrb[0].mxu0
      %1132 = vdwg.mxu0
      %v1133 = vmul.f32 %v1127, 0.17677669
      %v1134 = vmul.f32 %v1130, 0.17677669
      %v1135 = vsel %vm514, %v1133, -1e+30
      %v1136 = vsel %vm515, %v1134, -1e+30
      %v1137 = vsel %vm561, %v1135, -inf
      %1138 = vmax.xlane.f32.xlu0 %v1137
      %v1139 = vpop.xlane.xlu0 %1138
      %v1140 = vsel %vm561, %v1136, -inf
      %1141 = vmax.xlane.f32.xlu0 %v1140
      %v1142 = vpop.xlane.xlu0 %1141
      %v1143 = vsub.f32 %v1135, %v1139
      %v1144 = vsub.f32 %v1136, %v1142
      %v1145 = vmul.f32 %v1143, 1.442695
      %v1146 = vpow.pop %v1145
      %v1147 = vmul.f32 %v1144, 1.442695
      %v1148 = vpow.pop %v1147
      %v1149 = vsel %vm561, %v1146, 0.0
      %1150 = vadd.xlane.f32.xlu0 %v1149
      %v1151 = vpop.xlane.xlu0 %1150
      %v1152 = vsel %vm561, %v1148, 0.0
      %1153 = vadd.xlane.f32.xlu0 %v1152
      %v1154 = vpop.xlane.xlu0 %1153
      %v1155 = vrcp.pop %v1151
      %v1156 = vrcp.pop %v1154
      %v1157 = vmul.f32 %v1146, %v1155
      %v1158 = vmul.f32 %v1148, %v1156
      %v1159 = vpack.c.bf16 %v1158, %v1157
      %1160 = vrot.lane.b32.xlu0 %v516, 64
      %v1161 = vpop.permute.xlu0 %1160
      %v1164 = vsel %vm561, %v1159, 0
      %1166 = vmatprep.subr.bf16.mxu0 0
      %1167 = vmatpush1.bf16.msra.mxu0 %v1161
      %1168 = vmatprep.subr.bf16.mxu0 0
      %1169 = vmatpush1.bf16.msra.mxu0 0
      %1170 = vmatprep.subr.bf16.mxu0 0
      %1171 = vmatpush1.bf16.msra.mxu0 0
      %1172 = vmatprep.subr.bf16.mxu0 0
      %1173 = vmatpush1.bf16.msra.mxu0 0
      %1174 = vmatprep.subr.bf16.mxu0 0
      %1175 = vmatpush1.bf16.msra.mxu0 0
      %1176 = vmatprep.subr.bf16.mxu0 0
      %1177 = vmatpush1.bf16.msra.mxu0 0
      %1178 = vmatprep.subr.bf16.mxu0 0
      %1179 = vmatpush1.bf16.msra.mxu0 0
      %1180 = vmatprep.subr.bf16.mxu0 0
      %1181 = vmatpush1.bf16.msra.mxu0 0
      %1182 = vmatprep.subr.bf16.mxu0 0
      %1183 = vmatpush1.bf16.msra.mxu0 0
      %1184 = vmatprep.subr.bf16.mxu0 0
      %1185 = vmatpush1.bf16.msra.mxu0 0
      %1186 = vmatprep.subr.bf16.mxu0 0
      %1187 = vmatpush1.bf16.msra.mxu0 0
      %1188 = vmatprep.subr.bf16.mxu0 0
      %1189 = vmatpush1.bf16.msra.mxu0 0
      %1190 = vmatprep.subr.bf16.mxu0 0
      %1191 = vmatpush1.bf16.msra.mxu0 0
      %1192 = vmatprep.subr.bf16.mxu0 0
      %1193 = vmatpush1.bf16.msra.mxu0 0
      %1194 = vmatprep.subr.bf16.mxu0 0
      %1195 = vmatpush1.bf16.msra.mxu0 0
      %1196 = vmatprep.subr.bf16.mxu0 0
      %1197 = vmatpush1.bf16.msra.mxu0 0
      %1198 = vmatprep.mubr.bf16.mxu0 0
      %1199 = vmatmul.mubr.bf16.gmra.mrb[0].mxu0 %v1164
      %v1200 = vpop.f32.mrb[0].mxu0
      %v1201 = vadd.f32 0.0, %v1200
      %v1202 = vpop.f32.mrb[0].mxu0
      %v1203 = vpop.f32.mrb[0].mxu0
      %v1204 = vadd.f32 0.0, %v1203
      %v1205 = vpop.f32.mrb[0].mxu0
      %1206 = vdwg.mxu0
      %1209 = vrot.lane.b32.xlu0 %v1201, 64
      %v1210 = vpop.permute.xlu0 %1209
      %1211 = vrot.lane.b32.xlu0 %v1204, 64
      %v1212 = vpop.permute.xlu0 %1211
      %vm1215 = vcmask 785920
      %1216 = vst.msk [vmem:[#allocation2] sm:$0xff] %vm1215, %v1210
      %1217 = vst.msk [vmem:[#allocation2 + $0x8] sm:$0xff] %vm1215, %v1212
      %1218 = vrot.lane.b32.xlu0 %v505, 96
      %v1219 = vpop.permute.xlu0 %1218
      %1220 = vrot.lane.b32.xlu0 %v506, 96
      %v1221 = vpop.permute.xlu0 %1220
      %v1224 = vmul.f32 %v456, %v1219
      %v1225 = vmul.f32 %v460, %v1221
      %1226 = vrot.lane.b32.xlu0 %v507, 112
      %v1227 = vpop.permute.xlu0 %1226
      %1228 = vrot.lane.b32.xlu0 %v508, 112
      %v1229 = vpop.permute.xlu0 %1228
      %v1232 = vmul.f32 %v456, %v1227
      %v1233 = vmul.f32 %v460, %v1229
      %1236 = vrot.lane.b32.xlu0 %v1232, 112
      %v1237 = vpop.permute.xlu0 %1236
      %1238 = vrot.lane.b32.xlu0 %v1233, 112
      %v1239 = vpop.permute.xlu0 %1238
      %v1242 = vsub.f32 %v1224, %v1237
      %v1243 = vsub.f32 %v1225, %v1239
      %1244 = vrot.lane.b32.xlu0 %v505, 112
      %v1245 = vpop.permute.xlu0 %1244
      %1246 = vrot.lane.b32.xlu0 %v506, 112
      %v1247 = vpop.permute.xlu0 %1246
      %v1250 = vmul.f32 %v456, %v1245
      %v1251 = vmul.f32 %v460, %v1247
      %1252 = vrot.lane.b32.xlu0 %v507, 96
      %v1253 = vpop.permute.xlu0 %1252
      %1254 = vrot.lane.b32.xlu0 %v508, 96
      %v1255 = vpop.permute.xlu0 %1254
      %v1258 = vmul.f32 %v456, %v1253
      %v1259 = vmul.f32 %v460, %v1255
      %1262 = vrot.lane.b32.xlu0 %v1258, 16
      %v1263 = vpop.permute.xlu0 %1262
      %1264 = vrot.lane.b32.xlu0 %v1259, 16
      %v1265 = vpop.permute.xlu0 %1264
      %v1268 = vadd.f32 %v1250, %v1263
      %v1269 = vadd.f32 %v1251, %v1265
      %1272 = vrot.lane.b32.xlu0 %v1242, 32
      %v1273 = vpop.permute.xlu0 %1272
      %1274 = vrot.lane.b32.xlu0 %v1243, 32
      %v1275 = vpop.permute.xlu0 %1274
      %1280 = vrot.lane.b32.xlu0 %v1268, 32
      %v1281 = vpop.permute.xlu0 %1280
      %1282 = vrot.lane.b32.xlu0 %v1269, 32
      %v1283 = vpop.permute.xlu0 %1282
      %v1286 = vsel %vm561, %v1273, %v1281
      %v1287 = vsel %vm561, %v1275, %v1283
      %v1288 = vpack.c.bf16 %v1287, %v1286
      %v1289 = vmul.f32 %v458, %v1219
      %v1290 = vmul.f32 %v462, %v1221
      %v1291 = vmul.f32 %v458, %v1227
      %v1292 = vmul.f32 %v462, %v1229
      %1295 = vrot.lane.b32.xlu0 %v1291, 112
      %v1296 = vpop.permute.xlu0 %1295
      %1297 = vrot.lane.b32.xlu0 %v1292, 112
      %v1298 = vpop.permute.xlu0 %1297
      %v1301 = vsub.f32 %v1289, %v1296
      %v1302 = vsub.f32 %v1290, %v1298
      %v1303 = vmul.f32 %v458, %v1245
      %v1304 = vmul.f32 %v462, %v1247
      %v1305 = vmul.f32 %v458, %v1253
      %v1306 = vmul.f32 %v462, %v1255
      %1309 = vrot.lane.b32.xlu0 %v1305, 16
      %v1310 = vpop.permute.xlu0 %1309
      %1311 = vrot.lane.b32.xlu0 %v1306, 16
      %v1312 = vpop.permute.xlu0 %1311
      %v1315 = vadd.f32 %v1303, %v1310
      %v1316 = vadd.f32 %v1304, %v1312
      %1319 = vrot.lane.b32.xlu0 %v1301, 32
      %v1320 = vpop.permute.xlu0 %1319
      %1321 = vrot.lane.b32.xlu0 %v1302, 32
      %v1322 = vpop.permute.xlu0 %1321
      %1327 = vrot.lane.b32.xlu0 %v1315, 32
      %v1328 = vpop.permute.xlu0 %1327
      %1329 = vrot.lane.b32.xlu0 %v1316, 32
      %v1330 = vpop.permute.xlu0 %1329
      %v1333 = vsel %vm561, %v1320, %v1328
      %v1334 = vsel %vm561, %v1322, %v1330
      %v1335 = vpack.c.bf16 %v1334, %v1333
      %v1337 = vsel %vm596, %v1288, 0
      %v1340 = vsel %vm596, %v1335, 0
      %1342 = vmatprep.subr.bf16.mxu0 0
      %1343 = vmatpush1.bf16.xpose.msra.mxu0 %v1340
      %1344 = vmatprep.subr.bf16.mxu0 0
      %1345 = vmatpush1.bf16.xpose.msra.mxu0 0
      %1346 = vmatprep.subr.bf16.mxu0 0
      %1347 = vmatpush1.bf16.xpose.msra.mxu0 0
      %1348 = vmatprep.subr.bf16.mxu0 0
      %1349 = vmatpush1.bf16.xpose.msra.mxu0 0
      %1350 = vmatprep.subr.bf16.mxu0 0
      %1351 = vmatpush1.bf16.xpose.msra.mxu0 0
      %1352 = vmatprep.subr.bf16.mxu0 0
      %1353 = vmatpush1.bf16.xpose.msra.mxu0 0
      %1354 = vmatprep.subr.bf16.mxu0 0
      %1355 = vmatpush1.bf16.xpose.msra.mxu0 0
      %1356 = vmatprep.subr.bf16.mxu0 0
      %1357 = vmatpush1.bf16.xpose.msra.mxu0 0
      %1358 = vmatprep.subr.bf16.mxu0 0
      %1359 = vmatpush1.bf16.xpose.msra.mxu0 0
      %1360 = vmatprep.subr.bf16.mxu0 0
      %1361 = vmatpush1.bf16.xpose.msra.mxu0 0
      %1362 = vmatprep.subr.bf16.mxu0 0
      %1363 = vmatpush1.bf16.xpose.msra.mxu0 0
      %1364 = vmatprep.subr.bf16.mxu0 0
      %1365 = vmatpush1.bf16.xpose.msra.mxu0 0
      %1366 = vmatprep.subr.bf16.mxu0 0
      %1367 = vmatpush1.bf16.xpose.msra.mxu0 0
      %1368 = vmatprep.subr.bf16.mxu0 0
      %1369 = vmatpush1.bf16.xpose.msra.mxu0 0
      %1370 = vmatprep.subr.bf16.mxu0 0
      %1371 = vmatpush1.bf16.xpose.msra.mxu0 0
      %1372 = vmatprep.subr.bf16.mxu0 0
      %1373 = vmatpush1.bf16.xpose.msra.mxu0 0
      %1374 = vmatprep.mubr.bf16.mxu0 0
      %1375 = vmatmul.mubr.bf16.gmra.mrb[0].mxu0 %v1337
      %v1376 = vpop.f32.mrb[0].mxu0
      %v1377 = vadd.f32 0.0, %v1376
      %v1378 = vpop.f32.mrb[0].mxu0
      %v1379 = vpop.f32.mrb[0].mxu0
      %v1380 = vadd.f32 0.0, %v1379
      %v1381 = vpop.f32.mrb[0].mxu0
      %1382 = vdwg.mxu0
      %v1383 = vmul.f32 %v1377, 0.17677669
      %v1384 = vmul.f32 %v1380, 0.17677669
      %v1385 = vsel %vm514, %v1383, -1e+30
      %v1386 = vsel %vm515, %v1384, -1e+30
      %v1387 = vsel %vm561, %v1385, -inf
      %1388 = vmax.xlane.f32.xlu0 %v1387
      %v1389 = vpop.xlane.xlu0 %1388
      %v1390 = vsel %vm561, %v1386, -inf
      %1391 = vmax.xlane.f32.xlu0 %v1390
      %v1392 = vpop.xlane.xlu0 %1391
      %v1393 = vsub.f32 %v1385, %v1389
      %v1394 = vsub.f32 %v1386, %v1392
      %v1395 = vmul.f32 %v1393, 1.442695
      %v1396 = vpow.pop %v1395
      %v1397 = vmul.f32 %v1394, 1.442695
      %v1398 = vpow.pop %v1397
      %v1399 = vsel %vm561, %v1396, 0.0
      %1400 = vadd.xlane.f32.xlu0 %v1399
      %v1401 = vpop.xlane.xlu0 %1400
      %v1402 = vsel %vm561, %v1398, 0.0
      %1403 = vadd.xlane.f32.xlu0 %v1402
      %v1404 = vpop.xlane.xlu0 %1403
      %v1405 = vrcp.pop %v1401
      %v1406 = vrcp.pop %v1404
      %v1407 = vmul.f32 %v1396, %v1405
      %v1408 = vmul.f32 %v1398, %v1406
      %v1409 = vpack.c.bf16 %v1408, %v1407
      %1410 = vrot.lane.b32.xlu0 %v516, 32
      %v1411 = vpop.permute.xlu0 %1410
      %v1414 = vsel %vm561, %v1409, 0
      %1416 = vmatprep.subr.bf16.mxu0 0
      %1417 = vmatpush1.bf16.msra.mxu0 %v1411
      %1418 = vmatprep.subr.bf16.mxu0 0
      %1419 = vmatpush1.bf16.msra.mxu0 0
      %1420 = vmatprep.subr.bf16.mxu0 0
      %1421 = vmatpush1.bf16.msra.mxu0 0
      %1422 = vmatprep.subr.bf16.mxu0 0
      %1423 = vmatpush1.bf16.msra.mxu0 0
      %1424 = vmatprep.subr.bf16.mxu0 0
      %1425 = vmatpush1.bf16.msra.mxu0 0
      %1426 = vmatprep.subr.bf16.mxu0 0
      %1427 = vmatpush1.bf16.msra.mxu0 0
      %1428 = vmatprep.subr.bf16.mxu0 0
      %1429 = vmatpush1.bf16.msra.mxu0 0
      %1430 = vmatprep.subr.bf16.mxu0 0
      %1431 = vmatpush1.bf16.msra.mxu0 0
      %1432 = vmatprep.subr.bf16.mxu0 0
      %1433 = vmatpush1.bf16.msra.mxu0 0
      %1434 = vmatprep.subr.bf16.mxu0 0
      %1435 = vmatpush1.bf16.msra.mxu0 0
      %1436 = vmatprep.subr.bf16.mxu0 0
      %1437 = vmatpush1.bf16.msra.mxu0 0
      %1438 = vmatprep.subr.bf16.mxu0 0
      %1439 = vmatpush1.bf16.msra.mxu0 0
      %1440 = vmatprep.subr.bf16.mxu0 0
      %1441 = vmatpush1.bf16.msra.mxu0 0
      %1442 = vmatprep.subr.bf16.mxu0 0
      %1443 = vmatpush1.bf16.msra.mxu0 0
      %1444 = vmatprep.subr.bf16.mxu0 0
      %1445 = vmatpush1.bf16.msra.mxu0 0
      %1446 = vmatprep.subr.bf16.mxu0 0
      %1447 = vmatpush1.bf16.msra.mxu0 0
      %1448 = vmatprep.mubr.bf16.mxu0 0
      %1449 = vmatmul.mubr.bf16.gmra.mrb[0].mxu0 %v1414
      %v1450 = vpop.f32.mrb[0].mxu0
      %v1451 = vadd.f32 0.0, %v1450
      %v1452 = vpop.f32.mrb[0].mxu0
      %v1453 = vpop.f32.mrb[0].mxu0
      %v1454 = vadd.f32 0.0, %v1453
      %v1455 = vpop.f32.mrb[0].mxu0
      %1456 = vdwg.mxu0
      %1459 = vrot.lane.b32.xlu0 %v1451, 96
      %v1460 = vpop.permute.xlu0 %1459
      %1461 = vrot.lane.b32.xlu0 %v1454, 96
      %v1462 = vpop.permute.xlu0 %1461
      %vm1465 = vcmask 1048320
      %1466 = vst.msk [vmem:[#allocation2] sm:$0xff] %vm1465, %v1460
      %1467 = vst.msk [vmem:[#allocation2 + $0x8] sm:$0xff] %vm1465, %v1462
      %v1468 = vld [vmem:[#allocation2] sm:$0xff]
      %v1469 = vld [vmem:[#allocation2 + $0x8] sm:$0xff]
      %v1470 = vpack.c.bf16 %v1469, %v1468
      %v1471 = vld [vmem:[%s2] sm:$0xf]
      %v1472 = vld [vmem:[%s2 + $0x4] sm:$0xf]
      %v1473 = vld [vmem:[%s2 + $0x8] sm:$0xf]
      %v1474 = vld [vmem:[%s2 + $0xc] sm:$0xf]
      %v1475 = vld [vmem:[%s2 + $0x10] sm:$0xf]
      %v1476 = vld [vmem:[%s2 + $0x14] sm:$0xf]
      %v1477 = vld [vmem:[%s2 + $0x18] sm:$0xf]
      %v1478 = vld [vmem:[%s2 + $0x1c] sm:$0xf]
      %v1479 = vld [vmem:[%s2 + $0x20] sm:$0xf]
      %v1480 = vld [vmem:[%s2 + $0x24] sm:$0xf]
      %v1481 = vld [vmem:[%s2 + $0x28] sm:$0xf]
      %v1482 = vld [vmem:[%s2 + $0x2c] sm:$0xf]
      %v1483 = vld [vmem:[%s2 + $0x30] sm:$0xf]
      %v1484 = vld [vmem:[%s2 + $0x34] sm:$0xf]
      %v1485 = vld [vmem:[%s2 + $0x38] sm:$0xf]
      %v1486 = vld [vmem:[%s2 + $0x3c] sm:$0xf]
      %v1503 = vunpack.c.l.b16 %v1471
      %v1504 = vunpack.c.l.b16 %v1472
      %v1505 = vunpack.c.l.b16 %v1473
      %v1506 = vunpack.c.l.b16 %v1474
      %v1507 = vunpack.c.l.b16 %v1475
      %v1508 = vunpack.c.l.b16 %v1476
      %v1509 = vunpack.c.l.b16 %v1477
      %v1510 = vunpack.c.l.b16 %v1478
      %v1511 = vunpack.c.l.b16 %v1479
      %v1512 = vunpack.c.l.b16 %v1480
      %v1513 = vunpack.c.l.b16 %v1481
      %v1514 = vunpack.c.l.b16 %v1482
      %v1515 = vunpack.c.l.b16 %v1483
      %v1516 = vunpack.c.l.b16 %v1484
      %v1517 = vunpack.c.l.b16 %v1485
      %v1518 = vunpack.c.l.b16 %v1486
      %v1519 = vpack.c.b16 %v1504, %v1503
      %v1520 = vpack.c.b16 %v1506, %v1505
      %v1521 = vpack.c.b16 %v1508, %v1507
      %v1522 = vpack.c.b16 %v1510, %v1509
      %v1523 = vpack.c.b16 %v1512, %v1511
      %v1524 = vpack.c.b16 %v1514, %v1513
      %v1525 = vpack.c.b16 %v1516, %v1515
      %v1526 = vpack.c.b16 %v1518, %v1517
      %1535 = vmatprep.subr.bf16.mxu0 0
      %1536 = vmatpush1.bf16.msra.mxu0 %v1519
      %1537 = vmatprep.subr.bf16.mxu0 0
      %1538 = vmatpush1.bf16.msra.mxu0 %v1520
      %1539 = vmatprep.subr.bf16.mxu0 0
      %1540 = vmatpush1.bf16.msra.mxu0 %v1521
      %1541 = vmatprep.subr.bf16.mxu0 0
      %1542 = vmatpush1.bf16.msra.mxu0 %v1522
      %1543 = vmatprep.subr.bf16.mxu0 0
      %1544 = vmatpush1.bf16.msra.mxu0 %v1523
      %1545 = vmatprep.subr.bf16.mxu0 0
      %1546 = vmatpush1.bf16.msra.mxu0 %v1524
      %1547 = vmatprep.subr.bf16.mxu0 0
      %1548 = vmatpush1.bf16.msra.mxu0 %v1525
      %1549 = vmatprep.subr.bf16.mxu0 0
      %1550 = vmatpush1.bf16.msra.mxu0 %v1526
      %1551 = vmatprep.subr.bf16.mxu0 0
      %1552 = vmatpush1.bf16.msra.mxu0 0
      %1553 = vmatprep.subr.bf16.mxu0 0
      %1554 = vmatpush1.bf16.msra.mxu0 0
      %1555 = vmatprep.subr.bf16.mxu0 0
      %1556 = vmatpush1.bf16.msra.mxu0 0
      %1557 = vmatprep.subr.bf16.mxu0 0
      %1558 = vmatpush1.bf16.msra.mxu0 0
      %1559 = vmatprep.subr.bf16.mxu0 0
      %1560 = vmatpush1.bf16.msra.mxu0 0
      %1561 = vmatprep.subr.bf16.mxu0 0
      %1562 = vmatpush1.bf16.msra.mxu0 0
      %1563 = vmatprep.subr.bf16.mxu0 0
      %1564 = vmatpush1.bf16.msra.mxu0 0
      %1565 = vmatprep.subr.bf16.mxu0 0
      %1566 = vmatpush1.bf16.msra.mxu0 0
      %1567 = vmatprep.mubr.bf16.mxu0 0
      %1568 = vmatmul.mubr.bf16.gmra.mrb[0].mxu0 %v1470
      %v1569 = vpop.f32.mrb[0].mxu0
      %v1570 = vadd.f32 0.0, %v1569
      %v1571 = vpop.f32.mrb[0].mxu0
      %v1572 = vpop.f32.mrb[0].mxu0
      %v1573 = vadd.f32 0.0, %v1572
      %v1574 = vpop.f32.mrb[0].mxu0
      %1575 = vdwg.mxu0
      %v1576 = vmul.f32 %v1570, %v1570
      %v1577 = vmul.f32 %v1573, %v1573
      %1578 = vadd.xlane.f32.xlu0 %v1576
      %v1579 = vpop.xlane.xlu0 %1578
      %1580 = vadd.xlane.f32.xlu0 %v1577
      %v1581 = vpop.xlane.xlu0 %1580
      %v1582 = vrcp.pop 128.0
      %v1583 = vmul.f32 %v1579, %v1582
      %v1584 = vmul.f32 %v1581, %v1582
      %v1585 = vunpack.c.l.bf16 %v253
      %v1586 = vunpack.c.l.bf16 %v254
      %v1587 = vadd.f32 %v1583, 1e-05
      %v1588 = vadd.f32 %v1584, 1e-05
      %v1589 = vrsqrt.pop %v1587
      %v1590 = vrsqrt.pop %v1588
      %v1591 = vmul.f32 %v1570, %v1589
      %v1592 = vmul.f32 %v1573, %v1590
      %v1593 = vld [vmem:[%s3] sm:$0x1]
      %v1595 = vlaneseq
      %v1596 = vshrl.u32 %v1595, 7
      %v1597 = vsub.s32 0, %v1596
      %v1598 = vrot.slane %v1593, %v1597
      %v1600 = vmul.f32 %v1591, %v1598
      %v1601 = vmul.f32 %v1592, %v1598
      %v1602 = vadd.f32 %v1585, %v1600
      %v1603 = vadd.f32 %v1586, %v1601
      %v1604 = vpack.c.bf16 %v1603, %v1602
      %v1606 = vunpack.c.l.b16 %v1604
      %v1607 = vunpack.c.h.b16 %v1604
      %v1608 = vpack.c.b16 %v1606, %v1606
      %v1609 = vpack.c.b16 %v1607, %v1607
      %1612 = vst [vmem:[%s251] sm:$0xf] %v1608
      %1613 = vst [vmem:[%s251 + $0x4] sm:$0xf] %v1609
      %p1614 = scmp.lt.s32.totalorder %s17, 1
      %s1615 = scalar_select %p1614, %s17, 1
      %s1616 = smul.addr %s1615, 2
      %s1617 = smul.addr %s1616, 4
      %s1618 = scalar_lea.vmem %s6, %s1617
      // Predicated region
      $region45: #{transformer_forward.7} parent=43 // pred_check
        %p1619 = pneg %p166
      $region46: #{transformer_forward.7} parent=43 // pred_check_branch
        %1621 = sbr.rel (%p1619) target = $region48
      $region47: #{transformer_forward.7} parent=43 // pred_region
        _
      $region48: #{transformer_forward.7} parent=43 // pred_fallthru
        _
    $region44: #{transformer_forward.7} parent=5 // pred_fallthru
      _
    %p1622 = scmp.le.s32.totalorder 2, %s12
    // Predicated region
    $region49: #{transformer_forward.7} parent=5 // pred_check
      %p1623 = pneg %p1622
    $region50: #{transformer_forward.7} parent=5 // pred_check_branch
      %1625 = sbr.rel (%p1623) target = $region52
    $region51: #{transformer_forward.7} parent=5 // pred_region
      %s1626 = ssub.s32 %s12, 2
      // Predicated region
      $region53: #{transformer_forward.7} parent=51 // pred_check
        %p1627 = pneg %p172
      $region54: #{transformer_forward.7} parent=51 // pred_check_branch
        %1629 = sbr.rel (%p1627) target = $region56
      $region55: #{transformer_forward.7} parent=51 // pred_region
        %p1630 = scmp.lt.s32.totalorder %s18, 1
        %s1631 = scalar_select %p1630, %s18, 1
        %s1632 = smul.addr %s1631, 2
        %s1633 = smul.addr %s1632, 4
        %s1634 = scalar_lea.vmem %s6, %s1633
      $region56: #{transformer_forward.7} parent=51 // pred_fallthru
        _
    $region52: #{transformer_forward.7} parent=5 // pred_fallthru
      _
  $region6: #{transformer_forward.7} parent=0 // loop_footer
    %s16 = sadd.s32 1, %s12
  $region7: #{transformer_forward.7} parent=0 // loop_footer_branch
    %11 = sbr.rel target = $region3
  $region8: #{transformer_forward.7} parent=0 // loop_exit
    _

// kernel: transformer_forward.9
$region0: #{transformer_forward.9}
  #allocation0 [shape = 'u32[]', space=smem, size = 0x4, offset = 0x4, fixed_abs, tag = 'smem constant byte address 0x4 - core index']
  #allocation1 [shape = 'u32[144,128]{1,0:T(1,128)}', space=vmem, size = 0x12000, scoped, tag = 'internal scratch']
  %s0 = inlined_call_operand.vmem [shape: bf16[2,128], index: 0, kind: input, shape index: {}]
  %s1 = inlined_call_operand.vmem [shape: f32[1,128], index: 1, kind: input, shape index: {}]
  %s2 = inlined_call_operand.vmem [shape: bf16[256,128], index: 2, kind: input, shape index: {}]
  %s3 = inlined_call_operand.vmem [shape: f32[2,256], index: 3, kind: output, shape index: {}]
  %s4 = sld [smem:[#allocation0]]
  $region22: #{transformer_forward.9} parent=0
    _
  %s6 = ssub.s32 1, %s4
  %s7 = scalar_select 0, %s6, %s4
  // Predicated region
  $region2: #{transformer_forward.9} parent=0 // pred_check
    _
  $region3: #{transformer_forward.9} parent=0 // pred_check_branch
    %9 = sbr.rel (0) target = $region5
  $region4: #{transformer_forward.9} parent=0 // pred_region
    _
  $region5: #{transformer_forward.9} parent=0 // pred_fallthru
    _
  // Predicated region
  $region6: #{transformer_forward.9} parent=0 // pred_check
    _
  $region7: #{transformer_forward.9} parent=0 // pred_check_branch
    %11 = sbr.rel (0) target = $region9
  $region8: #{transformer_forward.9} parent=0 // pred_region
    _
  $region9: #{transformer_forward.9} parent=0 // pred_fallthru
    _
  // Predicated region
  $region10: #{transformer_forward.9} parent=0 // pred_check
    _
  $region11: #{transformer_forward.9} parent=0 // pred_check_branch
    %13 = sbr.rel (0) target = $region13
  $region12: #{transformer_forward.9} parent=0 // pred_region
    _
  $region13: #{transformer_forward.9} parent=0 // pred_fallthru
    _
  %v15 = vld [vmem:[%s0] sm:$0x1]
  %v16 = vunpack.c.l.bf16 %v15
  %v17 = vmul.f32 %v16, %v16
  %vm18 = vcmask 1041408
  %v19 = vsel %vm18, %v17, 0.0
  %20 = vadd.xlane.f32.xlu0 %v19
  %v21 = vpop.xlane.xlu0 %20
  %v22 = vrcp.pop 128.0
  %v23 = vmul.f32 %v21, %v22
  %v24 = vadd.f32 %v23, 1e-05
  %v25 = vrsqrt.pop %v24
  %v26 = vmul.f32 %v16, %v25
  %v27 = vld [vmem:[%s1] sm:$0x1]
  %v29 = vlaneseq
  %v30 = vshrl.u32 %v29, 7
  %v31 = vsub.s32 0, %v30
  %v32 = vrot.slane %v27, %v31
  %v34 = vmul.f32 %v26, %v32
  %v35 = vpack.c.bf16 %v34, %v34
  %v36 = vld [vmem:[%s2] sm:$0xf]
  %v37 = vld [vmem:[%s2 + $0x4] sm:$0xf]
  %v38 = vld [vmem:[%s2 + $0x8] sm:$0xf]
  %v39 = vld [vmem:[%s2 + $0xc] sm:$0xf]
  %v40 = vld [vmem:[%s2 + $0x10] sm:$0xf]
  %v41 = vld [vmem:[%s2 + $0x14] sm:$0xf]
  %v42 = vld [vmem:[%s2 + $0x18] sm:$0xf]
  %v43 = vld [vmem:[%s2 + $0x1c] sm:$0xf]
  %v44 = vld [vmem:[%s2 + $0x20] sm:$0xf]
  %v45 = vld [vmem:[%s2 + $0x24] sm:$0xf]
  %v46 = vld [vmem:[%s2 + $0x28] sm:$0xf]
  %v47 = vld [vmem:[%s2 + $0x2c] sm:$0xf]
  %v48 = vld [vmem:[%s2 + $0x30] sm:$0xf]
  %v49 = vld [vmem:[%s2 + $0x34] sm:$0xf]
  %v50 = vld [vmem:[%s2 + $0x38] sm:$0xf]
  %v51 = vld [vmem:[%s2 + $0x3c] sm:$0xf]
  %v52 = vld [vmem:[%s2 + $0x40] sm:$0xf]
  %v53 = vld [vmem:[%s2 + $0x44] sm:$0xf]
  %v54 = vld [vmem:[%s2 + $0x48] sm:$0xf]
  %v55 = vld [vmem:[%s2 + $0x4c] sm:$0xf]
  %v56 = vld [vmem:[%s2 + $0x50] sm:$0xf]
  %v57 = vld [vmem:[%s2 + $0x54] sm:$0xf]
  %v58 = vld [vmem:[%s2 + $0x58] sm:$0xf]
  %v59 = vld [vmem:[%s2 + $0x5c] sm:$0xf]
  %v60 = vld [vmem:[%s2 + $0x60] sm:$0xf]
  %v61 = vld [vmem:[%s2 + $0x64] sm:$0xf]
  %v62 = vld [vmem:[%s2 + $0x68] sm:$0xf]
  %v63 = vld [vmem:[%s2 + $0x6c] sm:$0xf]
  %v64 = vld [vmem:[%s2 + $0x70] sm:$0xf]
  %v65 = vld [vmem:[%s2 + $0x74] sm:$0xf]
  %v66 = vld [vmem:[%s2 + $0x78] sm:$0xf]
  %v67 = vld [vmem:[%s2 + $0x7c] sm:$0xf]
  %v100 = vunpack.c.l.b16 %v36
  %v101 = vunpack.c.l.b16 %v37
  %v102 = vunpack.c.l.b16 %v38
  %v103 = vunpack.c.l.b16 %v39
  %v104 = vunpack.c.l.b16 %v40
  %v105 = vunpack.c.l.b16 %v41
  %v106 = vunpack.c.l.b16 %v42
  %v107 = vunpack.c.l.b16 %v43
  %v108 = vunpack.c.l.b16 %v44
  %v109 = vunpack.c.l.b16 %v45
  %v110 = vunpack.c.l.b16 %v46
  %v111 = vunpack.c.l.b16 %v47
  %v112 = vunpack.c.l.b16 %v48
  %v113 = vunpack.c.l.b16 %v49
  %v114 = vunpack.c.l.b16 %v50
  %v115 = vunpack.c.l.b16 %v51
  %v116 = vunpack.c.l.b16 %v52
  %v117 = vunpack.c.l.b16 %v53
  %v118 = vunpack.c.l.b16 %v54
  %v119 = vunpack.c.l.b16 %v55
  %v120 = vunpack.c.l.b16 %v56
  %v121 = vunpack.c.l.b16 %v57
  %v122 = vunpack.c.l.b16 %v58
  %v123 = vunpack.c.l.b16 %v59
  %v124 = vunpack.c.l.b16 %v60
  %v125 = vunpack.c.l.b16 %v61
  %v126 = vunpack.c.l.b16 %v62
  %v127 = vunpack.c.l.b16 %v63
  %v128 = vunpack.c.l.b16 %v64
  %v129 = vunpack.c.l.b16 %v65
  %v130 = vunpack.c.l.b16 %v66
  %v131 = vunpack.c.l.b16 %v67
  %v132 = vpack.c.b16 %v101, %v100
  %v133 = vpack.c.b16 %v103, %v102
  %v134 = vpack.c.b16 %v105, %v104
  %v135 = vpack.c.b16 %v107, %v106
  %v136 = vpack.c.b16 %v109, %v108
  %v137 = vpack.c.b16 %v111, %v110
  %v138 = vpack.c.b16 %v113, %v112
  %v139 = vpack.c.b16 %v115, %v114
  %v140 = vpack.c.b16 %v117, %v116
  %v141 = vpack.c.b16 %v119, %v118
  %v142 = vpack.c.b16 %v121, %v120
  %v143 = vpack.c.b16 %v123, %v122
  %v144 = vpack.c.b16 %v125, %v124
  %v145 = vpack.c.b16 %v127, %v126
  %v146 = vpack.c.b16 %v129, %v128
  %v147 = vpack.c.b16 %v131, %v130
  %164 = vmatprep.subr.bf16.mxu0 0
  %165 = vmatpush1.bf16.xpose.msra.mxu0 %v132
  %166 = vmatprep.subr.bf16.mxu0 0
  %167 = vmatpush1.bf16.xpose.msra.mxu0 %v133
  %168 = vmatprep.subr.bf16.mxu0 0
  %169 = vmatpush1.bf16.xpose.msra.mxu0 %v134
  %170 = vmatprep.subr.bf16.mxu0 0
  %171 = vmatpush1.bf16.xpose.msra.mxu0 %v135
  %172 = vmatprep.subr.bf16.mxu0 0
  %173 = vmatpush1.bf16.xpose.msra.mxu0 %v136
  %174 = vmatprep.subr.bf16.mxu0 0
  %175 = vmatpush1.bf16.xpose.msra.mxu0 %v137
  %176 = vmatprep.subr.bf16.mxu0 0
  %177 = vmatpush1.bf16.xpose.msra.mxu0 %v138
  %178 = vmatprep.subr.bf16.mxu0 0
  %179 = vmatpush1.bf16.xpose.msra.mxu0 %v139
  %180 = vmatprep.subr.bf16.mxu0 0
  %181 = vmatpush1.bf16.xpose.msra.mxu0 %v140
  %182 = vmatprep.subr.bf16.mxu0 0
  %183 = vmatpush1.bf16.xpose.msra.mxu0 %v141
  %184 = vmatprep.subr.bf16.mxu0 0
  %185 = vmatpush1.bf16.xpose.msra.mxu0 %v142
  %186 = vmatprep.subr.bf16.mxu0 0
  %187 = vmatpush1.bf16.xpose.msra.mxu0 %v143
  %188 = vmatprep.subr.bf16.mxu0 0
  %189 = vmatpush1.bf16.xpose.msra.mxu0 %v144
  %190 = vmatprep.subr.bf16.mxu0 0
  %191 = vmatpush1.bf16.xpose.msra.mxu0 %v145
  %192 = vmatprep.subr.bf16.mxu0 0
  %193 = vmatpush1.bf16.xpose.msra.mxu0 %v146
  %194 = vmatprep.subr.bf16.mxu0 0
  %195 = vmatpush1.bf16.xpose.msra.mxu0 %v147
  %196 = vmatprep.mubr.bf16.mxu0 0
  %197 = vmatmul.mubr.bf16.gmra.mrb[0].mxu0 %v35
  %v198 = vpop.f32.mrb[0].mxu0
  %v199 = vadd.f32 0.0, %v198
  %v200 = vpop.f32.mrb[0].mxu0
  %v201 = vadd.f32 0.0, %v200
  %v202 = vpop.f32.mrb[0].mxu0
  %v203 = vpop.f32.mrb[0].mxu0
  %204 = vdwg.mxu0
  %v207 = vcombine.low %v199, %v201
  %v209 = vunpack.c.l.s4 1983009808
  %v210 = vunpack.c.0.s8 %v209
  %v211 = vlaneseq
  %v212 = vshrl.u32 %v211, 7
  %v213 = vsub.s32 %v210, %v212
  %v214 = vrot.slane %v207, %v213
  %216 = vst [vmem:[%s3] sm:$0xf] %v214
  // Predicated region
  $region14: #{transformer_forward.9} parent=0 // pred_check
    _
  $region15: #{transformer_forward.9} parent=0 // pred_check_branch
    %218 = sbr.rel (0) target = $region17
  $region16: #{transformer_forward.9} parent=0 // pred_region
    _
  $region17: #{transformer_forward.9} parent=0 // pred_fallthru
    _
  // Predicated region
  $region18: #{transformer_forward.9} parent=0 // pred_check
    _
  $region19: #{transformer_forward.9} parent=0 // pred_check_branch
    %220 = sbr.rel (0) target = $region21
  $region20: #{transformer_forward.9} parent=0 // pred_region
    _
  $region21: #{transformer_forward.9} parent=0 // pred_fallthru
    _

</llo_original>
